<compile_context>
chip_gen: v5e
topology: v5e:2x2
jax: 0.10.0
libtpu: 0.0.40
codegen_flags: <defaults>
</compile_context>

<pallas_src>
import jax
import jax.numpy as jnp
from jax.experimental import pallas as pl
from jax.experimental.pallas import tpu as pltpu


# Explicit scoped-VMEM budget.  All tile choices below stay far under this even
# on v7x (64 MiB physical), so the same pipeline depth holds on v5e/v6e/v7x.
VMEM_LIMIT = 32 * 1024 * 1024


def _round_up(x, m):
    return ((x + m - 1) // m) * m


def _tile(dim, max_tile, align):
    """Pick (tile, padded_dim): tile is a multiple of `align`, <= max_tile,
    and divides padded_dim."""
    padded = _round_up(dim, align)
    if padded <= max_tile:
        return padded, padded
    for t in range(max_tile, align - 1, -align):
        if padded % t == 0:
            return t, padded
    return align, padded


def _pick_t_blk(S, cap=32):
    for t in range(min(S, cap), 0, -1):
        if S % t == 0:
            return t
    return 1


# --------------------- tiled dense: x @ w + b (+tanh)(+row mask) ---------------------
def fused_dense(x, w, b, *, activation=None, row_mask=None, out_dtype=jnp.float32):
    """x: [M, K], w: [K, N], b: [N] -> [M, N].

    bf16 matmul operands; bias / activation / per-row mask fused into the
    epilogue.  Single-K-tile fast path avoids accumulator scratch entirely.
    """
    M, K = x.shape
    _, N = w.shape

    TM, Mp = _tile(M, 256, 8)
    TK, Kp = _tile(K, 512, 128)
    TN, Np = _tile(N, 256, 128)
    kt = Kp // TK

    xp = jnp.pad(x, ((0, Mp - M), (0, Kp - K))).astype(jnp.bfloat16)
    wp = jnp.pad(w, ((0, Kp - K), (0, Np - N))).astype(jnp.bfloat16)
    bp = jnp.pad(b.astype(jnp.float32), (0, Np - N)).reshape(1, Np)

    has_mask = row_mask is not None
    inputs = [xp, wp, bp]
    if has_mask:
        mp = jnp.pad(row_mask.astype(jnp.float32), (0, Mp - M)).reshape(Mp, 1)
        inputs.append(mp)

    if kt == 1:
        # -------- single K step: 2-D grid, no scratch, no phase guards --------
        grid = (Mp // TM, Np // TN)
        in_specs = [
            pl.BlockSpec((TM, TK), lambda i, j: (i, 0)),
            pl.BlockSpec((TK, TN), lambda i, j: (0, j)),
            pl.BlockSpec((1, TN), lambda i, j: (0, j)),
        ]
        if has_mask:
            in_specs.append(pl.BlockSpec((TM, 1), lambda i, j: (i, 0)))
        out_spec = pl.BlockSpec((TM, TN), lambda i, j: (i, j))
        dims = ("parallel", "parallel")
        scratch = []

        def kernel(*refs):
            if has_mask:
                x_ref, w_ref, b_ref, m_ref, o_ref = refs
            else:
                x_ref, w_ref, b_ref, o_ref = refs
            y = jnp.dot(x_ref[...], w_ref[...],
                        preferred_element_type=jnp.float32) + b_ref[...]
            if activation is not None:
                y = activation(y)
            if has_mask:
                y = y * m_ref[...]
            o_ref[...] = y.astype(o_ref.dtype)
    else:
        # -------- multi K step: 3-D grid with f32 VMEM accumulator --------
        grid = (Mp // TM, Np // TN, kt)
        in_specs = [
            pl.BlockSpec((TM, TK), lambda i, j, k: (i, k)),
            pl.BlockSpec((TK, TN), lambda i, j, k: (k, j)),
            pl.BlockSpec((1, TN), lambda i, j, k: (0, j)),
        ]
        if has_mask:
            in_specs.append(pl.BlockSpec((TM, 1), lambda i, j, k: (i, 0)))
        out_spec = pl.BlockSpec((TM, TN), lambda i, j, k: (i, j))
        dims = ("parallel", "parallel", "arbitrary")
        scratch = [pltpu.VMEM((TM, TN), jnp.float32)]

        def kernel(*refs):
            if has_mask:
                x_ref, w_ref, b_ref, m_ref, o_ref, acc_ref = refs
            else:
                x_ref, w_ref, b_ref, o_ref, acc_ref = refs
            k = pl.program_id(2)

            @pl.when(k == 0)
            def _():
                acc_ref[...] = jnp.zeros_like(acc_ref)

            acc_ref[...] += jnp.dot(x_ref[...], w_ref[...],
                                    preferred_element_type=jnp.float32)

            @pl.when(k == pl.num_programs(2) - 1)
            def _():
                y = acc_ref[...] + b_ref[...]
                if activation is not None:
                    y = activation(y)
                if has_mask:
                    y = y * m_ref[...]
                o_ref[...] = y.astype(o_ref.dtype)

    out = pl.pallas_call(
        kernel,
        out_shape=jax.ShapeDtypeStruct((Mp, Np), out_dtype),
        grid_spec=pltpu.PrefetchScalarGridSpec(
            num_scalar_prefetch=0,
            grid=grid,
            in_specs=in_specs,
            out_specs=out_spec,
            scratch_shapes=scratch,
        ),
        compiler_params=pltpu.CompilerParams(
            dimension_semantics=dims,
            vmem_limit_bytes=VMEM_LIMIT,
        ),
    )(*inputs)

    if Mp != M or Np != N:
        out = out[:M, :N]
    return out


# ------------------------------ fused BiLSTM recurrence ------------------------------
def _make_bilstm_kernel(t_blk, hp):
    def kernel(xg_ref, whh_ref, o_ref, h_scr, c_scr):
        # grid = (direction, time_block); (h, c) carried in scratch across time
        d = pl.program_id(0)
        tb = pl.program_id(1)

        @pl.when(tb == 0)
        def _init():
            h_scr[...] = jnp.zeros_like(h_scr)
            c_scr[...] = jnp.zeros_like(c_scr)

        whh = whh_ref[...]  # [Hp, 4*Hp] bf16, resident for this direction

        def step(s):
            # precomputed input gates + recurrent contribution
            gates = xg_ref[s] + jnp.dot(
                h_scr[...].astype(jnp.bfloat16), whh,
                preferred_element_type=jnp.float32)          # [B, 4*Hp] f32
            i_g = jax.nn.sigmoid(gates[:, 0 * hp:1 * hp])
            f_g = jax.nn.sigmoid(gates[:, 1 * hp:2 * hp])
            g_g = jnp.tanh(gates[:, 2 * hp:3 * hp])
            o_g = jax.nn.sigmoid(gates[:, 3 * hp:4 * hp])
            c_new = f_g * c_scr[...] + i_g * g_g
            h_new = o_g * jnp.tanh(c_new)
            c_scr[...] = c_new
            h_scr[...] = h_new
            o_ref[s] = h_new.astype(o_ref.dtype)

        @pl.when(d == 0)
        def _forward():
            for s in range(t_blk):            # static, fully unrolled
                step(s)

        @pl.when(d == 1)
        def _backward():
            for s in reversed(range(t_blk)):  # reversed in-block time order
                step(s)

    return kernel


def bilstm_recurrence(xg_all, whh_all):
    """xg_all: [S, B, 8*Hp] precomputed input gates (fwd cols 0:4Hp, bwd 4Hp:8Hp).
    whh_all: [Hp, 8*Hp] bf16 recurrent weights (same column layout).
    Returns [S, B, 2*Hp] bf16: [..., :Hp] = forward hidden, [..., Hp:] = backward.
    """
    S, B, G = xg_all.shape
    Hp = whh_all.shape[0]
    assert G == 8 * Hp
    t_blk = _pick_t_blk(S)
    nblk = S // t_blk

    def time_block(d, t):
        # forward walks time blocks 0..nblk-1; backward walks nblk-1..0
        return t + d * (nblk - 1 - 2 * t)

    return pl.pallas_call(
        _make_bilstm_kernel(t_blk, Hp),
        out_shape=jax.ShapeDtypeStruct((S, B, 2 * Hp), jnp.bfloat16),
        grid_spec=pltpu.PrefetchScalarGridSpec(
            num_scalar_prefetch=0,
            grid=(2, nblk),
            in_specs=[
                pl.BlockSpec((t_blk, B, 4 * Hp),
                             lambda d, t: (time_block(d, t), 0, d)),
                pl.BlockSpec((Hp, 4 * Hp), lambda d, t: (0, d)),
            ],
            out_specs=pl.BlockSpec((t_blk, B, Hp),
                                   lambda d, t: (time_block(d, t), 0, d)),
            scratch_shapes=[pltpu.VMEM((B, Hp), jnp.float32),   # h state
                            pltpu.VMEM((B, Hp), jnp.float32)],  # c state
        ),
        compiler_params=pltpu.CompilerParams(
            dimension_semantics=("parallel", "arbitrary"),
            vmem_limit_bytes=VMEM_LIMIT,
        ),
    )(xg_all, whh_all)


# ------------------------------- parameter preparation -------------------------------
def prepare_params(params):
    """Pad/stack raw parameters into the lane-aligned kernel layout (done once)."""
    H = params["whh_f"].shape[0]
    Hp = _round_up(H, 128)

    def pad_gate_cols(w):
        k = w.shape[0]
        out = jnp.zeros((k, 4 * Hp), w.dtype)
        for g in range(4):
            out = out.at[:, g * Hp: g * Hp + H].set(w[:, g * H:(g + 1) * H])
        return out

    def pad_gate_bias(b):
        out = jnp.zeros((4 * Hp,), b.dtype)
        for g in range(4):
            out = out.at[g * Hp: g * Hp + H].set(b[g * H:(g + 1) * H])
        return out

    def pad_whh(w):
        return jnp.pad(pad_gate_cols(w), ((0, Hp - H), (0, 0)))

    wih_all = jnp.concatenate([pad_gate_cols(params["wih_f"]),
                               pad_gate_cols(params["wih_b"])], axis=1)  # [Hb, 8*Hp]
    b_all = jnp.concatenate([pad_gate_bias(params["b_f"]),
                             pad_gate_bias(params["b_b"])])              # [8*Hp]
    whh_all = jnp.concatenate([pad_whh(params["whh_f"]),
                               pad_whh(params["whh_b"])],
                              axis=1).astype(jnp.bfloat16)               # [Hp, 8*Hp]

    lin_w = params["lin_w"]                  # [2H, nb_label]
    nb = lin_w.shape[1]
    lin_w_pad = jnp.zeros((2 * Hp, nb), lin_w.dtype)
    lin_w_pad = lin_w_pad.at[:H].set(lin_w[:H])
    lin_w_pad = lin_w_pad.at[Hp:Hp + H].set(lin_w[H:])

    return {
        "emb": params["emb"],
        "bert_w": params["bert_w"], "bert_b": params["bert_b"],
        "wih_all": wih_all, "b_all": b_all, "whh_all": whh_all,
        "lin_w_pad": lin_w_pad, "lin_b": params["lin_b"],
    }


# ------------------------------------ full forward ------------------------------------
def bert_bilstm_forward(prep, input_ids, input_masks):
    B, S = input_ids.shape
    Hb = prep["bert_w"].shape[0]
    Hp = prep["whh_all"].shape[0]

    # --- BERT stand-in: embedding lookup + dense + tanh, masked (time-major) ---
    # TODO(synk): full BERT encoder not reproduced (module is injected, not defined).
    emb_tm = jnp.take(prep["emb"], input_ids.T, axis=0)          # [S, B, Hb]
    mask_tm = input_masks.T.reshape(S * B)
    seq2d = fused_dense(emb_tm.reshape(S * B, Hb), prep["bert_w"], prep["bert_b"],
                        activation=jnp.tanh, row_mask=mask_tm,
                        out_dtype=jnp.bfloat16)                  # [S*B, Hb]

    # --- dropout: eval-mode identity ---
    # TODO(synk): stochastic dropout path omitted (inference semantics).

    # --- hoisted input projection for BOTH LSTM directions: one big matmul ---
    xg_all = fused_dense(seq2d, prep["wih_all"], prep["b_all"])  # [S*B, 8*Hp] f32
    xg_all = xg_all.reshape(S, B, 8 * Hp)

    # --- fused bidirectional recurrence (direction axis on the grid) ---
    h_all = bilstm_recurrence(xg_all, prep["whh_all"])           # [S, B, 2*Hp] bf16

    # --- classifier on time-major activations; only tiny logits transposed ---
    logits2d = fused_dense(h_all.reshape(S * B, 2 * Hp),
                           prep["lin_w_pad"], prep["lin_b"])     # [S*B, nb_label]
    nb = prep["lin_w_pad"].shape[1]
    return jnp.transpose(logits2d.reshape(S, B, nb), (1, 0, 2))  # [B, S, nb_label]


# ------------------------------------ reference / init ------------------------------------
def _reference_forward(params, input_ids, input_masks):
    emb = jnp.take(params["emb"], input_ids, axis=0)             # [B, S, Hb]
    seq = jnp.tanh(emb @ params["bert_w"] + params["bert_b"])
    seq = seq * input_masks[..., None]
    B, S, _ = seq.shape
    H = params["whh_f"].shape[0]

    def lstm(x_sbe, wih, whh, b):
        def step(carry, x_t):
            h, c = carry
            gates = x_t @ wih + h @ whh + b
            i = jax.nn.sigmoid(gates[:, :H])
            f = jax.nn.sigmoid(gates[:, H:2 * H])
            g = jnp.tanh(gates[:, 2 * H:3 * H])
            o = jax.nn.sigmoid(gates[:, 3 * H:])
            c = f * c + i * g
            h = o * jnp.tanh(c)
            return (h, c), h
        init = (jnp.zeros((B, H)), jnp.zeros((B, H)))
        _, hs = jax.lax.scan(step, init, x_sbe)
        return hs

    x_sbe = jnp.transpose(seq, (1, 0, 2))
    h_f = lstm(x_sbe, params["wih_f"], params["whh_f"], params["b_f"])
    h_b = lstm(x_sbe[::-1], params["wih_b"], params["whh_b"], params["b_b"])[::-1]
    h = jnp.concatenate([h_f, h_b], axis=-1)                      # [S, B, 2H]
    logits = h @ params["lin_w"] + params["lin_b"]
    return jnp.transpose(logits, (1, 0, 2))


def init_params(key, vocab, hidden_dim_bert, hidden_dim_lstm, nb_label):
    Hd = hidden_dim_lstm // 2  # per-direction hidden size
    keys = jax.random.split(key, 12)
    s = 0.1
    return {
        "emb": s * jax.random.normal(keys[0], (vocab, hidden_dim_bert), jnp.float32),
        "bert_w": s * jax.random.normal(keys[1], (hidden_dim_bert, hidden_dim_bert), jnp.float32),
        "bert_b": s * jax.random.normal(keys[2], (hidden_dim_bert,), jnp.float32),
        "wih_f": s * jax.random.normal(keys[3], (hidden_dim_bert, 4 * Hd), jnp.float32),
        "whh_f": s * jax.random.normal(keys[4], (Hd, 4 * Hd), jnp.float32),
        "b_f": s * jax.random.normal(keys[5], (4 * Hd,), jnp.float32),
        "wih_b": s * jax.random.normal(keys[6], (hidden_dim_bert, 4 * Hd), jnp.float32),
        "whh_b": s * jax.random.normal(keys[7], (Hd, 4 * Hd), jnp.float32),
        "b_b": s * jax.random.normal(keys[8], (4 * Hd,), jnp.float32),
        "lin_w": s * jax.random.normal(keys[9], (hidden_dim_lstm, nb_label), jnp.float32),
        "lin_b": s * jax.random.normal(keys[10], (nb_label,), jnp.float32),
    }


if __name__ == "__main__":
    B, S = 2, 8
    vocab = 50
    hidden_dim_bert = 32
    hidden_dim_lstm = 32
    nb_label = 4

    key = jax.random.PRNGKey(0)
    k_ids, k_params = jax.random.split(key)

    input_ids = jax.random.randint(k_ids, (B, S), 0, vocab, dtype=jnp.int32)
    lengths = jnp.array([S, S - 3], dtype=jnp.int32)
    input_masks = (jnp.arange(S)[None, :] < lengths[:, None]).astype(jnp.float32)

    params = init_params(k_params, vocab, hidden_dim_bert, hidden_dim_lstm, nb_label)
    prep = prepare_params(params)

    fwd = jax.jit(bert_bilstm_forward)
    out = jax.block_until_ready(fwd(prep, input_ids, input_masks))

    assert out.shape == (B, S, nb_label), out.shape
    assert bool(jnp.all(jnp.isfinite(out)))

    # sanity check against a pure-JAX f32 reference (bf16 matmuls -> loose tol)
    ref = _reference_forward(params, input_ids, input_masks)
    err = float(jnp.max(jnp.abs(out - ref)))
    assert err < 5e-2, f"max abs err {err}"

    print("KERNEL_OK")
</pallas_src>

<mosaic_0001>
module attributes {stable_mosaic.version = 11 : i64} {
  func.func @kernel(%arg0: i32, %arg1: i32, %arg2: memref<16x128xbf16, #tpu.memory_space<vmem>>, %arg3: memref<128x128xbf16, #tpu.memory_space<vmem>>, %arg4: memref<1x128xf32, #tpu.memory_space<vmem>>, %arg5: memref<16x1xf32, #tpu.memory_space<vmem>>, %arg6: memref<16x128xbf16, #tpu.memory_space<vmem>>) attributes {dimension_semantics = [#tpu.dimension_semantics<parallel>, #tpu.dimension_semantics<parallel>], iteration_bounds = array<i64: 1, 1>, scalar_prefetch = 0 : i64, scratch_operands = 0 : i64, tpu.core_type = #tpu.core_type<tc>, window_params = [{transform_indices = @transform_0, window_bounds = array<i64: 16, 128>}, {transform_indices = @transform_1, window_bounds = array<i64: 128, 128>}, {transform_indices = @transform_2, window_bounds = array<i64: 1, 128>}, {transform_indices = @transform_3, window_bounds = array<i64: 16, 1>}, {transform_indices = @transform_4, window_bounds = array<i64: 16, 128>}]} {
    %c0 = arith.constant 0 : index
    %c0_0 = arith.constant 0 : index
    %0 = vector.load %arg2[%c0, %c0_0] : memref<16x128xbf16, #tpu.memory_space<vmem>>, vector<16x128xbf16>
    %c0_1 = arith.constant 0 : index
    %c0_2 = arith.constant 0 : index
    %1 = vector.load %arg3[%c0_1, %c0_2] : memref<128x128xbf16, #tpu.memory_space<vmem>>, vector<128x128xbf16>
    %cst = arith.constant dense<0.000000e+00> : vector<16x128xf32>
    %2 = tpu.matmul %0, %1, %cst {dimension_numbers = #tpu.dot_dimension_numbers<[1], [0], [0], [1], [0, 0, 1, 1], [], []>} : vector<16x128xbf16>, vector<128x128xbf16>, vector<16x128xf32> -> vector<16x128xf32>
    %c0_3 = arith.constant 0 : index
    %c0_4 = arith.constant 0 : index
    %3 = vector.load %arg4[%c0_3, %c0_4] : memref<1x128xf32, #tpu.memory_space<vmem>>, vector<1x128xf32>
    %4 = vector.broadcast %3 : vector<1x128xf32> to vector<16x128xf32>
    %5 = arith.addf %2, %4 : vector<16x128xf32>
    %6 = math.tanh %5 : vector<16x128xf32>
    %c0_5 = arith.constant 0 : index
    %c0_6 = arith.constant 0 : index
    %7 = vector.load %arg5[%c0_5, %c0_6] : memref<16x1xf32, #tpu.memory_space<vmem>>, vector<16x1xf32>
    %8 = vector.broadcast %7 : vector<16x1xf32> to vector<16x128xf32>
    %9 = arith.mulf %6, %8 : vector<16x128xf32>
    %10 = arith.truncf %9 : vector<16x128xf32> to vector<16x128xbf16>
    %c0_7 = arith.constant 0 : index
    %c0_8 = arith.constant 0 : index
    %11 = vector.load %arg6[%c0_7, %c0_8] : memref<16x128xbf16, #tpu.memory_space<vmem>>, vector<16x128xbf16>
    tpu.vector_store %arg6[%c0_7, %c0_8], %10 {strides = array<i32>} : memref<16x128xbf16, #tpu.memory_space<vmem>>, vector<16x128xbf16>,
    return
  }
  func.func @transform_0(%arg0: i32, %arg1: i32) -> (i32, i32) {
    %c0_i32 = arith.constant 0 : i32
    %c0_i32_0 = arith.constant 0 : i32
    return %arg0, %c0_i32 : i32, i32
  }
  func.func @transform_1(%arg0: i32, %arg1: i32) -> (i32, i32) {
    %c0_i32 = arith.constant 0 : i32
    %c0_i32_0 = arith.constant 0 : i32
    return %c0_i32, %arg1 : i32, i32
  }
  func.func @transform_2(%arg0: i32, %arg1: i32) -> (i32, i32) {
    %c0_i32 = arith.constant 0 : i32
    %c0_i32_0 = arith.constant 0 : i32
    return %c0_i32, %arg1 : i32, i32
  }
  func.func @transform_3(%arg0: i32, %arg1: i32) -> (i32, i32) {
    %c0_i32 = arith.constant 0 : i32
    %c0_i32_0 = arith.constant 0 : i32
    return %arg0, %c0_i32 : i32, i32
  }
  func.func @transform_4(%arg0: i32, %arg1: i32) -> (i32, i32) {
    %c0_i32 = arith.constant 0 : i32
    return %arg0, %arg1 : i32, i32
  }
}

module attributes {stable_mosaic.version = 11 : i64} {
  func.func @kernel(%arg0: i32, %arg1: i32, %arg2: memref<16x128xbf16, #tpu.memory_space<vmem>>, %arg3: memref<128x256xbf16, #tpu.memory_space<vmem>>, %arg4: memref<1x256xf32, #tpu.memory_space<vmem>>, %arg5: memref<16x256xf32, #tpu.memory_space<vmem>>) attributes {dimension_semantics = [#tpu.dimension_semantics<parallel>, #tpu.dimension_semantics<parallel>], iteration_bounds = array<i64: 1, 4>, scalar_prefetch = 0 : i64, scratch_operands = 0 : i64, tpu.core_type = #tpu.core_type<tc>, window_params = [{transform_indices = @transform_0, window_bounds = array<i64: 16, 128>}, {transform_indices = @transform_1, window_bounds = array<i64: 128, 256>}, {transform_indices = @transform_2, window_bounds = array<i64: 1, 256>}, {transform_indices = @transform_3, window_bounds = array<i64: 16, 256>}]} {
    %c0 = arith.constant 0 : index
    %c0_0 = arith.constant 0 : index
    %0 = vector.load %arg2[%c0, %c0_0] : memref<16x128xbf16, #tpu.memory_space<vmem>>, vector<16x128xbf16>
    %c0_1 = arith.constant 0 : index
    %c0_2 = arith.constant 0 : index
    %1 = vector.load %arg3[%c0_1, %c0_2] : memref<128x256xbf16, #tpu.memory_space<vmem>>, vector<128x256xbf16>
    %cst = arith.constant dense<0.000000e+00> : vector<16x256xf32>
    %2 = tpu.matmul %0, %1, %cst {dimension_numbers = #tpu.dot_dimension_numbers<[1], [0], [0], [1], [0, 0, 1, 1], [], []>} : vector<16x128xbf16>, vector<128x256xbf16>, vector<16x256xf32> -> vector<16x256xf32>
    %c0_3 = arith.constant 0 : index
    %c0_4 = arith.constant 0 : index
    %3 = vector.load %arg4[%c0_3, %c0_4] : memref<1x256xf32, #tpu.memory_space<vmem>>, vector<1x256xf32>
    %4 = vector.broadcast %3 : vector<1x256xf32> to vector<16x256xf32>
    %5 = arith.addf %2, %4 : vector<16x256xf32>
    %c0_5 = arith.constant 0 : index
    %c0_6 = arith.constant 0 : index
    %6 = vector.load %arg5[%c0_5, %c0_6] : memref<16x256xf32, #tpu.memory_space<vmem>>, vector<16x256xf32>
    tpu.vector_store %arg5[%c0_5, %c0_6], %5 {strides = array<i32>} : memref<16x256xf32, #tpu.memory_space<vmem>>, vector<16x256xf32>,
    return
  }
  func.func @transform_0(%arg0: i32, %arg1: i32) -> (i32, i32) {
    %c0_i32 = arith.constant 0 : i32
    %c0_i32_0 = arith.constant 0 : i32
    return %arg0, %c0_i32 : i32, i32
  }
  func.func @transform_1(%arg0: i32, %arg1: i32) -> (i32, i32) {
    %c0_i32 = arith.constant 0 : i32
    %c0_i32_0 = arith.constant 0 : i32
    return %c0_i32, %arg1 : i32, i32
  }
  func.func @transform_2(%arg0: i32, %arg1: i32) -> (i32, i32) {
    %c0_i32 = arith.constant 0 : i32
    %c0_i32_0 = arith.constant 0 : i32
    return %c0_i32, %arg1 : i32, i32
  }
  func.func @transform_3(%arg0: i32, %arg1: i32) -> (i32, i32) {
    %c0_i32 = arith.constant 0 : i32
    return %arg0, %arg1 : i32, i32
  }
}

module attributes {stable_mosaic.version = 11 : i64} {
  func.func @kernel(%arg0: i32, %arg1: i32, %arg2: memref<8x2x512xf32, #tpu.memory_space<vmem>>, %arg3: memref<128x512xbf16, #tpu.memory_space<vmem>>, %arg4: memref<8x2x128xbf16, #tpu.memory_space<vmem>>, %arg5: memref<2x128xf32, #tpu.memory_space<vmem>>, %arg6: memref<2x128xf32, #tpu.memory_space<vmem>>) attributes {dimension_semantics = [#tpu.dimension_semantics<parallel>, #tpu.dimension_semantics<arbitrary>], iteration_bounds = array<i64: 2, 1>, scalar_prefetch = 0 : i64, scratch_operands = 2 : i64, tpu.core_type = #tpu.core_type<tc>, window_params = [{transform_indices = @transform_0, window_bounds = array<i64: 8, 2, 512>}, {transform_indices = @transform_1, window_bounds = array<i64: 128, 512>}, {transform_indices = @transform_2, window_bounds = array<i64: 8, 2, 128>}]} {
    %c0_i32 = arith.constant 0 : i32
    %0 = arith.cmpi eq, %arg1, %c0_i32 : i32
    %1 = arith.extui %0 : i1 to i32
    %c0_i32_0 = arith.constant 0 : i32
    %2 = arith.cmpi ne, %1, %c0_i32_0 : i32
    scf.if %2 {
      %cst = arith.constant 0.000000e+00 : f32
      %10 = vector.broadcast %cst : f32 to vector<2x128xf32>
      %c0_5 = arith.constant 0 : index
      %c0_6 = arith.constant 0 : index
      %11 = vector.load %arg5[%c0_5, %c0_6] : memref<2x128xf32, #tpu.memory_space<vmem>>, vector<2x128xf32>
      tpu.vector_store %arg5[%c0_5, %c0_6], %10 {strides = array<i32>} : memref<2x128xf32, #tpu.memory_space<vmem>>, vector<2x128xf32>,
      %cst_7 = arith.constant 0.000000e+00 : f32
      %12 = vector.broadcast %cst_7 : f32 to vector<2x128xf32>
      %c0_8 = arith.constant 0 : index
      %c0_9 = arith.constant 0 : index
      %13 = vector.load %arg6[%c0_8, %c0_9] : memref<2x128xf32, #tpu.memory_space<vmem>>, vector<2x128xf32>
      tpu.vector_store %arg6[%c0_8, %c0_9], %12 {strides = array<i32>} : memref<2x128xf32, #tpu.memory_space<vmem>>, vector<2x128xf32>,
    } else {
    }
    %c0 = arith.constant 0 : index
    %c0_1 = arith.constant 0 : index
    %3 = vector.load %arg3[%c0, %c0_1] : memref<128x512xbf16, #tpu.memory_space<vmem>>, vector<128x512xbf16>
    %c0_i32_2 = arith.constant 0 : i32
    %4 = arith.cmpi eq, %arg0, %c0_i32_2 : i32
    %5 = arith.extui %4 : i1 to i32
    %c0_i32_3 = arith.constant 0 : i32
    %6 = arith.cmpi ne, %5, %c0_i32_3 : i32
    scf.if %6 {
      %c0_5 = arith.constant 0 : index
      %c0_6 = arith.constant 0 : index
      %c0_7 = arith.constant 0 : index
      %10 = vector.load %arg2[%c0_5, %c0_6, %c0_7] : memref<8x2x512xf32, #tpu.memory_space<vmem>>, vector<1x2x512xf32>
      %11 = vector.shape_cast %10 : vector<1x2x512xf32> to vector<2x512xf32>
      %c0_8 = arith.constant 0 : index
      %c0_9 = arith.constant 0 : index
      %12 = vector.load %arg5[%c0_8, %c0_9] : memref<2x128xf32, #tpu.memory_space<vmem>>, vector<2x128xf32>
      %13 = arith.truncf %12 : vector<2x128xf32> to vector<2x128xbf16>
      %cst = arith.constant dense<0.000000e+00> : vector<2x512xf32>
      %14 = tpu.matmul %13, %3, %cst {dimension_numbers = #tpu.dot_dimension_numbers<[1], [0], [0], [1], [0, 0, 1, 1], [], []>} : vector<2x128xbf16>, vector<128x512xbf16>, vector<2x512xf32> -> vector<2x512xf32>
      %15 = arith.addf %11, %14 : vector<2x512xf32>
      %16 = vector.extract_strided_slice %15 {offsets = [0, 0], sizes = [2, 128], strides = [1, 1]} : vector<2x512xf32> to vector<2x128xf32>
      %17 = arith.negf %16 : vector<2x128xf32>
      %18 = math.exp %17 : vector<2x128xf32>
      %cst_10 = arith.constant 1.000000e+00 : f32
      %19 = vector.broadcast %cst_10 : f32 to vector<2x128xf32>
      %20 = arith.addf %19, %18 : vector<2x128xf32>
      %21 = arith.divf %19, %20 : vector<2x128xf32>
      %22 = vector.extract_strided_slice %15 {offsets = [0, 128], sizes = [2, 128], strides = [1, 1]} : vector<2x512xf32> to vector<2x128xf32>
      %23 = arith.negf %22 : vector<2x128xf32>
      %24 = math.exp %23 : vector<2x128xf32>
      %cst_11 = arith.constant 1.000000e+00 : f32
      %25 = vector.broadcast %cst_11 : f32 to vector<2x128xf32>
      %26 = arith.addf %25, %24 : vector<2x128xf32>
      %27 = arith.divf %25, %26 : vector<2x128xf32>
      %28 = vector.extract_strided_slice %15 {offsets = [0, 256], sizes = [2, 128], strides = [1, 1]} : vector<2x512xf32> to vector<2x128xf32>
      %29 = math.tanh %28 : vector<2x128xf32>
      %30 = vector.extract_strided_slice %15 {offsets = [0, 384], sizes = [2, 128], strides = [1, 1]} : vector<2x512xf32> to vector<2x128xf32>
      %31 = arith.negf %30 : vector<2x128xf32>
      %32 = math.exp %31 : vector<2x128xf32>
      %cst_12 = arith.constant 1.000000e+00 : f32
      %33 = vector.broadcast %cst_12 : f32 to vector<2x128xf32>
      %34 = arith.addf %33, %32 : vector<2x128xf32>
      %35 = arith.divf %33, %34 : vector<2x128xf32>
      %c0_13 = arith.constant 0 : index
      %c0_14 = arith.constant 0 : index
      %36 = vector.load %arg6[%c0_13, %c0_14] : memref<2x128xf32, #tpu.memory_space<vmem>>, vector<2x128xf32>
      %37 = arith.mulf %27, %36 : vector<2x128xf32>
      %38 = arith.mulf %21, %29 : vector<2x128xf32>
      %39 = arith.addf %37, %38 : vector<2x128xf32>
      %40 = math.tanh %39 : vector<2x128xf32>
      %41 = arith.mulf %35, %40 : vector<2x128xf32>
      %c0_15 = arith.constant 0 : index
      %c0_16 = arith.constant 0 : index
      %42 = vector.load %arg6[%c0_15, %c0_16] : memref<2x128xf32, #tpu.memory_space<vmem>>, vector<2x128xf32>
      tpu.vector_store %arg6[%c0_15, %c0_16], %39 {strides = array<i32>} : memref<2x128xf32, #tpu.memory_space<vmem>>, vector<2x128xf32>,
      %c0_17 = arith.constant 0 : index
      %c0_18 = arith.constant 0 : index
      %43 = vector.load %arg5[%c0_17, %c0_18] : memref<2x128xf32, #tpu.memory_space<vmem>>, vector<2x128xf32>
      tpu.vector_store %arg5[%c0_17, %c0_18], %41 {strides = array<i32>} : memref<2x128xf32, #tpu.memory_space<vmem>>, vector<2x128xf32>,
      %44 = arith.truncf %41 : vector<2x128xf32> to vector<2x128xbf16>
      %c0_19 = arith.constant 0 : index
      %c0_20 = arith.constant 0 : index
      %c0_21 = arith.constant 0 : index
      %45 = vector.load %arg4[%c0_19, %c0_20, %c0_21] : memref<8x2x128xbf16, #tpu.memory_space<vmem>>, vector<1x2x128xbf16>
      %46 = vector.shape_cast %45 : vector<1x2x128xbf16> to vector<2x128xbf16>
      %47 = vector.shape_cast %44 : vector<2x128xbf16> to vector<1x2x128xbf16>
      tpu.vector_store %arg4[%c0_19, %c0_20, %c0_21], %47 {strides = array<i32>} : memref<8x2x128xbf16, #tpu.memory_space<vmem>>, vector<1x2x128xbf16>,
      %c1 = arith.constant 1 : index
      %c0_22 = arith.constant 0 : index
      %c0_23 = arith.constant 0 : index
      %48 = vector.load %arg2[%c1, %c0_22, %c0_23] : memref<8x2x512xf32, #tpu.memory_space<vmem>>, vector<1x2x512xf32>
      %49 = vector.shape_cast %48 : vector<1x2x512xf32> to vector<2x512xf32>
      %c0_24 = arith.constant 0 : index
      %c0_25 = arith.constant 0 : index
      %50 = vector.load %arg5[%c0_24, %c0_25] : memref<2x128xf32, #tpu.memory_space<vmem>>, vector<2x128xf32>
      %51 = arith.truncf %50 : vector<2x128xf32> to vector<2x128xbf16>
      %cst_26 = arith.constant dense<0.000000e+00> : vector<2x512xf32>
      %52 = tpu.matmul %51, %3, %cst_26 {dimension_numbers = #tpu.dot_dimension_numbers<[1], [0], [0], [1], [0, 0, 1, 1], [], []>} : vector<2x128xbf16>, vector<128x512xbf16>, vector<2x512xf32> -> vector<2x512xf32>
      %53 = arith.addf %49, %52 : vector<2x512xf32>
      %54 = vector.extract_strided_slice %53 {offsets = [0, 0], sizes = [2, 128], strides = [1, 1]} : vector<2x512xf32> to vector<2x128xf32>
      %55 = arith.negf %54 : vector<2x128xf32>
      %56 = math.exp %55 : vector<2x128xf32>
      %cst_27 = arith.constant 1.000000e+00 : f32
      %57 = vector.broadcast %cst_27 : f32 to vector<2x128xf32>
      %58 = arith.addf %57, %56 : vector<2x128xf32>
      %59 = arith.divf %57, %58 : vector<2x128xf32>
      %60 = vector.extract_strided_slice %53 {offsets = [0, 128], sizes = [2, 128], strides = [1, 1]} : vector<2x512xf32> to vector<2x128xf32>
      %61 = arith.negf %60 : vector<2x128xf32>
      %62 = math.exp %61 : vector<2x128xf32>
      %cst_28 = arith.constant 1.000000e+00 : f32
      %63 = vector.broadcast %cst_28 : f32 to vector<2x128xf32>
      %64 = arith.addf %63, %62 : vector<2x128xf32>
      %65 = arith.divf %63, %64 : vector<2x128xf32>
      %66 = vector.extract_strided_slice %53 {offsets = [0, 256], sizes = [2, 128], strides = [1, 1]} : vector<2x512xf32> to vector<2x128xf32>
      %67 = math.tanh %66 : vector<2x128xf32>
      %68 = vector.extract_strided_slice %53 {offsets = [0, 384], sizes = [2, 128], strides = [1, 1]} : vector<2x512xf32> to vector<2x128xf32>
      %69 = arith.negf %68 : vector<2x128xf32>
      %70 = math.exp %69 : vector<2x128xf32>
      %cst_29 = arith.constant 1.000000e+00 : f32
      %71 = vector.broadcast %cst_29 : f32 to vector<2x128xf32>
      %72 = arith.addf %71, %70 : vector<2x128xf32>
      %73 = arith.divf %71, %72 : vector<2x128xf32>
      %c0_30 = arith.constant 0 : index
      %c0_31 = arith.constant 0 : index
      %74 = vector.load %arg6[%c0_30, %c0_31] : memref<2x128xf32, #tpu.memory_space<vmem>>, vector<2x128xf32>
      %75 = arith.mulf %65, %74 : vector<2x128xf32>
      %76 = arith.mulf %59, %67 : vector<2x128xf32>
      %77 = arith.addf %75, %76 : vector<2x128xf32>
      %78 = math.tanh %77 : vector<2x128xf32>
      %79 = arith.mulf %73, %78 : vector<2x128xf32>
      %c0_32 = arith.constant 0 : index
      %c0_33 = arith.constant 0 : index
      %80 = vector.load %arg6[%c0_32, %c0_33] : memref<2x128xf32, #tpu.memory_space<vmem>>, vector<2x128xf32>
      tpu.vector_store %arg6[%c0_32, %c0_33], %77 {strides = array<i32>} : memref<2x128xf32, #tpu.memory_space<vmem>>, vector<2x128xf32>,
      %c0_34 = arith.constant 0 : index
      %c0_35 = arith.constant 0 : index
      %81 = vector.load %arg5[%c0_34, %c0_35] : memref<2x128xf32, #tpu.memory_space<vmem>>, vector<2x128xf32>
      tpu.vector_store %arg5[%c0_34, %c0_35], %79 {strides = array<i32>} : memref<2x128xf32, #tpu.memory_space<vmem>>, vector<2x128xf32>,
      %82 = arith.truncf %79 : vector<2x128xf32> to vector<2x128xbf16>
      %c1_36 = arith.constant 1 : index
      %c0_37 = arith.constant 0 : index
      %c0_38 = arith.constant 0 : index
      %83 = vector.load %arg4[%c1_36, %c0_37, %c0_38] : memref<8x2x128xbf16, #tpu.memory_space<vmem>>, vector<1x2x128xbf16>
      %84 = vector.shape_cast %83 : vector<1x2x128xbf16> to vector<2x128xbf16>
      %85 = vector.shape_cast %82 : vector<2x128xbf16> to vector<1x2x128xbf16>
      tpu.vector_store %arg4[%c1_36, %c0_37, %c0_38], %85 {strides = array<i32>} : memref<8x2x128xbf16, #tpu.memory_space<vmem>>, vector<1x2x128xbf16>,
      %c2 = arith.constant 2 : index
      %c0_39 = arith.constant 0 : index
      %c0_40 = arith.constant 0 : index
      %86 = vector.load %arg2[%c2, %c0_39, %c0_40] : memref<8x2x512xf32, #tpu.memory_space<vmem>>, vector<1x2x512xf32>
      %87 = vector.shape_cast %86 : vector<1x2x512xf32> to vector<2x512xf32>
      %c0_41 = arith.constant 0 : index
      %c0_42 = arith.constant 0 : index
      %88 = vector.load %arg5[%c0_41, %c0_42] : memref<2x128xf32, #tpu.memory_space<vmem>>, vector<2x128xf32>
      %89 = arith.truncf %88 : vector<2x128xf32> to vector<2x128xbf16>
      %cst_43 = arith.constant dense<0.000000e+00> : vector<2x512xf32>
      %90 = tpu.matmul %89, %3, %cst_43 {dimension_numbers = #tpu.dot_dimension_numbers<[1], [0], [0], [1], [0, 0, 1, 1], [], []>} : vector<2x128xbf16>, vector<128x512xbf16>, vector<2x512xf32> -> vector<2x512xf32>
      %91 = arith.addf %87, %90 : vector<2x512xf32>
      %92 = vector.extract_strided_slice %91 {offsets = [0, 0], sizes = [2, 128], strides = [1, 1]} : vector<2x512xf32> to vector<2x128xf32>
      %93 = arith.negf %92 : vector<2x128xf32>
      %94 = math.exp %93 : vector<2x128xf32>
      %cst_44 = arith.constant 1.000000e+00 : f32
      %95 = vector.broadcast %cst_44 : f32 to vector<2x128xf32>
      %96 = arith.addf %95, %94 : vector<2x128xf32>
      %97 = arith.divf %95, %96 : vector<2x128xf32>
      %98 = vector.extract_strided_slice %91 {offsets = [0, 128], sizes = [2, 128], strides = [1, 1]} : vector<2x512xf32> to vector<2x128xf32>
      %99 = arith.negf %98 : vector<2x128xf32>
      %100 = math.exp %99 : vector<2x128xf32>
      %cst_45 = arith.constant 1.000000e+00 : f32
      %101 = vector.broadcast %cst_45 : f32 to vector<2x128xf32>
      %102 = arith.addf %101, %100 : vector<2x128xf32>
      %103 = arith.divf %101, %102 : vector<2x128xf32>
      %104 = vector.extract_strided_slice %91 {offsets = [0, 256], sizes = [2, 128], strides = [1, 1]} : vector<2x512xf32> to vector<2x128xf32>
      %105 = math.tanh %104 : vector<2x128xf32>
      %106 = vector.extract_strided_slice %91 {offsets = [0, 384], sizes = [2, 128], strides = [1, 1]} : vector<2x512xf32> to vector<2x128xf32>
      %107 = arith.negf %106 : vector<2x128xf32>
      %108 = math.exp %107 : vector<2x128xf32>
      %cst_46 = arith.constant 1.000000e+00 : f32
      %109 = vector.broadcast %cst_46 : f32 to vector<2x128xf32>
      %110 = arith.addf %109, %108 : vector<2x128xf32>
      %111 = arith.divf %109, %110 : vector<2x128xf32>
      %c0_47 = arith.constant 0 : index
      %c0_48 = arith.constant 0 : index
      %112 = vector.load %arg6[%c0_47, %c0_48] : memref<2x128xf32, #tpu.memory_space<vmem>>, vector<2x128xf32>
      %113 = arith.mulf %103, %112 : vector<2x128xf32>
      %114 = arith.mulf %97, %105 : vector<2x128xf32>
      %115 = arith.addf %113, %114 : vector<2x128xf32>
      %116 = math.tanh %115 : vector<2x128xf32>
      %117 = arith.mulf %111, %116 : vector<2x128xf32>
      %c0_49 = arith.constant 0 : index
      %c0_50 = arith.constant 0 : index
      %118 = vector.load %arg6[%c0_49, %c0_50] : memref<2x128xf32, #tpu.memory_space<vmem>>, vector<2x128xf32>
      tpu.vector_store %arg6[%c0_49, %c0_50], %115 {strides = array<i32>} : memref<2x128xf32, #tpu.memory_space<vmem>>, vector<2x128xf32>,
      %c0_51 = arith.constant 0 : index
      %c0_52 = arith.constant 0 : index
      %119 = vector.load %arg5[%c0_51, %c0_52] : memref<2x128xf32, #tpu.memory_space<vmem>>, vector<2x128xf32>
      tpu.vector_store %arg5[%c0_51, %c0_52], %117 {strides = array<i32>} : memref<2x128xf32, #tpu.memory_space<vmem>>, vector<2x128xf32>,
      %120 = arith.truncf %117 : vector<2x128xf32> to vector<2x128xbf16>
      %c2_53 = arith.constant 2 : index
      %c0_54 = arith.constant 0 : index
      %c0_55 = arith.constant 0 : index
      %121 = vector.load %arg4[%c2_53, %c0_54, %c0_55] : memref<8x2x128xbf16, #tpu.memory_space<vmem>>, vector<1x2x128xbf16>
      %122 = vector.shape_cast %121 : vector<1x2x128xbf16> to vector<2x128xbf16>
      %123 = vector.shape_cast %120 : vector<2x128xbf16> to vector<1x2x128xbf16>
      tpu.vector_store %arg4[%c2_53, %c0_54, %c0_55], %123 {strides = array<i32>} : memref<8x2x128xbf16, #tpu.memory_space<vmem>>, vector<1x2x128xbf16>,
      %c3 = arith.constant 3 : index
      %c0_56 = arith.constant 0 : index
      %c0_57 = arith.constant 0 : index
      %124 = vector.load %arg2[%c3, %c0_56, %c0_57] : memref<8x2x512xf32, #tpu.memory_space<vmem>>, vector<1x2x512xf32>
      %125 = vector.shape_cast %124 : vector<1x2x512xf32> to vector<2x512xf32>
      %c0_58 = arith.constant 0 : index
      %c0_59 = arith.constant 0 : index
      %126 = vector.load %arg5[%c0_58, %c0_59] : memref<2x128xf32, #tpu.memory_space<vmem>>, vector<2x128xf32>
      %127 = arith.truncf %126 : vector<2x128xf32> to vector<2x128xbf16>
      %cst_60 = arith.constant dense<0.000000e+00> : vector<2x512xf32>
      %128 = tpu.matmul %127, %3, %cst_60 {dimension_numbers = #tpu.dot_dimension_numbers<[1], [0], [0], [1], [0, 0, 1, 1], [], []>} : vector<2x128xbf16>, vector<128x512xbf16>, vector<2x512xf32> -> vector<2x512xf32>
      %129 = arith.addf %125, %128 : vector<2x512xf32>
      %130 = vector.extract_strided_slice %129 {offsets = [0, 0], sizes = [2, 128], strides = [1, 1]} : vector<2x512xf32> to vector<2x128xf32>
      %131 = arith.negf %130 : vector<2x128xf32>
      %132 = math.exp %131 : vector<2x128xf32>
      %cst_61 = arith.constant 1.000000e+00 : f32
      %133 = vector.broadcast %cst_61 : f32 to vector<2x128xf32>
      %134 = arith.addf %133, %132 : vector<2x128xf32>
      %135 = arith.divf %133, %134 : vector<2x128xf32>
      %136 = vector.extract_strided_slice %129 {offsets = [0, 128], sizes = [2, 128], strides = [1, 1]} : vector<2x512xf32> to vector<2x128xf32>
      %137 = arith.negf %136 : vector<2x128xf32>
      %138 = math.exp %137 : vector<2x128xf32>
      %cst_62 = arith.constant 1.000000e+00 : f32
      %139 = vector.broadcast %cst_62 : f32 to vector<2x128xf32>
      %140 = arith.addf %139, %138 : vector<2x128xf32>
      %141 = arith.divf %139, %140 : vector<2x128xf32>
      %142 = vector.extract_strided_slice %129 {offsets = [0, 256], sizes = [2, 128], strides = [1, 1]} : vector<2x512xf32> to vector<2x128xf32>
      %143 = math.tanh %142 : vector<2x128xf32>
      %144 = vector.extract_strided_slice %129 {offsets = [0, 384], sizes = [2, 128], strides = [1, 1]} : vector<2x512xf32> to vector<2x128xf32>
      %145 = arith.negf %144 : vector<2x128xf32>
      %146 = math.exp %145 : vector<2x128xf32>
      %cst_63 = arith.constant 1.000000e+00 : f32
      %147 = vector.broadcast %cst_63 : f32 to vector<2x128xf32>
      %148 = arith.addf %147, %146 : vector<2x128xf32>
      %149 = arith.divf %147, %148 : vector<2x128xf32>
      %c0_64 = arith.constant 0 : index
      %c0_65 = arith.constant 0 : index
      %150 = vector.load %arg6[%c0_64, %c0_65] : memref<2x128xf32, #tpu.memory_space<vmem>>, vector<2x128xf32>
      %151 = arith.mulf %141, %150 : vector<2x128xf32>
      %152 = arith.mulf %135, %143 : vector<2x128xf32>
      %153 = arith.addf %151, %152 : vector<2x128xf32>
      %154 = math.tanh %153 : vector<2x128xf32>
      %155 = arith.mulf %149, %154 : vector<2x128xf32>
      %c0_66 = arith.constant 0 : index
      %c0_67 = arith.constant 0 : index
      %156 = vector.load %arg6[%c0_66, %c0_67] : memref<2x128xf32, #tpu.memory_space<vmem>>, vector<2x128xf32>
      tpu.vector_store %arg6[%c0_66, %c0_67], %153 {strides = array<i32>} : memref<2x128xf32, #tpu.memory_space<vmem>>, vector<2x128xf32>,
      %c0_68 = arith.constant 0 : index
      %c0_69 = arith.constant 0 : index
      %157 = vector.load %arg5[%c0_68, %c0_69] : memref<2x128xf32, #tpu.memory_space<vmem>>, vector<2x128xf32>
      tpu.vector_store %arg5[%c0_68, %c0_69], %155 {strides = array<i32>} : memref<2x128xf32, #tpu.memory_space<vmem>>, vector<2x128xf32>,
      %158 = arith.truncf %155 : vector<2x128xf32> to vector<2x128xbf16>
      %c3_70 = arith.constant 3 : index
      %c0_71 = arith.constant 0 : index
      %c0_72 = arith.constant 0 : index
      %159 = vector.load %arg4[%c3_70, %c0_71, %c0_72] : memref<8x2x128xbf16, #tpu.memory_space<vmem>>, vector<1x2x128xbf16>
      %160 = vector.shape_cast %159 : vector<1x2x128xbf16> to vector<2x128xbf16>
      %161 = vector.shape_cast %158 : vector<2x128xbf16> to vector<1x2x128xbf16>
      tpu.vector_store %arg4[%c3_70, %c0_71, %c0_72], %161 {strides = array<i32>} : memref<8x2x128xbf16, #tpu.memory_space<vmem>>, vector<1x2x128xbf16>,
      %c4 = arith.constant 4 : index
      %c0_73 = arith.constant 0 : index
      %c0_74 = arith.constant 0 : index
      %162 = vector.load %arg2[%c4, %c0_73, %c0_74] : memref<8x2x512xf32, #tpu.memory_space<vmem>>, vector<1x2x512xf32>
      %163 = vector.shape_cast %162 : vector<1x2x512xf32> to vector<2x512xf32>
      %c0_75 = arith.constant 0 : index
      %c0_76 = arith.constant 0 : index
      %164 = vector.load %arg5[%c0_75, %c0_76] : memref<2x128xf32, #tpu.memory_space<vmem>>, vector<2x128xf32>
      %165 = arith.truncf %164 : vector<2x128xf32> to vector<2x128xbf16>
      %cst_77 = arith.constant dense<0.000000e+00> : vector<2x512xf32>
      %166 = tpu.matmul %165, %3, %cst_77 {dimension_numbers = #tpu.dot_dimension_numbers<[1], [0], [0], [1], [0, 0, 1, 1], [], []>} : vector<2x128xbf16>, vector<128x512xbf16>, vector<2x512xf32> -> vector<2x512xf32>
      %167 = arith.addf %163, %166 : vector<2x512xf32>
      %168 = vector.extract_strided_slice %167 {offsets = [0, 0], sizes = [2, 128], strides = [1, 1]} : vector<2x512xf32> to vector<2x128xf32>
      %169 = arith.negf %168 : vector<2x128xf32>
      %170 = math.exp %169 : vector<2x128xf32>
      %cst_78 = arith.constant 1.000000e+00 : f32
      %171 = vector.broadcast %cst_78 : f32 to vector<2x128xf32>
      %172 = arith.addf %171, %170 : vector<2x128xf32>
      %173 = arith.divf %171, %172 : vector<2x128xf32>
      %174 = vector.extract_strided_slice %167 {offsets = [0, 128], sizes = [2, 128], strides = [1, 1]} : vector<2x512xf32> to vector<2x128xf32>
      %175 = arith.negf %174 : vector<2x128xf32>
      %176 = math.exp %175 : vector<2x128xf32>
      %cst_79 = arith.constant 1.000000e+00 : f32
      %177 = vector.broadcast %cst_79 : f32 to vector<2x128xf32>
      %178 = arith.addf %177, %176 : vector<2x128xf32>
      %179 = arith.divf %177, %178 : vector<2x128xf32>
      %180 = vector.extract_strided_slice %167 {offsets = [0, 256], sizes = [2, 128], strides = [1, 1]} : vector<2x512xf32> to vector<2x128xf32>
      %181 = math.tanh %180 : vector<2x128xf32>
      %182 = vector.extract_strided_slice %167 {offsets = [0, 384], sizes = [2, 128], strides = [1, 1]} : vector<2x512xf32> to vector<2x128xf32>
      %183 = arith.negf %182 : vector<2x128xf32>
      %184 = math.exp %183 : vector<2x128xf32>
      %cst_80 = arith.constant 1.000000e+00 : f32
      %185 = vector.broadcast %cst_80 : f32 to vector<2x128xf32>
      %186 = arith.addf %185, %184 : vector<2x128xf32>
      %187 = arith.divf %185, %186 : vector<2x128xf32>
      %c0_81 = arith.constant 0 : index
      %c0_82 = arith.constant 0 : index
      %188 = vector.load %arg6[%c0_81, %c0_82] : memref<2x128xf32, #tpu.memory_space<vmem>>, vector<2x128xf32>
      %189 = arith.mulf %179, %188 : vector<2x128xf32>
      %190 = arith.mulf %173, %181 : vector<2x128xf32>
      %191 = arith.addf %189, %190 : vector<2x128xf32>
      %192 = math.tanh %191 : vector<2x128xf32>
      %193 = arith.mulf %187, %192 : vector<2x128xf32>
      %c0_83 = arith.constant 0 : index
      %c0_84 = arith.constant 0 : index
      %194 = vector.load %arg6[%c0_83, %c0_84] : memref<2x128xf32, #tpu.memory_space<vmem>>, vector<2x128xf32>
      tpu.vector_store %arg6[%c0_83, %c0_84], %191 {strides = array<i32>} : memref<2x128xf32, #tpu.memory_space<vmem>>, vector<2x128xf32>,
      %c0_85 = arith.constant 0 : index
      %c0_86 = arith.constant 0 : index
      %195 = vector.load %arg5[%c0_85, %c0_86] : memref<2x128xf32, #tpu.memory_space<vmem>>, vector<2x128xf32>
      tpu.vector_store %arg5[%c0_85, %c0_86], %193 {strides = array<i32>} : memref<2x128xf32, #tpu.memory_space<vmem>>, vector<2x128xf32>,
      %196 = arith.truncf %193 : vector<2x128xf32> to vector<2x128xbf16>
      %c4_87 = arith.constant 4 : index
      %c0_88 = arith.constant 0 : index
      %c0_89 = arith.constant 0 : index
      %197 = vector.load %arg4[%c4_87, %c0_88, %c0_89] : memref<8x2x128xbf16, #tpu.memory_space<vmem>>, vector<1x2x128xbf16>
      %198 = vector.shape_cast %197 : vector<1x2x128xbf16> to vector<2x128xbf16>
      %199 = vector.shape_cast %196 : vector<2x128xbf16> to vector<1x2x128xbf16>
      tpu.vector_store %arg4[%c4_87, %c0_88, %c0_89], %199 {strides = array<i32>} : memref<8x2x128xbf16, #tpu.memory_space<vmem>>, vector<1x2x128xbf16>,
      %c5 = arith.constant 5 : index
      %c0_90 = arith.constant 0 : index
      %c0_91 = arith.constant 0 : index
      %200 = vector.load %arg2[%c5, %c0_90, %c0_91] : memref<8x2x512xf32, #tpu.memory_space<vmem>>, vector<1x2x512xf32>
      %201 = vector.shape_cast %200 : vector<1x2x512xf32> to vector<2x512xf32>
      %c0_92 = arith.constant 0 : index
      %c0_93 = arith.constant 0 : index
      %202 = vector.load %arg5[%c0_92, %c0_93] : memref<2x128xf32, #tpu.memory_space<vmem>>, vector<2x128xf32>
      %203 = arith.truncf %202 : vector<2x128xf32> to vector<2x128xbf16>
      %cst_94 = arith.constant dense<0.000000e+00> : vector<2x512xf32>
      %204 = tpu.matmul %203, %3, %cst_94 {dimension_numbers = #tpu.dot_dimension_numbers<[1], [0], [0], [1], [0, 0, 1, 1], [], []>} : vector<2x128xbf16>, vector<128x512xbf16>, vector<2x512xf32> -> vector<2x512xf32>
      %205 = arith.addf %201, %204 : vector<2x512xf32>
      %206 = vector.extract_strided_slice %205 {offsets = [0, 0], sizes = [2, 128], strides = [1, 1]} : vector<2x512xf32> to vector<2x128xf32>
      %207 = arith.negf %206 : vector<2x128xf32>
      %208 = math.exp %207 : vector<2x128xf32>
      %cst_95 = arith.constant 1.000000e+00 : f32
      %209 = vector.broadcast %cst_95 : f32 to vector<2x128xf32>
      %210 = arith.addf %209, %208 : vector<2x128xf32>
      %211 = arith.divf %209, %210 : vector<2x128xf32>
      %212 = vector.extract_strided_slice %205 {offsets = [0, 128], sizes = [2, 128], strides = [1, 1]} : vector<2x512xf32> to vector<2x128xf32>
      %213 = arith.negf %212 : vector<2x128xf32>
      %214 = math.exp %213 : vector<2x128xf32>
      %cst_96 = arith.constant 1.000000e+00 : f32
      %215 = vector.broadcast %cst_96 : f32 to vector<2x128xf32>
      %216 = arith.addf %215, %214 : vector<2x128xf32>
      %217 = arith.divf %215, %216 : vector<2x128xf32>
      %218 = vector.extract_strided_slice %205 {offsets = [0, 256], sizes = [2, 128], strides = [1, 1]} : vector<2x512xf32> to vector<2x128xf32>
      %219 = math.tanh %218 : vector<2x128xf32>
      %220 = vector.extract_strided_slice %205 {offsets = [0, 384], sizes = [2, 128], strides = [1, 1]} : vector<2x512xf32> to vector<2x128xf32>
      %221 = arith.negf %220 : vector<2x128xf32>
      %222 = math.exp %221 : vector<2x128xf32>
      %cst_97 = arith.constant 1.000000e+00 : f32
      %223 = vector.broadcast %cst_97 : f32 to vector<2x128xf32>
      %224 = arith.addf %223, %222 : vector<2x128xf32>
      %225 = arith.divf %223, %224 : vector<2x128xf32>
      %c0_98 = arith.constant 0 : index
      %c0_99 = arith.constant 0 : index
      %226 = vector.load %arg6[%c0_98, %c0_99] : memref<2x128xf32, #tpu.memory_space<vmem>>, vector<2x128xf32>
      %227 = arith.mulf %217, %226 : vector<2x128xf32>
      %228 = arith.mulf %211, %219 : vector<2x128xf32>
      %229 = arith.addf %227, %228 : vector<2x128xf32>
      %230 = math.tanh %229 : vector<2x128xf32>
      %231 = arith.mulf %225, %230 : vector<2x128xf32>
      %c0_100 = arith.constant 0 : index
      %c0_101 = arith.constant 0 : index
      %232 = vector.load %arg6[%c0_100, %c0_101] : memref<2x128xf32, #tpu.memory_space<vmem>>, vector<2x128xf32>
      tpu.vector_store %arg6[%c0_100, %c0_101], %229 {strides = array<i32>} : memref<2x128xf32, #tpu.memory_space<vmem>>, vector<2x128xf32>,
      %c0_102 = arith.constant 0 : index
      %c0_103 = arith.constant 0 : index
      %233 = vector.load %arg5[%c0_102, %c0_103] : memref<2x128xf32, #tpu.memory_space<vmem>>, vector<2x128xf32>
      tpu.vector_store %arg5[%c0_102, %c0_103], %231 {strides = array<i32>} : memref<2x128xf32, #tpu.memory_space<vmem>>, vector<2x128xf32>,
      %234 = arith.truncf %231 : vector<2x128xf32> to vector<2x128xbf16>
      %c5_104 = arith.constant 5 : index
      %c0_105 = arith.constant 0 : index
      %c0_106 = arith.constant 0 : index
      %235 = vector.load %arg4[%c5_104, %c0_105, %c0_106] : memref<8x2x128xbf16, #tpu.memory_space<vmem>>, vector<1x2x128xbf16>
      %236 = vector.shape_cast %235 : vector<1x2x128xbf16> to vector<2x128xbf16>
      %237 = vector.shape_cast %234 : vector<2x128xbf16> to vector<1x2x128xbf16>
      tpu.vector_store %arg4[%c5_104, %c0_105, %c0_106], %237 {strides = array<i32>} : memref<8x2x128xbf16, #tpu.memory_space<vmem>>, vector<1x2x128xbf16>,
      %c6 = arith.constant 6 : index
      %c0_107 = arith.constant 0 : index
      %c0_108 = arith.constant 0 : index
      %238 = vector.load %arg2[%c6, %c0_107, %c0_108] : memref<8x2x512xf32, #tpu.memory_space<vmem>>, vector<1x2x512xf32>
      %239 = vector.shape_cast %238 : vector<1x2x512xf32> to vector<2x512xf32>
      %c0_109 = arith.constant 0 : index
      %c0_110 = arith.constant 0 : index
      %240 = vector.load %arg5[%c0_109, %c0_110] : memref<2x128xf32, #tpu.memory_space<vmem>>, vector<2x128xf32>
      %241 = arith.truncf %240 : vector<2x128xf32> to vector<2x128xbf16>
      %cst_111 = arith.constant dense<0.000000e+00> : vector<2x512xf32>
      %242 = tpu.matmul %241, %3, %cst_111 {dimension_numbers = #tpu.dot_dimension_numbers<[1], [0], [0], [1], [0, 0, 1, 1], [], []>} : vector<2x128xbf16>, vector<128x512xbf16>, vector<2x512xf32> -> vector<2x512xf32>
      %243 = arith.addf %239, %242 : vector<2x512xf32>
      %244 = vector.extract_strided_slice %243 {offsets = [0, 0], sizes = [2, 128], strides = [1, 1]} : vector<2x512xf32> to vector<2x128xf32>
      %245 = arith.negf %244 : vector<2x128xf32>
      %246 = math.exp %245 : vector<2x128xf32>
      %cst_112 = arith.constant 1.000000e+00 : f32
      %247 = vector.broadcast %cst_112 : f32 to vector<2x128xf32>
      %248 = arith.addf %247, %246 : vector<2x128xf32>
      %249 = arith.divf %247, %248 : vector<2x128xf32>
      %250 = vector.extract_strided_slice %243 {offsets = [0, 128], sizes = [2, 128], strides = [1, 1]} : vector<2x512xf32> to vector<2x128xf32>
      %251 = arith.negf %250 : vector<2x128xf32>
      %252 = math.exp %251 : vector<2x128xf32>
      %cst_113 = arith.constant 1.000000e+00 : f32
      %253 = vector.broadcast %cst_113 : f32 to vector<2x128xf32>
      %254 = arith.addf %253, %252 : vector<2x128xf32>
      %255 = arith.divf %253, %254 : vector<2x128xf32>
      %256 = vector.extract_strided_slice %243 {offsets = [0, 256], sizes = [2, 128], strides = [1, 1]} : vector<2x512xf32> to vector<2x128xf32>
      %257 = math.tanh %256 : vector<2x128xf32>
      %258 = vector.extract_strided_slice %243 {offsets = [0, 384], sizes = [2, 128], strides = [1, 1]} : vector<2x512xf32> to vector<2x128xf32>
      %259 = arith.negf %258 : vector<2x128xf32>
      %260 = math.exp %259 : vector<2x128xf32>
      %cst_114 = arith.constant 1.000000e+00 : f32
      %261 = vector.broadcast %cst_114 : f32 to vector<2x128xf32>
      %262 = arith.addf %261, %260 : vector<2x128xf32>
      %263 = arith.divf %261, %262 : vector<2x128xf32>
      %c0_115 = arith.constant 0 : index
      %c0_116 = arith.constant 0 : index
      %264 = vector.load %arg6[%c0_115, %c0_116] : memref<2x128xf32, #tpu.memory_space<vmem>>, vector<2x128xf32>
      %265 = arith.mulf %255, %264 : vector<2x128xf32>
      %266 = arith.mulf %249, %257 : vector<2x128xf32>
      %267 = arith.addf %265, %266 : vector<2x128xf32>
      %268 = math.tanh %267 : vector<2x128xf32>
      %269 = arith.mulf %263, %268 : vector<2x128xf32>
      %c0_117 = arith.constant 0 : index
      %c0_118 = arith.constant 0 : index
      %270 = vector.load %arg6[%c0_117, %c0_118] : memref<2x128xf32, #tpu.memory_space<vmem>>, vector<2x128xf32>
      tpu.vector_store %arg6[%c0_117, %c0_118], %267 {strides = array<i32>} : memref<2x128xf32, #tpu.memory_space<vmem>>, vector<2x128xf32>,
      %c0_119 = arith.constant 0 : index
      %c0_120 = arith.constant 0 : index
      %271 = vector.load %arg5[%c0_119, %c0_120] : memref<2x128xf32, #tpu.memory_space<vmem>>, vector<2x128xf32>
      tpu.vector_store %arg5[%c0_119, %c0_120], %269 {strides = array<i32>} : memref<2x128xf32, #tpu.memory_space<vmem>>, vector<2x128xf32>,
      %272 = arith.truncf %269 : vector<2x128xf32> to vector<2x128xbf16>
      %c6_121 = arith.constant 6 : index
      %c0_122 = arith.constant 0 : index
      %c0_123 = arith.constant 0 : index
      %273 = vector.load %arg4[%c6_121, %c0_122, %c0_123] : memref<8x2x128xbf16, #tpu.memory_space<vmem>>, vector<1x2x128xbf16>
      %274 = vector.shape_cast %273 : vector<1x2x128xbf16> to vector<2x128xbf16>
      %275 = vector.shape_cast %272 : vector<2x128xbf16> to vector<1x2x128xbf16>
      tpu.vector_store %arg4[%c6_121, %c0_122, %c0_123], %275 {strides = array<i32>} : memref<8x2x128xbf16, #tpu.memory_space<vmem>>, vector<1x2x128xbf16>,
      %c7 = arith.constant 7 : index
      %c0_124 = arith.constant 0 : index
      %c0_125 = arith.constant 0 : index
      %276 = vector.load %arg2[%c7, %c0_124, %c0_125] : memref<8x2x512xf32, #tpu.memory_space<vmem>>, vector<1x2x512xf32>
      %277 = vector.shape_cast %276 : vector<1x2x512xf32> to vector<2x512xf32>
      %c0_126 = arith.constant 0 : index
      %c0_127 = arith.constant 0 : index
      %278 = vector.load %arg5[%c0_126, %c0_127] : memref<2x128xf32, #tpu.memory_space<vmem>>, vector<2x128xf32>
      %279 = arith.truncf %278 : vector<2x128xf32> to vector<2x128xbf16>
      %cst_128 = arith.constant dense<0.000000e+00> : vector<2x512xf32>
      %280 = tpu.matmul %279, %3, %cst_128 {dimension_numbers = #tpu.dot_dimension_numbers<[1], [0], [0], [1], [0, 0, 1, 1], [], []>} : vector<2x128xbf16>, vector<128x512xbf16>, vector<2x512xf32> -> vector<2x512xf32>
      %281 = arith.addf %277, %280 : vector<2x512xf32>
      %282 = vector.extract_strided_slice %281 {offsets = [0, 0], sizes = [2, 128], strides = [1, 1]} : vector<2x512xf32> to vector<2x128xf32>
      %283 = arith.negf %282 : vector<2x128xf32>
      %284 = math.exp %283 : vector<2x128xf32>
      %cst_129 = arith.constant 1.000000e+00 : f32
      %285 = vector.broadcast %cst_129 : f32 to vector<2x128xf32>
      %286 = arith.addf %285, %284 : vector<2x128xf32>
      %287 = arith.divf %285, %286 : vector<2x128xf32>
      %288 = vector.extract_strided_slice %281 {offsets = [0, 128], sizes = [2, 128], strides = [1, 1]} : vector<2x512xf32> to vector<2x128xf32>
      %289 = arith.negf %288 : vector<2x128xf32>
      %290 = math.exp %289 : vector<2x128xf32>
      %cst_130 = arith.constant 1.000000e+00 : f32
      %291 = vector.broadcast %cst_130 : f32 to vector<2x128xf32>
      %292 = arith.addf %291, %290 : vector<2x128xf32>
      %293 = arith.divf %291, %292 : vector<2x128xf32>
      %294 = vector.extract_strided_slice %281 {offsets = [0, 256], sizes = [2, 128], strides = [1, 1]} : vector<2x512xf32> to vector<2x128xf32>
      %295 = math.tanh %294 : vector<2x128xf32>
      %296 = vector.extract_strided_slice %281 {offsets = [0, 384], sizes = [2, 128], strides = [1, 1]} : vector<2x512xf32> to vector<2x128xf32>
      %297 = arith.negf %296 : vector<2x128xf32>
      %298 = math.exp %297 : vector<2x128xf32>
      %cst_131 = arith.constant 1.000000e+00 : f32
      %299 = vector.broadcast %cst_131 : f32 to vector<2x128xf32>
      %300 = arith.addf %299, %298 : vector<2x128xf32>
      %301 = arith.divf %299, %300 : vector<2x128xf32>
      %c0_132 = arith.constant 0 : index
      %c0_133 = arith.constant 0 : index
      %302 = vector.load %arg6[%c0_132, %c0_133] : memref<2x128xf32, #tpu.memory_space<vmem>>, vector<2x128xf32>
      %303 = arith.mulf %293, %302 : vector<2x128xf32>
      %304 = arith.mulf %287, %295 : vector<2x128xf32>
      %305 = arith.addf %303, %304 : vector<2x128xf32>
      %306 = math.tanh %305 : vector<2x128xf32>
      %307 = arith.mulf %301, %306 : vector<2x128xf32>
      %c0_134 = arith.constant 0 : index
      %c0_135 = arith.constant 0 : index
      %308 = vector.load %arg6[%c0_134, %c0_135] : memref<2x128xf32, #tpu.memory_space<vmem>>, vector<2x128xf32>
      tpu.vector_store %arg6[%c0_134, %c0_135], %305 {strides = array<i32>} : memref<2x128xf32, #tpu.memory_space<vmem>>, vector<2x128xf32>,
      %c0_136 = arith.constant 0 : index
      %c0_137 = arith.constant 0 : index
      %309 = vector.load %arg5[%c0_136, %c0_137] : memref<2x128xf32, #tpu.memory_space<vmem>>, vector<2x128xf32>
      tpu.vector_store %arg5[%c0_136, %c0_137], %307 {strides = array<i32>} : memref<2x128xf32, #tpu.memory_space<vmem>>, vector<2x128xf32>,
      %310 = arith.truncf %307 : vector<2x128xf32> to vector<2x128xbf16>
      %c7_138 = arith.constant 7 : index
      %c0_139 = arith.constant 0 : index
      %c0_140 = arith.constant 0 : index
      %311 = vector.load %arg4[%c7_138, %c0_139, %c0_140] : memref<8x2x128xbf16, #tpu.memory_space<vmem>>, vector<1x2x128xbf16>
      %312 = vector.shape_cast %311 : vector<1x2x128xbf16> to vector<2x128xbf16>
      %313 = vector.shape_cast %310 : vector<2x128xbf16> to vector<1x2x128xbf16>
      tpu.vector_store %arg4[%c7_138, %c0_139, %c0_140], %313 {strides = array<i32>} : memref<8x2x128xbf16, #tpu.memory_space<vmem>>, vector<1x2x128xbf16>,
    } else {
    }
    %c1_i32 = arith.constant 1 : i32
    %7 = arith.cmpi eq, %arg0, %c1_i32 : i32
    %8 = arith.extui %7 : i1 to i32
    %c0_i32_4 = arith.constant 0 : i32
    %9 = arith.cmpi ne, %8, %c0_i32_4 : i32
    scf.if %9 {
      %c7 = arith.constant 7 : index
      %c0_5 = arith.constant 0 : index
      %c0_6 = arith.constant 0 : index
      %10 = vector.load %arg2[%c7, %c0_5, %c0_6] : memref<8x2x512xf32, #tpu.memory_space<vmem>>, vector<1x2x512xf32>
      %11 = vector.shape_cast %10 : vector<1x2x512xf32> to vector<2x512xf32>
      %c0_7 = arith.constant 0 : index
      %c0_8 = arith.constant 0 : index
      %12 = vector.load %arg5[%c0_7, %c0_8] : memref<2x128xf32, #tpu.memory_space<vmem>>, vector<2x128xf32>
      %13 = arith.truncf %12 : vector<2x128xf32> to vector<2x128xbf16>
      %cst = arith.constant dense<0.000000e+00> : vector<2x512xf32>
      %14 = tpu.matmul %13, %3, %cst {dimension_numbers = #tpu.dot_dimension_numbers<[1], [0], [0], [1], [0, 0, 1, 1], [], []>} : vector<2x128xbf16>, vector<128x512xbf16>, vector<2x512xf32> -> vector<2x512xf32>
      %15 = arith.addf %11, %14 : vector<2x512xf32>
      %16 = vector.extract_strided_slice %15 {offsets = [0, 0], sizes = [2, 128], strides = [1, 1]} : vector<2x512xf32> to vector<2x128xf32>
      %17 = arith.negf %16 : vector<2x128xf32>
      %18 = math.exp %17 : vector<2x128xf32>
      %cst_9 = arith.constant 1.000000e+00 : f32
      %19 = vector.broadcast %cst_9 : f32 to vector<2x128xf32>
      %20 = arith.addf %19, %18 : vector<2x128xf32>
      %21 = arith.divf %19, %20 : vector<2x128xf32>
      %22 = vector.extract_strided_slice %15 {offsets = [0, 128], sizes = [2, 128], strides = [1, 1]} : vector<2x512xf32> to vector<2x128xf32>
      %23 = arith.negf %22 : vector<2x128xf32>
      %24 = math.exp %23 : vector<2x128xf32>
      %cst_10 = arith.constant 1.000000e+00 : f32
      %25 = vector.broadcast %cst_10 : f32 to vector<2x128xf32>
      %26 = arith.addf %25, %24 : vector<2x128xf32>
      %27 = arith.divf %25, %26 : vector<2x128xf32>
      %28 = vector.extract_strided_slice %15 {offsets = [0, 256], sizes = [2, 128], strides = [1, 1]} : vector<2x512xf32> to vector<2x128xf32>
      %29 = math.tanh %28 : vector<2x128xf32>
      %30 = vector.extract_strided_slice %15 {offsets = [0, 384], sizes = [2, 128], strides = [1, 1]} : vector<2x512xf32> to vector<2x128xf32>
      %31 = arith.negf %30 : vector<2x128xf32>
      %32 = math.exp %31 : vector<2x128xf32>
      %cst_11 = arith.constant 1.000000e+00 : f32
      %33 = vector.broadcast %cst_11 : f32 to vector<2x128xf32>
      %34 = arith.addf %33, %32 : vector<2x128xf32>
      %35 = arith.divf %33, %34 : vector<2x128xf32>
      %c0_12 = arith.constant 0 : index
      %c0_13 = arith.constant 0 : index
      %36 = vector.load %arg6[%c0_12, %c0_13] : memref<2x128xf32, #tpu.memory_space<vmem>>, vector<2x128xf32>
      %37 = arith.mulf %27, %36 : vector<2x128xf32>
      %38 = arith.mulf %21, %29 : vector<2x128xf32>
      %39 = arith.addf %37, %38 : vector<2x128xf32>
      %40 = math.tanh %39 : vector<2x128xf32>
      %41 = arith.mulf %35, %40 : vector<2x128xf32>
      %c0_14 = arith.constant 0 : index
      %c0_15 = arith.constant 0 : index
      %42 = vector.load %arg6[%c0_14, %c0_15] : memref<2x128xf32, #tpu.memory_space<vmem>>, vector<2x128xf32>
      tpu.vector_store %arg6[%c0_14, %c0_15], %39 {strides = array<i32>} : memref<2x128xf32, #tpu.memory_space<vmem>>, vector<2x128xf32>,
      %c0_16 = arith.constant 0 : index
      %c0_17 = arith.constant 0 : index
      %43 = vector.load %arg5[%c0_16, %c0_17] : memref<2x128xf32, #tpu.memory_space<vmem>>, vector<2x128xf32>
      tpu.vector_store %arg5[%c0_16, %c0_17], %41 {strides = array<i32>} : memref<2x128xf32, #tpu.memory_space<vmem>>, vector<2x128xf32>,
      %44 = arith.truncf %41 : vector<2x128xf32> to vector<2x128xbf16>
      %c7_18 = arith.constant 7 : index
      %c0_19 = arith.constant 0 : index
      %c0_20 = arith.constant 0 : index
      %45 = vector.load %arg4[%c7_18, %c0_19, %c0_20] : memref<8x2x128xbf16, #tpu.memory_space<vmem>>, vector<1x2x128xbf16>
      %46 = vector.shape_cast %45 : vector<1x2x128xbf16> to vector<2x128xbf16>
      %47 = vector.shape_cast %44 : vector<2x128xbf16> to vector<1x2x128xbf16>
      tpu.vector_store %arg4[%c7_18, %c0_19, %c0_20], %47 {strides = array<i32>} : memref<8x2x128xbf16, #tpu.memory_space<vmem>>, vector<1x2x128xbf16>,
      %c6 = arith.constant 6 : index
      %c0_21 = arith.constant 0 : index
      %c0_22 = arith.constant 0 : index
      %48 = vector.load %arg2[%c6, %c0_21, %c0_22] : memref<8x2x512xf32, #tpu.memory_space<vmem>>, vector<1x2x512xf32>
      %49 = vector.shape_cast %48 : vector<1x2x512xf32> to vector<2x512xf32>
      %c0_23 = arith.constant 0 : index
      %c0_24 = arith.constant 0 : index
      %50 = vector.load %arg5[%c0_23, %c0_24] : memref<2x128xf32, #tpu.memory_space<vmem>>, vector<2x128xf32>
      %51 = arith.truncf %50 : vector<2x128xf32> to vector<2x128xbf16>
      %cst_25 = arith.constant dense<0.000000e+00> : vector<2x512xf32>
      %52 = tpu.matmul %51, %3, %cst_25 {dimension_numbers = #tpu.dot_dimension_numbers<[1], [0], [0], [1], [0, 0, 1, 1], [], []>} : vector<2x128xbf16>, vector<128x512xbf16>, vector<2x512xf32> -> vector<2x512xf32>
      %53 = arith.addf %49, %52 : vector<2x512xf32>
      %54 = vector.extract_strided_slice %53 {offsets = [0, 0], sizes = [2, 128], strides = [1, 1]} : vector<2x512xf32> to vector<2x128xf32>
      %55 = arith.negf %54 : vector<2x128xf32>
      %56 = math.exp %55 : vector<2x128xf32>
      %cst_26 = arith.constant 1.000000e+00 : f32
      %57 = vector.broadcast %cst_26 : f32 to vector<2x128xf32>
      %58 = arith.addf %57, %56 : vector<2x128xf32>
      %59 = arith.divf %57, %58 : vector<2x128xf32>
      %60 = vector.extract_strided_slice %53 {offsets = [0, 128], sizes = [2, 128], strides = [1, 1]} : vector<2x512xf32> to vector<2x128xf32>
      %61 = arith.negf %60 : vector<2x128xf32>
      %62 = math.exp %61 : vector<2x128xf32>
      %cst_27 = arith.constant 1.000000e+00 : f32
      %63 = vector.broadcast %cst_27 : f32 to vector<2x128xf32>
      %64 = arith.addf %63, %62 : vector<2x128xf32>
      %65 = arith.divf %63, %64 : vector<2x128xf32>
      %66 = vector.extract_strided_slice %53 {offsets = [0, 256], sizes = [2, 128], strides = [1, 1]} : vector<2x512xf32> to vector<2x128xf32>
      %67 = math.tanh %66 : vector<2x128xf32>
      %68 = vector.extract_strided_slice %53 {offsets = [0, 384], sizes = [2, 128], strides = [1, 1]} : vector<2x512xf32> to vector<2x128xf32>
      %69 = arith.negf %68 : vector<2x128xf32>
      %70 = math.exp %69 : vector<2x128xf32>
      %cst_28 = arith.constant 1.000000e+00 : f32
      %71 = vector.broadcast %cst_28 : f32 to vector<2x128xf32>
      %72 = arith.addf %71, %70 : vector<2x128xf32>
      %73 = arith.divf %71, %72 : vector<2x128xf32>
      %c0_29 = arith.constant 0 : index
      %c0_30 = arith.constant 0 : index
      %74 = vector.load %arg6[%c0_29, %c0_30] : memref<2x128xf32, #tpu.memory_space<vmem>>, vector<2x128xf32>
      %75 = arith.mulf %65, %74 : vector<2x128xf32>
      %76 = arith.mulf %59, %67 : vector<2x128xf32>
      %77 = arith.addf %75, %76 : vector<2x128xf32>
      %78 = math.tanh %77 : vector<2x128xf32>
      %79 = arith.mulf %73, %78 : vector<2x128xf32>
      %c0_31 = arith.constant 0 : index
      %c0_32 = arith.constant 0 : index
      %80 = vector.load %arg6[%c0_31, %c0_32] : memref<2x128xf32, #tpu.memory_space<vmem>>, vector<2x128xf32>
      tpu.vector_store %arg6[%c0_31, %c0_32], %77 {strides = array<i32>} : memref<2x128xf32, #tpu.memory_space<vmem>>, vector<2x128xf32>,
      %c0_33 = arith.constant 0 : index
      %c0_34 = arith.constant 0 : index
      %81 = vector.load %arg5[%c0_33, %c0_34] : memref<2x128xf32, #tpu.memory_space<vmem>>, vector<2x128xf32>
      tpu.vector_store %arg5[%c0_33, %c0_34], %79 {strides = array<i32>} : memref<2x128xf32, #tpu.memory_space<vmem>>, vector<2x128xf32>,
      %82 = arith.truncf %79 : vector<2x128xf32> to vector<2x128xbf16>
      %c6_35 = arith.constant 6 : index
      %c0_36 = arith.constant 0 : index
      %c0_37 = arith.constant 0 : index
      %83 = vector.load %arg4[%c6_35, %c0_36, %c0_37] : memref<8x2x128xbf16, #tpu.memory_space<vmem>>, vector<1x2x128xbf16>
      %84 = vector.shape_cast %83 : vector<1x2x128xbf16> to vector<2x128xbf16>
      %85 = vector.shape_cast %82 : vector<2x128xbf16> to vector<1x2x128xbf16>
      tpu.vector_store %arg4[%c6_35, %c0_36, %c0_37], %85 {strides = array<i32>} : memref<8x2x128xbf16, #tpu.memory_space<vmem>>, vector<1x2x128xbf16>,
      %c5 = arith.constant 5 : index
      %c0_38 = arith.constant 0 : index
      %c0_39 = arith.constant 0 : index
      %86 = vector.load %arg2[%c5, %c0_38, %c0_39] : memref<8x2x512xf32, #tpu.memory_space<vmem>>, vector<1x2x512xf32>
      %87 = vector.shape_cast %86 : vector<1x2x512xf32> to vector<2x512xf32>
      %c0_40 = arith.constant 0 : index
      %c0_41 = arith.constant 0 : index
      %88 = vector.load %arg5[%c0_40, %c0_41] : memref<2x128xf32, #tpu.memory_space<vmem>>, vector<2x128xf32>
      %89 = arith.truncf %88 : vector<2x128xf32> to vector<2x128xbf16>
      %cst_42 = arith.constant dense<0.000000e+00> : vector<2x512xf32>
      %90 = tpu.matmul %89, %3, %cst_42 {dimension_numbers = #tpu.dot_dimension_numbers<[1], [0], [0], [1], [0, 0, 1, 1], [], []>} : vector<2x128xbf16>, vector<128x512xbf16>, vector<2x512xf32> -> vector<2x512xf32>
      %91 = arith.addf %87, %90 : vector<2x512xf32>
      %92 = vector.extract_strided_slice %91 {offsets = [0, 0], sizes = [2, 128], strides = [1, 1]} : vector<2x512xf32> to vector<2x128xf32>
      %93 = arith.negf %92 : vector<2x128xf32>
      %94 = math.exp %93 : vector<2x128xf32>
      %cst_43 = arith.constant 1.000000e+00 : f32
      %95 = vector.broadcast %cst_43 : f32 to vector<2x128xf32>
      %96 = arith.addf %95, %94 : vector<2x128xf32>
      %97 = arith.divf %95, %96 : vector<2x128xf32>
      %98 = vector.extract_strided_slice %91 {offsets = [0, 128], sizes = [2, 128], strides = [1, 1]} : vector<2x512xf32> to vector<2x128xf32>
      %99 = arith.negf %98 : vector<2x128xf32>
      %100 = math.exp %99 : vector<2x128xf32>
      %cst_44 = arith.constant 1.000000e+00 : f32
      %101 = vector.broadcast %cst_44 : f32 to vector<2x128xf32>
      %102 = arith.addf %101, %100 : vector<2x128xf32>
      %103 = arith.divf %101, %102 : vector<2x128xf32>
      %104 = vector.extract_strided_slice %91 {offsets = [0, 256], sizes = [2, 128], strides = [1, 1]} : vector<2x512xf32> to vector<2x128xf32>
      %105 = math.tanh %104 : vector<2x128xf32>
      %106 = vector.extract_strided_slice %91 {offsets = [0, 384], sizes = [2, 128], strides = [1, 1]} : vector<2x512xf32> to vector<2x128xf32>
      %107 = arith.negf %106 : vector<2x128xf32>
      %108 = math.exp %107 : vector<2x128xf32>
      %cst_45 = arith.constant 1.000000e+00 : f32
      %109 = vector.broadcast %cst_45 : f32 to vector<2x128xf32>
      %110 = arith.addf %109, %108 : vector<2x128xf32>
      %111 = arith.divf %109, %110 : vector<2x128xf32>
      %c0_46 = arith.constant 0 : index
      %c0_47 = arith.constant 0 : index
      %112 = vector.load %arg6[%c0_46, %c0_47] : memref<2x128xf32, #tpu.memory_space<vmem>>, vector<2x128xf32>
      %113 = arith.mulf %103, %112 : vector<2x128xf32>
      %114 = arith.mulf %97, %105 : vector<2x128xf32>
      %115 = arith.addf %113, %114 : vector<2x128xf32>
      %116 = math.tanh %115 : vector<2x128xf32>
      %117 = arith.mulf %111, %116 : vector<2x128xf32>
      %c0_48 = arith.constant 0 : index
      %c0_49 = arith.constant 0 : index
      %118 = vector.load %arg6[%c0_48, %c0_49] : memref<2x128xf32, #tpu.memory_space<vmem>>, vector<2x128xf32>
      tpu.vector_store %arg6[%c0_48, %c0_49], %115 {strides = array<i32>} : memref<2x128xf32, #tpu.memory_space<vmem>>, vector<2x128xf32>,
      %c0_50 = arith.constant 0 : index
      %c0_51 = arith.constant 0 : index
      %119 = vector.load %arg5[%c0_50, %c0_51] : memref<2x128xf32, #tpu.memory_space<vmem>>, vector<2x128xf32>
      tpu.vector_store %arg5[%c0_50, %c0_51], %117 {strides = array<i32>} : memref<2x128xf32, #tpu.memory_space<vmem>>, vector<2x128xf32>,
      %120 = arith.truncf %117 : vector<2x128xf32> to vector<2x128xbf16>
      %c5_52 = arith.constant 5 : index
      %c0_53 = arith.constant 0 : index
      %c0_54 = arith.constant 0 : index
      %121 = vector.load %arg4[%c5_52, %c0_53, %c0_54] : memref<8x2x128xbf16, #tpu.memory_space<vmem>>, vector<1x2x128xbf16>
      %122 = vector.shape_cast %121 : vector<1x2x128xbf16> to vector<2x128xbf16>
      %123 = vector.shape_cast %120 : vector<2x128xbf16> to vector<1x2x128xbf16>
      tpu.vector_store %arg4[%c5_52, %c0_53, %c0_54], %123 {strides = array<i32>} : memref<8x2x128xbf16, #tpu.memory_space<vmem>>, vector<1x2x128xbf16>,
      %c4 = arith.constant 4 : index
      %c0_55 = arith.constant 0 : index
      %c0_56 = arith.constant 0 : index
      %124 = vector.load %arg2[%c4, %c0_55, %c0_56] : memref<8x2x512xf32, #tpu.memory_space<vmem>>, vector<1x2x512xf32>
      %125 = vector.shape_cast %124 : vector<1x2x512xf32> to vector<2x512xf32>
      %c0_57 = arith.constant 0 : index
      %c0_58 = arith.constant 0 : index
      %126 = vector.load %arg5[%c0_57, %c0_58] : memref<2x128xf32, #tpu.memory_space<vmem>>, vector<2x128xf32>
      %127 = arith.truncf %126 : vector<2x128xf32> to vector<2x128xbf16>
      %cst_59 = arith.constant dense<0.000000e+00> : vector<2x512xf32>
      %128 = tpu.matmul %127, %3, %cst_59 {dimension_numbers = #tpu.dot_dimension_numbers<[1], [0], [0], [1], [0, 0, 1, 1], [], []>} : vector<2x128xbf16>, vector<128x512xbf16>, vector<2x512xf32> -> vector<2x512xf32>
      %129 = arith.addf %125, %128 : vector<2x512xf32>
      %130 = vector.extract_strided_slice %129 {offsets = [0, 0], sizes = [2, 128], strides = [1, 1]} : vector<2x512xf32> to vector<2x128xf32>
      %131 = arith.negf %130 : vector<2x128xf32>
      %132 = math.exp %131 : vector<2x128xf32>
      %cst_60 = arith.constant 1.000000e+00 : f32
      %133 = vector.broadcast %cst_60 : f32 to vector<2x128xf32>
      %134 = arith.addf %133, %132 : vector<2x128xf32>
      %135 = arith.divf %133, %134 : vector<2x128xf32>
      %136 = vector.extract_strided_slice %129 {offsets = [0, 128], sizes = [2, 128], strides = [1, 1]} : vector<2x512xf32> to vector<2x128xf32>
      %137 = arith.negf %136 : vector<2x128xf32>
      %138 = math.exp %137 : vector<2x128xf32>
      %cst_61 = arith.constant 1.000000e+00 : f32
      %139 = vector.broadcast %cst_61 : f32 to vector<2x128xf32>
      %140 = arith.addf %139, %138 : vector<2x128xf32>
      %141 = arith.divf %139, %140 : vector<2x128xf32>
      %142 = vector.extract_strided_slice %129 {offsets = [0, 256], sizes = [2, 128], strides = [1, 1]} : vector<2x512xf32> to vector<2x128xf32>
      %143 = math.tanh %142 : vector<2x128xf32>
      %144 = vector.extract_strided_slice %129 {offsets = [0, 384], sizes = [2, 128], strides = [1, 1]} : vector<2x512xf32> to vector<2x128xf32>
      %145 = arith.negf %144 : vector<2x128xf32>
      %146 = math.exp %145 : vector<2x128xf32>
      %cst_62 = arith.constant 1.000000e+00 : f32
      %147 = vector.broadcast %cst_62 : f32 to vector<2x128xf32>
      %148 = arith.addf %147, %146 : vector<2x128xf32>
      %149 = arith.divf %147, %148 : vector<2x128xf32>
      %c0_63 = arith.constant 0 : index
      %c0_64 = arith.constant 0 : index
      %150 = vector.load %arg6[%c0_63, %c0_64] : memref<2x128xf32, #tpu.memory_space<vmem>>, vector<2x128xf32>
      %151 = arith.mulf %141, %150 : vector<2x128xf32>
      %152 = arith.mulf %135, %143 : vector<2x128xf32>
      %153 = arith.addf %151, %152 : vector<2x128xf32>
      %154 = math.tanh %153 : vector<2x128xf32>
      %155 = arith.mulf %149, %154 : vector<2x128xf32>
      %c0_65 = arith.constant 0 : index
      %c0_66 = arith.constant 0 : index
      %156 = vector.load %arg6[%c0_65, %c0_66] : memref<2x128xf32, #tpu.memory_space<vmem>>, vector<2x128xf32>
      tpu.vector_store %arg6[%c0_65, %c0_66], %153 {strides = array<i32>} : memref<2x128xf32, #tpu.memory_space<vmem>>, vector<2x128xf32>,
      %c0_67 = arith.constant 0 : index
      %c0_68 = arith.constant 0 : index
      %157 = vector.load %arg5[%c0_67, %c0_68] : memref<2x128xf32, #tpu.memory_space<vmem>>, vector<2x128xf32>
      tpu.vector_store %arg5[%c0_67, %c0_68], %155 {strides = array<i32>} : memref<2x128xf32, #tpu.memory_space<vmem>>, vector<2x128xf32>,
      %158 = arith.truncf %155 : vector<2x128xf32> to vector<2x128xbf16>
      %c4_69 = arith.constant 4 : index
      %c0_70 = arith.constant 0 : index
      %c0_71 = arith.constant 0 : index
      %159 = vector.load %arg4[%c4_69, %c0_70, %c0_71] : memref<8x2x128xbf16, #tpu.memory_space<vmem>>, vector<1x2x128xbf16>
      %160 = vector.shape_cast %159 : vector<1x2x128xbf16> to vector<2x128xbf16>
      %161 = vector.shape_cast %158 : vector<2x128xbf16> to vector<1x2x128xbf16>
      tpu.vector_store %arg4[%c4_69, %c0_70, %c0_71], %161 {strides = array<i32>} : memref<8x2x128xbf16, #tpu.memory_space<vmem>>, vector<1x2x128xbf16>,
      %c3 = arith.constant 3 : index
      %c0_72 = arith.constant 0 : index
      %c0_73 = arith.constant 0 : index
      %162 = vector.load %arg2[%c3, %c0_72, %c0_73] : memref<8x2x512xf32, #tpu.memory_space<vmem>>, vector<1x2x512xf32>
      %163 = vector.shape_cast %162 : vector<1x2x512xf32> to vector<2x512xf32>
      %c0_74 = arith.constant 0 : index
      %c0_75 = arith.constant 0 : index
      %164 = vector.load %arg5[%c0_74, %c0_75] : memref<2x128xf32, #tpu.memory_space<vmem>>, vector<2x128xf32>
      %165 = arith.truncf %164 : vector<2x128xf32> to vector<2x128xbf16>
      %cst_76 = arith.constant dense<0.000000e+00> : vector<2x512xf32>
      %166 = tpu.matmul %165, %3, %cst_76 {dimension_numbers = #tpu.dot_dimension_numbers<[1], [0], [0], [1], [0, 0, 1, 1], [], []>} : vector<2x128xbf16>, vector<128x512xbf16>, vector<2x512xf32> -> vector<2x512xf32>
      %167 = arith.addf %163, %166 : vector<2x512xf32>
      %168 = vector.extract_strided_slice %167 {offsets = [0, 0], sizes = [2, 128], strides = [1, 1]} : vector<2x512xf32> to vector<2x128xf32>
      %169 = arith.negf %168 : vector<2x128xf32>
      %170 = math.exp %169 : vector<2x128xf32>
      %cst_77 = arith.constant 1.000000e+00 : f32
      %171 = vector.broadcast %cst_77 : f32 to vector<2x128xf32>
      %172 = arith.addf %171, %170 : vector<2x128xf32>
      %173 = arith.divf %171, %172 : vector<2x128xf32>
      %174 = vector.extract_strided_slice %167 {offsets = [0, 128], sizes = [2, 128], strides = [1, 1]} : vector<2x512xf32> to vector<2x128xf32>
      %175 = arith.negf %174 : vector<2x128xf32>
      %176 = math.exp %175 : vector<2x128xf32>
      %cst_78 = arith.constant 1.000000e+00 : f32
      %177 = vector.broadcast %cst_78 : f32 to vector<2x128xf32>
      %178 = arith.addf %177, %176 : vector<2x128xf32>
      %179 = arith.divf %177, %178 : vector<2x128xf32>
      %180 = vector.extract_strided_slice %167 {offsets = [0, 256], sizes = [2, 128], strides = [1, 1]} : vector<2x512xf32> to vector<2x128xf32>
      %181 = math.tanh %180 : vector<2x128xf32>
      %182 = vector.extract_strided_slice %167 {offsets = [0, 384], sizes = [2, 128], strides = [1, 1]} : vector<2x512xf32> to vector<2x128xf32>
      %183 = arith.negf %182 : vector<2x128xf32>
      %184 = math.exp %183 : vector<2x128xf32>
      %cst_79 = arith.constant 1.000000e+00 : f32
      %185 = vector.broadcast %cst_79 : f32 to vector<2x128xf32>
      %186 = arith.addf %185, %184 : vector<2x128xf32>
      %187 = arith.divf %185, %186 : vector<2x128xf32>
      %c0_80 = arith.constant 0 : index
      %c0_81 = arith.constant 0 : index
      %188 = vector.load %arg6[%c0_80, %c0_81] : memref<2x128xf32, #tpu.memory_space<vmem>>, vector<2x128xf32>
      %189 = arith.mulf %179, %188 : vector<2x128xf32>
      %190 = arith.mulf %173, %181 : vector<2x128xf32>
      %191 = arith.addf %189, %190 : vector<2x128xf32>
      %192 = math.tanh %191 : vector<2x128xf32>
      %193 = arith.mulf %187, %192 : vector<2x128xf32>
      %c0_82 = arith.constant 0 : index
      %c0_83 = arith.constant 0 : index
      %194 = vector.load %arg6[%c0_82, %c0_83] : memref<2x128xf32, #tpu.memory_space<vmem>>, vector<2x128xf32>
      tpu.vector_store %arg6[%c0_82, %c0_83], %191 {strides = array<i32>} : memref<2x128xf32, #tpu.memory_space<vmem>>, vector<2x128xf32>,
      %c0_84 = arith.constant 0 : index
      %c0_85 = arith.constant 0 : index
      %195 = vector.load %arg5[%c0_84, %c0_85] : memref<2x128xf32, #tpu.memory_space<vmem>>, vector<2x128xf32>
      tpu.vector_store %arg5[%c0_84, %c0_85], %193 {strides = array<i32>} : memref<2x128xf32, #tpu.memory_space<vmem>>, vector<2x128xf32>,
      %196 = arith.truncf %193 : vector<2x128xf32> to vector<2x128xbf16>
      %c3_86 = arith.constant 3 : index
      %c0_87 = arith.constant 0 : index
      %c0_88 = arith.constant 0 : index
      %197 = vector.load %arg4[%c3_86, %c0_87, %c0_88] : memref<8x2x128xbf16, #tpu.memory_space<vmem>>, vector<1x2x128xbf16>
      %198 = vector.shape_cast %197 : vector<1x2x128xbf16> to vector<2x128xbf16>
      %199 = vector.shape_cast %196 : vector<2x128xbf16> to vector<1x2x128xbf16>
      tpu.vector_store %arg4[%c3_86, %c0_87, %c0_88], %199 {strides = array<i32>} : memref<8x2x128xbf16, #tpu.memory_space<vmem>>, vector<1x2x128xbf16>,
      %c2 = arith.constant 2 : index
      %c0_89 = arith.constant 0 : index
      %c0_90 = arith.constant 0 : index
      %200 = vector.load %arg2[%c2, %c0_89, %c0_90] : memref<8x2x512xf32, #tpu.memory_space<vmem>>, vector<1x2x512xf32>
      %201 = vector.shape_cast %200 : vector<1x2x512xf32> to vector<2x512xf32>
      %c0_91 = arith.constant 0 : index
      %c0_92 = arith.constant 0 : index
      %202 = vector.load %arg5[%c0_91, %c0_92] : memref<2x128xf32, #tpu.memory_space<vmem>>, vector<2x128xf32>
      %203 = arith.truncf %202 : vector<2x128xf32> to vector<2x128xbf16>
      %cst_93 = arith.constant dense<0.000000e+00> : vector<2x512xf32>
      %204 = tpu.matmul %203, %3, %cst_93 {dimension_numbers = #tpu.dot_dimension_numbers<[1], [0], [0], [1], [0, 0, 1, 1], [], []>} : vector<2x128xbf16>, vector<128x512xbf16>, vector<2x512xf32> -> vector<2x512xf32>
      %205 = arith.addf %201, %204 : vector<2x512xf32>
      %206 = vector.extract_strided_slice %205 {offsets = [0, 0], sizes = [2, 128], strides = [1, 1]} : vector<2x512xf32> to vector<2x128xf32>
      %207 = arith.negf %206 : vector<2x128xf32>
      %208 = math.exp %207 : vector<2x128xf32>
      %cst_94 = arith.constant 1.000000e+00 : f32
      %209 = vector.broadcast %cst_94 : f32 to vector<2x128xf32>
      %210 = arith.addf %209, %208 : vector<2x128xf32>
      %211 = arith.divf %209, %210 : vector<2x128xf32>
      %212 = vector.extract_strided_slice %205 {offsets = [0, 128], sizes = [2, 128], strides = [1, 1]} : vector<2x512xf32> to vector<2x128xf32>
      %213 = arith.negf %212 : vector<2x128xf32>
      %214 = math.exp %213 : vector<2x128xf32>
      %cst_95 = arith.constant 1.000000e+00 : f32
      %215 = vector.broadcast %cst_95 : f32 to vector<2x128xf32>
      %216 = arith.addf %215, %214 : vector<2x128xf32>
      %217 = arith.divf %215, %216 : vector<2x128xf32>
      %218 = vector.extract_strided_slice %205 {offsets = [0, 256], sizes = [2, 128], strides = [1, 1]} : vector<2x512xf32> to vector<2x128xf32>
      %219 = math.tanh %218 : vector<2x128xf32>
      %220 = vector.extract_strided_slice %205 {offsets = [0, 384], sizes = [2, 128], strides = [1, 1]} : vector<2x512xf32> to vector<2x128xf32>
      %221 = arith.negf %220 : vector<2x128xf32>
      %222 = math.exp %221 : vector<2x128xf32>
      %cst_96 = arith.constant 1.000000e+00 : f32
      %223 = vector.broadcast %cst_96 : f32 to vector<2x128xf32>
      %224 = arith.addf %223, %222 : vector<2x128xf32>
      %225 = arith.divf %223, %224 : vector<2x128xf32>
      %c0_97 = arith.constant 0 : index
      %c0_98 = arith.constant 0 : index
      %226 = vector.load %arg6[%c0_97, %c0_98] : memref<2x128xf32, #tpu.memory_space<vmem>>, vector<2x128xf32>
      %227 = arith.mulf %217, %226 : vector<2x128xf32>
      %228 = arith.mulf %211, %219 : vector<2x128xf32>
      %229 = arith.addf %227, %228 : vector<2x128xf32>
      %230 = math.tanh %229 : vector<2x128xf32>
      %231 = arith.mulf %225, %230 : vector<2x128xf32>
      %c0_99 = arith.constant 0 : index
      %c0_100 = arith.constant 0 : index
      %232 = vector.load %arg6[%c0_99, %c0_100] : memref<2x128xf32, #tpu.memory_space<vmem>>, vector<2x128xf32>
      tpu.vector_store %arg6[%c0_99, %c0_100], %229 {strides = array<i32>} : memref<2x128xf32, #tpu.memory_space<vmem>>, vector<2x128xf32>,
      %c0_101 = arith.constant 0 : index
      %c0_102 = arith.constant 0 : index
      %233 = vector.load %arg5[%c0_101, %c0_102] : memref<2x128xf32, #tpu.memory_space<vmem>>, vector<2x128xf32>
      tpu.vector_store %arg5[%c0_101, %c0_102], %231 {strides = array<i32>} : memref<2x128xf32, #tpu.memory_space<vmem>>, vector<2x128xf32>,
      %234 = arith.truncf %231 : vector<2x128xf32> to vector<2x128xbf16>
      %c2_103 = arith.constant 2 : index
      %c0_104 = arith.constant 0 : index
      %c0_105 = arith.constant 0 : index
      %235 = vector.load %arg4[%c2_103, %c0_104, %c0_105] : memref<8x2x128xbf16, #tpu.memory_space<vmem>>, vector<1x2x128xbf16>
      %236 = vector.shape_cast %235 : vector<1x2x128xbf16> to vector<2x128xbf16>
      %237 = vector.shape_cast %234 : vector<2x128xbf16> to vector<1x2x128xbf16>
      tpu.vector_store %arg4[%c2_103, %c0_104, %c0_105], %237 {strides = array<i32>} : memref<8x2x128xbf16, #tpu.memory_space<vmem>>, vector<1x2x128xbf16>,
      %c1 = arith.constant 1 : index
      %c0_106 = arith.constant 0 : index
      %c0_107 = arith.constant 0 : index
      %238 = vector.load %arg2[%c1, %c0_106, %c0_107] : memref<8x2x512xf32, #tpu.memory_space<vmem>>, vector<1x2x512xf32>
      %239 = vector.shape_cast %238 : vector<1x2x512xf32> to vector<2x512xf32>
      %c0_108 = arith.constant 0 : index
      %c0_109 = arith.constant 0 : index
      %240 = vector.load %arg5[%c0_108, %c0_109] : memref<2x128xf32, #tpu.memory_space<vmem>>, vector<2x128xf32>
      %241 = arith.truncf %240 : vector<2x128xf32> to vector<2x128xbf16>
      %cst_110 = arith.constant dense<0.000000e+00> : vector<2x512xf32>
      %242 = tpu.matmul %241, %3, %cst_110 {dimension_numbers = #tpu.dot_dimension_numbers<[1], [0], [0], [1], [0, 0, 1, 1], [], []>} : vector<2x128xbf16>, vector<128x512xbf16>, vector<2x512xf32> -> vector<2x512xf32>
      %243 = arith.addf %239, %242 : vector<2x512xf32>
      %244 = vector.extract_strided_slice %243 {offsets = [0, 0], sizes = [2, 128], strides = [1, 1]} : vector<2x512xf32> to vector<2x128xf32>
      %245 = arith.negf %244 : vector<2x128xf32>
      %246 = math.exp %245 : vector<2x128xf32>
      %cst_111 = arith.constant 1.000000e+00 : f32
      %247 = vector.broadcast %cst_111 : f32 to vector<2x128xf32>
      %248 = arith.addf %247, %246 : vector<2x128xf32>
      %249 = arith.divf %247, %248 : vector<2x128xf32>
      %250 = vector.extract_strided_slice %243 {offsets = [0, 128], sizes = [2, 128], strides = [1, 1]} : vector<2x512xf32> to vector<2x128xf32>
      %251 = arith.negf %250 : vector<2x128xf32>
      %252 = math.exp %251 : vector<2x128xf32>
      %cst_112 = arith.constant 1.000000e+00 : f32
      %253 = vector.broadcast %cst_112 : f32 to vector<2x128xf32>
      %254 = arith.addf %253, %252 : vector<2x128xf32>
      %255 = arith.divf %253, %254 : vector<2x128xf32>
      %256 = vector.extract_strided_slice %243 {offsets = [0, 256], sizes = [2, 128], strides = [1, 1]} : vector<2x512xf32> to vector<2x128xf32>
      %257 = math.tanh %256 : vector<2x128xf32>
      %258 = vector.extract_strided_slice %243 {offsets = [0, 384], sizes = [2, 128], strides = [1, 1]} : vector<2x512xf32> to vector<2x128xf32>
      %259 = arith.negf %258 : vector<2x128xf32>
      %260 = math.exp %259 : vector<2x128xf32>
      %cst_113 = arith.constant 1.000000e+00 : f32
      %261 = vector.broadcast %cst_113 : f32 to vector<2x128xf32>
      %262 = arith.addf %261, %260 : vector<2x128xf32>
      %263 = arith.divf %261, %262 : vector<2x128xf32>
      %c0_114 = arith.constant 0 : index
      %c0_115 = arith.constant 0 : index
      %264 = vector.load %arg6[%c0_114, %c0_115] : memref<2x128xf32, #tpu.memory_space<vmem>>, vector<2x128xf32>
      %265 = arith.mulf %255, %264 : vector<2x128xf32>
      %266 = arith.mulf %249, %257 : vector<2x128xf32>
      %267 = arith.addf %265, %266 : vector<2x128xf32>
      %268 = math.tanh %267 : vector<2x128xf32>
      %269 = arith.mulf %263, %268 : vector<2x128xf32>
      %c0_116 = arith.constant 0 : index
      %c0_117 = arith.constant 0 : index
      %270 = vector.load %arg6[%c0_116, %c0_117] : memref<2x128xf32, #tpu.memory_space<vmem>>, vector<2x128xf32>
      tpu.vector_store %arg6[%c0_116, %c0_117], %267 {strides = array<i32>} : memref<2x128xf32, #tpu.memory_space<vmem>>, vector<2x128xf32>,
      %c0_118 = arith.constant 0 : index
      %c0_119 = arith.constant 0 : index
      %271 = vector.load %arg5[%c0_118, %c0_119] : memref<2x128xf32, #tpu.memory_space<vmem>>, vector<2x128xf32>
      tpu.vector_store %arg5[%c0_118, %c0_119], %269 {strides = array<i32>} : memref<2x128xf32, #tpu.memory_space<vmem>>, vector<2x128xf32>,
      %272 = arith.truncf %269 : vector<2x128xf32> to vector<2x128xbf16>
      %c1_120 = arith.constant 1 : index
      %c0_121 = arith.constant 0 : index
      %c0_122 = arith.constant 0 : index
      %273 = vector.load %arg4[%c1_120, %c0_121, %c0_122] : memref<8x2x128xbf16, #tpu.memory_space<vmem>>, vector<1x2x128xbf16>
      %274 = vector.shape_cast %273 : vector<1x2x128xbf16> to vector<2x128xbf16>
      %275 = vector.shape_cast %272 : vector<2x128xbf16> to vector<1x2x128xbf16>
      tpu.vector_store %arg4[%c1_120, %c0_121, %c0_122], %275 {strides = array<i32>} : memref<8x2x128xbf16, #tpu.memory_space<vmem>>, vector<1x2x128xbf16>,
      %c0_123 = arith.constant 0 : index
      %c0_124 = arith.constant 0 : index
      %c0_125 = arith.constant 0 : index
      %276 = vector.load %arg2[%c0_123, %c0_124, %c0_125] : memref<8x2x512xf32, #tpu.memory_space<vmem>>, vector<1x2x512xf32>
      %277 = vector.shape_cast %276 : vector<1x2x512xf32> to vector<2x512xf32>
      %c0_126 = arith.constant 0 : index
      %c0_127 = arith.constant 0 : index
      %278 = vector.load %arg5[%c0_126, %c0_127] : memref<2x128xf32, #tpu.memory_space<vmem>>, vector<2x128xf32>
      %279 = arith.truncf %278 : vector<2x128xf32> to vector<2x128xbf16>
      %cst_128 = arith.constant dense<0.000000e+00> : vector<2x512xf32>
      %280 = tpu.matmul %279, %3, %cst_128 {dimension_numbers = #tpu.dot_dimension_numbers<[1], [0], [0], [1], [0, 0, 1, 1], [], []>} : vector<2x128xbf16>, vector<128x512xbf16>, vector<2x512xf32> -> vector<2x512xf32>
      %281 = arith.addf %277, %280 : vector<2x512xf32>
      %282 = vector.extract_strided_slice %281 {offsets = [0, 0], sizes = [2, 128], strides = [1, 1]} : vector<2x512xf32> to vector<2x128xf32>
      %283 = arith.negf %282 : vector<2x128xf32>
      %284 = math.exp %283 : vector<2x128xf32>
      %cst_129 = arith.constant 1.000000e+00 : f32
      %285 = vector.broadcast %cst_129 : f32 to vector<2x128xf32>
      %286 = arith.addf %285, %284 : vector<2x128xf32>
      %287 = arith.divf %285, %286 : vector<2x128xf32>
      %288 = vector.extract_strided_slice %281 {offsets = [0, 128], sizes = [2, 128], strides = [1, 1]} : vector<2x512xf32> to vector<2x128xf32>
      %289 = arith.negf %288 : vector<2x128xf32>
      %290 = math.exp %289 : vector<2x128xf32>
      %cst_130 = arith.constant 1.000000e+00 : f32
      %291 = vector.broadcast %cst_130 : f32 to vector<2x128xf32>
      %292 = arith.addf %291, %290 : vector<2x128xf32>
      %293 = arith.divf %291, %292 : vector<2x128xf32>
      %294 = vector.extract_strided_slice %281 {offsets = [0, 256], sizes = [2, 128], strides = [1, 1]} : vector<2x512xf32> to vector<2x128xf32>
      %295 = math.tanh %294 : vector<2x128xf32>
      %296 = vector.extract_strided_slice %281 {offsets = [0, 384], sizes = [2, 128], strides = [1, 1]} : vector<2x512xf32> to vector<2x128xf32>
      %297 = arith.negf %296 : vector<2x128xf32>
      %298 = math.exp %297 : vector<2x128xf32>
      %cst_131 = arith.constant 1.000000e+00 : f32
      %299 = vector.broadcast %cst_131 : f32 to vector<2x128xf32>
      %300 = arith.addf %299, %298 : vector<2x128xf32>
      %301 = arith.divf %299, %300 : vector<2x128xf32>
      %c0_132 = arith.constant 0 : index
      %c0_133 = arith.constant 0 : index
      %302 = vector.load %arg6[%c0_132, %c0_133] : memref<2x128xf32, #tpu.memory_space<vmem>>, vector<2x128xf32>
      %303 = arith.mulf %293, %302 : vector<2x128xf32>
      %304 = arith.mulf %287, %295 : vector<2x128xf32>
      %305 = arith.addf %303, %304 : vector<2x128xf32>
      %306 = math.tanh %305 : vector<2x128xf32>
      %307 = arith.mulf %301, %306 : vector<2x128xf32>
      %c0_134 = arith.constant 0 : index
      %c0_135 = arith.constant 0 : index
      %308 = vector.load %arg6[%c0_134, %c0_135] : memref<2x128xf32, #tpu.memory_space<vmem>>, vector<2x128xf32>
      tpu.vector_store %arg6[%c0_134, %c0_135], %305 {strides = array<i32>} : memref<2x128xf32, #tpu.memory_space<vmem>>, vector<2x128xf32>,
      %c0_136 = arith.constant 0 : index
      %c0_137 = arith.constant 0 : index
      %309 = vector.load %arg5[%c0_136, %c0_137] : memref<2x128xf32, #tpu.memory_space<vmem>>, vector<2x128xf32>
      tpu.vector_store %arg5[%c0_136, %c0_137], %307 {strides = array<i32>} : memref<2x128xf32, #tpu.memory_space<vmem>>, vector<2x128xf32>,
      %310 = arith.truncf %307 : vector<2x128xf32> to vector<2x128xbf16>
      %c0_138 = arith.constant 0 : index
      %c0_139 = arith.constant 0 : index
      %c0_140 = arith.constant 0 : index
      %311 = vector.load %arg4[%c0_138, %c0_139, %c0_140] : memref<8x2x128xbf16, #tpu.memory_space<vmem>>, vector<1x2x128xbf16>
      %312 = vector.shape_cast %311 : vector<1x2x128xbf16> to vector<2x128xbf16>
      %313 = vector.shape_cast %310 : vector<2x128xbf16> to vector<1x2x128xbf16>
      tpu.vector_store %arg4[%c0_138, %c0_139, %c0_140], %313 {strides = array<i32>} : memref<8x2x128xbf16, #tpu.memory_space<vmem>>, vector<1x2x128xbf16>,
    } else {
    }
    return
  }
  func.func @transform_0(%arg0: i32, %arg1: i32) -> (i32, i32, i32) {
    %c2_i32 = arith.constant 2 : i32
    %0 = arith.muli %c2_i32, %arg1 : i32
    %c0_i32 = arith.constant 0 : i32
    %1 = arith.subi %c0_i32, %0 : i32
    %2 = arith.muli %arg0, %1 : i32
    %3 = arith.addi %arg1, %2 : i32
    %c0_i32_0 = arith.constant 0 : i32
    %c0_i32_1 = arith.constant 0 : i32
    return %3, %c0_i32_0, %arg0 : i32, i32, i32
  }
  func.func @transform_1(%arg0: i32, %arg1: i32) -> (i32, i32) {
    %c0_i32 = arith.constant 0 : i32
    %c0_i32_0 = arith.constant 0 : i32
    return %c0_i32, %arg0 : i32, i32
  }
  func.func @transform_2(%arg0: i32, %arg1: i32) -> (i32, i32, i32) {
    %c2_i32 = arith.constant 2 : i32
    %0 = arith.muli %c2_i32, %arg1 : i32
    %c0_i32 = arith.constant 0 : i32
    %1 = arith.subi %c0_i32, %0 : i32
    %2 = arith.muli %arg0, %1 : i32
    %3 = arith.addi %arg1, %2 : i32
    %c0_i32_0 = arith.constant 0 : i32
    %c0_i32_1 = arith.constant 0 : i32
    return %3, %c0_i32_0, %arg0 : i32, i32, i32
  }
}

module attributes {stable_mosaic.version = 11 : i64} {
  func.func @kernel(%arg0: i32, %arg1: i32, %arg2: memref<16x256xbf16, #tpu.memory_space<vmem>>, %arg3: memref<256x128xbf16, #tpu.memory_space<vmem>>, %arg4: memref<1x128xf32, #tpu.memory_space<vmem>>, %arg5: memref<16x128xf32, #tpu.memory_space<vmem>>) attributes {dimension_semantics = [#tpu.dimension_semantics<parallel>, #tpu.dimension_semantics<parallel>], iteration_bounds = array<i64: 1, 1>, scalar_prefetch = 0 : i64, scratch_operands = 0 : i64, tpu.core_type = #tpu.core_type<tc>, window_params = [{transform_indices = @transform_0, window_bounds = array<i64: 16, 256>}, {transform_indices = @transform_1, window_bounds = array<i64: 256, 128>}, {transform_indices = @transform_2, window_bounds = array<i64: 1, 128>}, {transform_indices = @transform_3, window_bounds = array<i64: 16, 128>}]} {
    %c0 = arith.constant 0 : index
    %c0_0 = arith.constant 0 : index
    %0 = vector.load %arg2[%c0, %c0_0] : memref<16x256xbf16, #tpu.memory_space<vmem>>, vector<16x256xbf16>
    %c0_1 = arith.constant 0 : index
    %c0_2 = arith.constant 0 : index
    %1 = vector.load %arg3[%c0_1, %c0_2] : memref<256x128xbf16, #tpu.memory_space<vmem>>, vector<256x128xbf16>
    %cst = arith.constant dense<0.000000e+00> : vector<16x128xf32>
    %2 = tpu.matmul %0, %1, %cst {dimension_numbers = #tpu.dot_dimension_numbers<[1], [0], [0], [1], [0, 0, 1, 1], [], []>} : vector<16x256xbf16>, vector<256x128xbf16>, vector<16x128xf32> -> vector<16x128xf32>
    %c0_3 = arith.constant 0 : index
    %c0_4 = arith.constant 0 : index
    %3 = vector.load %arg4[%c0_3, %c0_4] : memref<1x128xf32, #tpu.memory_space<vmem>>, vector<1x128xf32>
    %4 = vector.broadcast %3 : vector<1x128xf32> to vector<16x128xf32>
    %5 = arith.addf %2, %4 : vector<16x128xf32>
    %c0_5 = arith.constant 0 : index
    %c0_6 = arith.constant 0 : index
    %6 = vector.load %arg5[%c0_5, %c0_6] : memref<16x128xf32, #tpu.memory_space<vmem>>, vector<16x128xf32>
    tpu.vector_store %arg5[%c0_5, %c0_6], %5 {strides = array<i32>} : memref<16x128xf32, #tpu.memory_space<vmem>>, vector<16x128xf32>,
    return
  }
  func.func @transform_0(%arg0: i32, %arg1: i32) -> (i32, i32) {
    %c0_i32 = arith.constant 0 : i32
    %c0_i32_0 = arith.constant 0 : i32
    return %arg0, %c0_i32 : i32, i32
  }
  func.func @transform_1(%arg0: i32, %arg1: i32) -> (i32, i32) {
    %c0_i32 = arith.constant 0 : i32
    %c0_i32_0 = arith.constant 0 : i32
    return %c0_i32, %arg1 : i32, i32
  }
  func.func @transform_2(%arg0: i32, %arg1: i32) -> (i32, i32) {
    %c0_i32 = arith.constant 0 : i32
    %c0_i32_0 = arith.constant 0 : i32
    return %c0_i32, %arg1 : i32, i32
  }
  func.func @transform_3(%arg0: i32, %arg1: i32) -> (i32, i32) {
    %c0_i32 = arith.constant 0 : i32
    return %arg0, %arg1 : i32, i32
  }
}

</mosaic_0001>

<llo_original>
// kernel: bert_bilstm_forward.5
$region0: #{bert_bilstm_forward.5}
  #allocation0 [shape = 'u32[]', space=smem, size = 0x4, offset = 0x4, fixed_abs, tag = 'smem constant byte address 0x4 - core index']
  #allocation1 [shape = 'u32[72,128]{1,0:T(1,128)}', space=vmem, size = 0x9000, scoped, tag = 'internal scratch']
  %s0 = inlined_call_operand.vmem [shape: bf16[16,128], index: 0, kind: input, shape index: {}]
  %s1 = inlined_call_operand.vmem [shape: bf16[128,1024], index: 1, kind: input, shape index: {}]
  %s2 = inlined_call_operand.vmem [shape: f32[1,1024], index: 2, kind: input, shape index: {}]
  %s3 = inlined_call_operand.vmem [shape: f32[16,1024], index: 3, kind: output, shape index: {}]
  %s4 = sld [smem:[#allocation0]]
  $region102: #{bert_bilstm_forward.5} parent=0
    _
  %s6 = ssub.s32 1, %s4
  %s7 = scalar_select 0, %s6, %s4
  $region1: #{bert_bilstm_forward.5} parent=0
    #allocation2 [shape = 'u8[131072]{0}', space=vmem, size = 0x20000, scoped, tag = 'input window, operand 1']
    #allocation3 [shape = 'u8[32768]{0}', space=vmem, size = 0x8000, scoped, tag = 'output window, operand 0']
    loop: start=0, step=1, limit=6
    $region2: #{bert_bilstm_forward.5} parent=1 // loop_pre_header
      _
    $region3: #{bert_bilstm_forward.5} parent=1 // loop_header
      %s9 = sphi 0, %s13
      %p10 = scmp.ge.s32.totalorder %s9, 6
      %s16 = sphi 0, %s28
      %s17 = sphi 0, %s24
      %s18 = sphi 0, %s16
      %s19 = sphi 0, %s17
      %s20 = sphi 0, %s18
      %s21 = sphi 0, %s19
      %s31 = sphi 0, %s33
      %s34 = sphi 0, %s31
      %s35 = sphi 0, %s34
      %s51 = sphi 0, %s35
      %s57 = sphi 0, %s59
      %s60 = sphi 0, %s57
      %s61 = sphi 0, %s60
      %s77 = sphi 0, %s61
      %s83 = sphi 0, %s85
      %s86 = sphi 0, %s83
      %s87 = sphi 0, %s86
      %s103 = sphi 0, %s87
      %s111 = sphi 0, %s113
      %s114 = sphi 0, %s111
      %s115 = sphi 0, %s114
      %s131 = sphi 0, %s115
    $region4: #{bert_bilstm_forward.5} parent=1 // loop_header_branch
      %12 = sbr.rel (%p10) target = $region8
    $region5: #{bert_bilstm_forward.5} parent=1 // loop_body
      %s14 = ssub.s32 %s9, 1
      %s15 = ssub.s32 %s9, 2
      %s22 = sadd.s32 1, %s17
      %p23 = scmp.ge.s32.totalorder %s22, 4
      %s24 = scalar_select %p23, 0, %s22
      %s25 = sadd.s32 1, %s16
      %s26 = scalar_select %p23, %s25, %s16
      %p27 = scmp.ge.s32.totalorder %s26, 1
      %s28 = scalar_select %p27, 0, %s26
      %s29 = ssub.s32 %s16, %s28
      %p30 = scmp.eq.s32.totalorder %s29, 0
      %s32 = sadd.s32 %s31, 1
      %s33 = scalar_select %p30, %s31, %s32
      %p36 = pneg %p30
      %p37 = scmp.eq.s32.totalorder %s9, 3
      %p38 = por %p36, %p37
      %p39 = scmp.ne.s32.totalorder %s31, %s34
      %p40 = scmp.eq.s32.totalorder %s9, 0
      %p41 = por %p39, %p40
      %p42 = scmp.ne.s32.totalorder %s31, %s34
      %p43 = scmp.eq.s32.totalorder %s14, 3
      %p44 = por %p42, %p43
      %p45 = scmp.ne.s32.totalorder %s34, %s35
      %p46 = scmp.eq.s32.totalorder %s14, 0
      %p47 = por %p45, %p46
      %p48 = scmp.ne.s32.totalorder %s34, %s35
      %p49 = scmp.eq.s32.totalorder %s15, 3
      %p50 = por %p48, %p49
      %p52 = scmp.ne.s32.totalorder %s35, %s51
      %p53 = scmp.eq.s32.totalorder %s15, 0
      %p54 = por %p52, %p53
      %s55 = ssub.s32 %s17, %s24
      %p56 = scmp.eq.s32.totalorder %s55, 0
      %s58 = sadd.s32 %s57, 1
      %s59 = scalar_select %p56, %s57, %s58
      %p62 = pneg %p56
      %p63 = scmp.eq.s32.totalorder %s9, 3
      %p64 = por %p62, %p63
      %p65 = scmp.ne.s32.totalorder %s57, %s60
      %p66 = scmp.eq.s32.totalorder %s9, 0
      %p67 = por %p65, %p66
      %p68 = scmp.ne.s32.totalorder %s57, %s60
      %p69 = scmp.eq.s32.totalorder %s14, 3
      %p70 = por %p68, %p69
      %p71 = scmp.ne.s32.totalorder %s60, %s61
      %p72 = scmp.eq.s32.totalorder %s14, 0
      %p73 = por %p71, %p72
      %p74 = scmp.ne.s32.totalorder %s60, %s61
      %p75 = scmp.eq.s32.totalorder %s15, 3
      %p76 = por %p74, %p75
      %p78 = scmp.ne.s32.totalorder %s61, %s77
      %p79 = scmp.eq.s32.totalorder %s15, 0
      %p80 = por %p78, %p79
      %s81 = ssub.s32 %s17, %s24
      %p82 = scmp.eq.s32.totalorder %s81, 0
      %s84 = sadd.s32 %s83, 1
      %s85 = scalar_select %p82, %s83, %s84
      %p88 = pneg %p82
      %p89 = scmp.eq.s32.totalorder %s9, 3
      %p90 = por %p88, %p89
      %p91 = scmp.ne.s32.totalorder %s83, %s86
      %p92 = scmp.eq.s32.totalorder %s9, 0
      %p93 = por %p91, %p92
      %p94 = scmp.ne.s32.totalorder %s83, %s86
      %p95 = scmp.eq.s32.totalorder %s14, 3
      %p96 = por %p94, %p95
      %p97 = scmp.ne.s32.totalorder %s86, %s87
      %p98 = scmp.eq.s32.totalorder %s14, 0
      %p99 = por %p97, %p98
      %p100 = scmp.ne.s32.totalorder %s86, %s87
      %p101 = scmp.eq.s32.totalorder %s15, 3
      %p102 = por %p100, %p101
      %p104 = scmp.ne.s32.totalorder %s87, %s103
      %p105 = scmp.eq.s32.totalorder %s15, 0
      %p106 = por %p104, %p105
      %s107 = ssub.s32 %s16, %s28
      %s108 = ssub.s32 %s17, %s24
      %s109 = sor.u32 %s107, %s108
      %p110 = scmp.eq.s32.totalorder %s109, 0
      %s112 = sadd.s32 %s111, 1
      %s113 = scalar_select %p110, %s111, %s112
      %p116 = pneg %p110
      %p117 = scmp.eq.s32.totalorder %s9, 3
      %p118 = por %p116, %p117
      %p119 = scmp.ne.s32.totalorder %s111, %s114
      %p120 = scmp.eq.s32.totalorder %s9, 0
      %p121 = por %p119, %p120
      %p122 = scmp.ne.s32.totalorder %s111, %s114
      %p123 = scmp.eq.s32.totalorder %s14, 3
      %p124 = por %p122, %p123
      %p125 = scmp.ne.s32.totalorder %s114, %s115
      %p126 = scmp.eq.s32.totalorder %s14, 0
      %p127 = por %p125, %p126
      %p128 = scmp.ne.s32.totalorder %s114, %s115
      %p129 = scmp.eq.s32.totalorder %s15, 3
      %p130 = por %p128, %p129
      %p132 = scmp.ne.s32.totalorder %s115, %s131
      %p133 = scmp.eq.s32.totalorder %s15, 0
      %p134 = por %p132, %p133
      %p135 = scmp.le.s32.totalorder 1, %s9
      %p136 = scmp.lt.s32.totalorder %s9, 5
      %p137 = pnand %p135, %p136
      %p138 = pneg %p137
      // Predicated region
      $region9: #{bert_bilstm_forward.5} parent=5 // pred_check
        _
      $region10: #{bert_bilstm_forward.5} parent=5 // pred_check_branch
        %140 = sbr.rel (%p137) target = $region12
      $region11: #{bert_bilstm_forward.5} parent=5 // pred_region
        %s141 = ssub.s32 %s9, 1
        // Predicated region
        $region13: #{bert_bilstm_forward.5} parent=11 // pred_check
          %p142 = pneg %p47
        $region14: #{bert_bilstm_forward.5} parent=11 // pred_check_branch
          %144 = sbr.rel (%p142) target = $region16
        $region15: #{bert_bilstm_forward.5} parent=11 // pred_region
          %s145 = smul.u32 2, %s18
          %p146 = scmp.lt.s32.totalorder %s145, 1
          %s147 = scalar_select %p146, %s145, 1
          %s148 = smul.addr %s147, 4
          %s149 = scalar_lea.vmem %s0, %s148
          %s150 = smul.u32 2, %s18
        $region16: #{bert_bilstm_forward.5} parent=11 // pred_fallthru
          _
      $region12: #{bert_bilstm_forward.5} parent=5 // pred_fallthru
        _
      %p151 = scmp.lt.s32.totalorder %s9, 4
      // Predicated region
      $region17: #{bert_bilstm_forward.5} parent=5 // pred_check
        %p152 = pneg %p151
      $region18: #{bert_bilstm_forward.5} parent=5 // pred_check_branch
        %154 = sbr.rel (%p152) target = $region20
      $region19: #{bert_bilstm_forward.5} parent=5 // pred_region
        // Predicated region
        $region21: #{bert_bilstm_forward.5} parent=19 // pred_check
          %p155 = pneg %p67
        $region22: #{bert_bilstm_forward.5} parent=19 // pred_check_branch
          %157 = sbr.rel (%p155) target = $region24
        $region23: #{bert_bilstm_forward.5} parent=19 // pred_region
          %s158 = sand.u32 %s57, 1
          %s159 = sand.u32 %s57, 1
          %s160 = smul.addr %s159, 128
          %s161 = scalar_lea.vmem [#allocation2], %s160
          %s162 = smul.u32 2, %s17
          %s163 = smul.addr %s162, 4
          %s164 = scalar_lea.vmem %s1, %s163
          // Predicated region
          $region25: #{bert_bilstm_forward.5} parent=23 // pred_check
            _
          $region26: #{bert_bilstm_forward.5} parent=23 // pred_check_branch
            %166 = sbr.rel (0) target = $region28
          $region27: #{bert_bilstm_forward.5} parent=23 // pred_region
            // Predicated region
            $region29: #{bert_bilstm_forward.5} parent=27 // pred_check
              _
            $region30: #{bert_bilstm_forward.5} parent=27 // pred_check_branch
              %168 = sbr.rel (0) target = $region32
            $region31: #{bert_bilstm_forward.5} parent=27 // pred_region
              // Predicated region
              $region44: #{bert_bilstm_forward.5} parent=31 // pred_check
                _
              $region45: #{bert_bilstm_forward.5} parent=31 // pred_check_branch
                %214 = sbr.rel (0) target = $region47
              $region46: #{bert_bilstm_forward.5} parent=31 // pred_region
                loop: start=0, step=1, limit=1
                $region48: #{bert_bilstm_forward.5} parent=46 // loop_pre_header
                  _
                $region49: #{bert_bilstm_forward.5} parent=46 // loop_header
                  %s216 = sphi 0, %s220
                  %p217 = scmp.ge.s32.totalorder %s216, 1
                  %s221 = sphi %s164, %s164
                  %s222 = sphi %s161, %s161
                $region50: #{bert_bilstm_forward.5} parent=46 // loop_header_branch
                  %219 = sbr.rel (%p217) target = $region54
                $region51: #{bert_bilstm_forward.5} parent=46 // loop_body
                  %v223 = vld [vmem:[%s221] sm:$0xff]
                  %224 = vst [vmem:[%s222] sm:$0xff] %v223
                  %v225 = vld [vmem:[%s221 + $0x20] sm:$0xff]
                  %226 = vst [vmem:[%s222 + $0x8] sm:$0xff] %v225
                  %v227 = vld [vmem:[%s221 + $0x40] sm:$0xff]
                  %228 = vst [vmem:[%s222 + $0x10] sm:$0xff] %v227
                  %v229 = vld [vmem:[%s221 + $0x60] sm:$0xff]
                  %230 = vst [vmem:[%s222 + $0x18] sm:$0xff] %v229
                  %v231 = vld [vmem:[%s221 + $0x80] sm:$0xff]
                  %232 = vst [vmem:[%s222 + $0x20] sm:$0xff] %v231
                  %v233 = vld [vmem:[%s221 + $0xa0] sm:$0xff]
                  %234 = vst [vmem:[%s222 + $0x28] sm:$0xff] %v233
                  %v235 = vld [vmem:[%s221 + $0xc0] sm:$0xff]
                  %236 = vst [vmem:[%s222 + $0x30] sm:$0xff] %v235
                  %v237 = vld [vmem:[%s221 + $0xe0] sm:$0xff]
                  %238 = vst [vmem:[%s222 + $0x38] sm:$0xff] %v237
                  %v239 = vld [vmem:[%s221 + $0x100] sm:$0xff]
                  %240 = vst [vmem:[%s222 + $0x40] sm:$0xff] %v239
                  %v241 = vld [vmem:[%s221 + $0x120] sm:$0xff]
                  %242 = vst [vmem:[%s222 + $0x48] sm:$0xff] %v241
                  %v243 = vld [vmem:[%s221 + $0x140] sm:$0xff]
                  %244 = vst [vmem:[%s222 + $0x50] sm:$0xff] %v243
                  %v245 = vld [vmem:[%s221 + $0x160] sm:$0xff]
                  %246 = vst [vmem:[%s222 + $0x58] sm:$0xff] %v245
                  %v247 = vld [vmem:[%s221 + $0x180] sm:$0xff]
                  %248 = vst [vmem:[%s222 + $0x60] sm:$0xff] %v247
                  %v249 = vld [vmem:[%s221 + $0x1a0] sm:$0xff]
                  %250 = vst [vmem:[%s222 + $0x68] sm:$0xff] %v249
                  %v251 = vld [vmem:[%s221 + $0x1c0] sm:$0xff]
                  %252 = vst [vmem:[%s222 + $0x70] sm:$0xff] %v251
                  %v253 = vld [vmem:[%s221 + $0x1e0] sm:$0xff]
                  %254 = vst [vmem:[%s222 + $0x78] sm:$0xff] %v253
                $region52: #{bert_bilstm_forward.5} parent=46 // loop_footer
                  %s220 = sadd.s32 1, %s216
                $region53: #{bert_bilstm_forward.5} parent=46 // loop_footer_branch
                  %215 = sbr.rel target = $region49
                $region54: #{bert_bilstm_forward.5} parent=46 // loop_exit
                  _
              $region47: #{bert_bilstm_forward.5} parent=31 // pred_fallthru
                _
              // Predicated region
              $region55: #{bert_bilstm_forward.5} parent=31 // pred_check
                _
              $region56: #{bert_bilstm_forward.5} parent=31 // pred_check_branch
                %256 = sbr.rel target = $region58
              $region57: #{bert_bilstm_forward.5} parent=31 // pred_region
                _
              $region58: #{bert_bilstm_forward.5} parent=31 // pred_fallthru
                _
            $region32: #{bert_bilstm_forward.5} parent=27 // pred_fallthru
              _
            // Predicated region
            $region33: #{bert_bilstm_forward.5} parent=27 // pred_check
              _
            $region34: #{bert_bilstm_forward.5} parent=27 // pred_check_branch
              %170 = sbr.rel target = $region36
            $region35: #{bert_bilstm_forward.5} parent=27 // pred_region
              %s172 = ssub.s32 256, 1
              loop: start=0, step=1, limit=1
              $region37: #{bert_bilstm_forward.5} parent=35 // loop_pre_header
                _
              $region38: #{bert_bilstm_forward.5} parent=35 // loop_header
                %s174 = sphi 0, %s178
                %p175 = scmp.ge.s32.totalorder %s174, 1
                %s179 = sphi %s164, %s164
                %s180 = sphi %s161, %s161
              $region39: #{bert_bilstm_forward.5} parent=35 // loop_header_branch
                %177 = sbr.rel (%p175) target = $region43
              $region40: #{bert_bilstm_forward.5} parent=35 // loop_body
                %v181 = vld [vmem:[%s179] sm:%s172]
                %182 = vst [vmem:[%s180] sm:%s172] %v181
                %v183 = vld [vmem:[%s179 + $0x20] sm:%s172]
                %184 = vst [vmem:[%s180 + $0x8] sm:%s172] %v183
                %v185 = vld [vmem:[%s179 + $0x40] sm:%s172]
                %186 = vst [vmem:[%s180 + $0x10] sm:%s172] %v185
                %v187 = vld [vmem:[%s179 + $0x60] sm:%s172]
                %188 = vst [vmem:[%s180 + $0x18] sm:%s172] %v187
                %v189 = vld [vmem:[%s179 + $0x80] sm:%s172]
                %190 = vst [vmem:[%s180 + $0x20] sm:%s172] %v189
                %v191 = vld [vmem:[%s179 + $0xa0] sm:%s172]
                %192 = vst [vmem:[%s180 + $0x28] sm:%s172] %v191
                %v193 = vld [vmem:[%s179 + $0xc0] sm:%s172]
                %194 = vst [vmem:[%s180 + $0x30] sm:%s172] %v193
                %v195 = vld [vmem:[%s179 + $0xe0] sm:%s172]
                %196 = vst [vmem:[%s180 + $0x38] sm:%s172] %v195
                %v197 = vld [vmem:[%s179 + $0x100] sm:%s172]
                %198 = vst [vmem:[%s180 + $0x40] sm:%s172] %v197
                %v199 = vld [vmem:[%s179 + $0x120] sm:%s172]
                %200 = vst [vmem:[%s180 + $0x48] sm:%s172] %v199
                %v201 = vld [vmem:[%s179 + $0x140] sm:%s172]
                %202 = vst [vmem:[%s180 + $0x50] sm:%s172] %v201
                %v203 = vld [vmem:[%s179 + $0x160] sm:%s172]
                %204 = vst [vmem:[%s180 + $0x58] sm:%s172] %v203
                %v205 = vld [vmem:[%s179 + $0x180] sm:%s172]
                %206 = vst [vmem:[%s180 + $0x60] sm:%s172] %v205
                %v207 = vld [vmem:[%s179 + $0x1a0] sm:%s172]
                %208 = vst [vmem:[%s180 + $0x68] sm:%s172] %v207
                %v209 = vld [vmem:[%s179 + $0x1c0] sm:%s172]
                %210 = vst [vmem:[%s180 + $0x70] sm:%s172] %v209
                %v211 = vld [vmem:[%s179 + $0x1e0] sm:%s172]
                %212 = vst [vmem:[%s180 + $0x78] sm:%s172] %v211
              $region41: #{bert_bilstm_forward.5} parent=35 // loop_footer
                %s178 = sadd.s32 1, %s174
              $region42: #{bert_bilstm_forward.5} parent=35 // loop_footer_branch
                %173 = sbr.rel target = $region38
              $region43: #{bert_bilstm_forward.5} parent=35 // loop_exit
                _
            $region36: #{bert_bilstm_forward.5} parent=27 // pred_fallthru
              _
          $region28: #{bert_bilstm_forward.5} parent=23 // pred_fallthru
            _
          %257 = vnop
        $region24: #{bert_bilstm_forward.5} parent=19 // pred_fallthru
          _
        // Predicated region
        $region59: #{bert_bilstm_forward.5} parent=19 // pred_check
          %p258 = pneg %p93
        $region60: #{bert_bilstm_forward.5} parent=19 // pred_check_branch
          %260 = sbr.rel (%p258) target = $region62
        $region61: #{bert_bilstm_forward.5} parent=19 // pred_region
          %s261 = smul.u32 2, %s17
          %p262 = scmp.lt.s32.totalorder %s261, 7
          %s263 = scalar_select %p262, %s261, 7
          %s264 = scalar_lea.vmem %s2, %s263
          %s265 = smul.u32 2, %s17
        $region62: #{bert_bilstm_forward.5} parent=19 // pred_fallthru
          _
      $region20: #{bert_bilstm_forward.5} parent=5 // pred_fallthru
        _
      %p266 = scmp.le.s32.totalorder 1, %s9
      %p267 = scmp.lt.s32.totalorder %s9, 5
      %p268 = pnand %p266, %p267
      %p269 = pneg %p268
      // Predicated region
      $region63: #{bert_bilstm_forward.5} parent=5 // pred_check
        _
      $region64: #{bert_bilstm_forward.5} parent=5 // pred_check_branch
        %271 = sbr.rel (%p268) target = $region66
      $region65: #{bert_bilstm_forward.5} parent=5 // pred_region
        %s272 = ssub.s32 %s9, 1
        %s273 = sand.u32 %s60, 1
        %s274 = sand.u32 %s60, 1
        %s275 = smul.addr %s274, 128
        %s276 = scalar_lea.vmem [#allocation2], %s275
        // Predicated region
        $region67: #{bert_bilstm_forward.5} parent=65 // pred_check
          %p277 = pneg %p73
        $region68: #{bert_bilstm_forward.5} parent=65 // pred_check_branch
          %279 = sbr.rel (%p277) target = $region70
        $region69: #{bert_bilstm_forward.5} parent=65 // pred_region
          _
        $region70: #{bert_bilstm_forward.5} parent=65 // pred_fallthru
          _
        %s280 = smul.u32 2, %s18
        %p281 = scmp.lt.s32.totalorder %s280, 1
        %s282 = scalar_select %p281, %s280, 1
        %s283 = smul.addr %s282, 4
        %s284 = scalar_lea.vmem %s0, %s283
        %p285 = pneg %p47
        %p286 = pneg %p44
        %s287 = sand.u32 %s60, 1
        %s288 = sand.u32 %s60, 1
        %s289 = smul.addr %s288, 128
        %s290 = scalar_lea.vmem [#allocation2], %s289
        %p291 = pneg %p73
        %p292 = pneg %p70
        %s293 = smul.u32 2, %s19
        %p294 = scmp.lt.s32.totalorder %s293, 7
        %s295 = scalar_select %p294, %s293, 7
        %s296 = scalar_lea.vmem %s2, %s295
        %p297 = pneg %p99
        %p298 = pneg %p96
        %p299 = pneg %p127
        %p300 = pneg %p124
        %s301 = sand.u32 %s114, 1
        %s302 = sand.u32 %s114, 1
        %s303 = smul.addr %s302, 32
        %s304 = scalar_lea.vmem [#allocation3], %s303
        %s305 = smul.u32 2, %s18
        %p306 = scmp.lt.s32.totalorder %s305, 1
        %s307 = scalar_select %p306, %s305, 1
        %s308 = smul.addr %s307, 4
        %s309 = scalar_lea.vmem %s0, %s308
        %s310 = smul.u32 2, %s18
        %s311 = smul.u32 2, %s19
        %s312 = smul.u32 2, %s19
        %p313 = scmp.lt.s32.totalorder %s312, 7
        %s314 = scalar_select %p313, %s312, 7
        %s315 = scalar_lea.vmem %s2, %s314
        %s316 = smul.u32 2, %s19
        %s317 = smul.u32 2, %s18
        %s318 = smul.u32 2, %s19
        %v319 = vld [vmem:[%s309] sm:$0xf]
        %v320 = vld [vmem:[%s309 + $0x4] sm:$0xf]
        %v321 = vld [vmem:[%s276] sm:$0xff]
        %v322 = vld [vmem:[%s276 + $0x8] sm:$0xff]
        %v323 = vld [vmem:[%s276 + $0x10] sm:$0xff]
        %v324 = vld [vmem:[%s276 + $0x18] sm:$0xff]
        %v325 = vld [vmem:[%s276 + $0x20] sm:$0xff]
        %v326 = vld [vmem:[%s276 + $0x28] sm:$0xff]
        %v327 = vld [vmem:[%s276 + $0x30] sm:$0xff]
        %v328 = vld [vmem:[%s276 + $0x38] sm:$0xff]
        %v329 = vld [vmem:[%s276 + $0x40] sm:$0xff]
        %v330 = vld [vmem:[%s276 + $0x48] sm:$0xff]
        %v331 = vld [vmem:[%s276 + $0x50] sm:$0xff]
        %v332 = vld [vmem:[%s276 + $0x58] sm:$0xff]
        %v333 = vld [vmem:[%s276 + $0x60] sm:$0xff]
        %v334 = vld [vmem:[%s276 + $0x68] sm:$0xff]
        %v335 = vld [vmem:[%s276 + $0x70] sm:$0xff]
        %v336 = vld [vmem:[%s276 + $0x78] sm:$0xff]
        %v337 = vld [vmem:[%s315] sm:$0x3]
        %v339 = vperm.slane %v337, 0
        %v340 = vperm.slane %v337, 1
        %v345 = vunpack.c.l.b16 %v319
        %v346 = vunpack.c.l.b16 %v320
        %v347 = vpack.c.b16 %v346, %v345
        %v365 = vunpack.c.l.b16 %v321
        %v366 = vunpack.c.h.b16 %v321
        %v367 = vunpack.c.l.b16 %v322
        %v368 = vunpack.c.h.b16 %v322
        %v369 = vunpack.c.l.b16 %v323
        %v370 = vunpack.c.h.b16 %v323
        %v371 = vunpack.c.l.b16 %v324
        %v372 = vunpack.c.h.b16 %v324
        %v373 = vunpack.c.l.b16 %v325
        %v374 = vunpack.c.h.b16 %v325
        %v375 = vunpack.c.l.b16 %v326
        %v376 = vunpack.c.h.b16 %v326
        %v377 = vunpack.c.l.b16 %v327
        %v378 = vunpack.c.h.b16 %v327
        %v379 = vunpack.c.l.b16 %v328
        %v380 = vunpack.c.h.b16 %v328
        %v381 = vunpack.c.l.b16 %v329
        %v382 = vunpack.c.h.b16 %v329
        %v383 = vunpack.c.l.b16 %v330
        %v384 = vunpack.c.h.b16 %v330
        %v385 = vunpack.c.l.b16 %v331
        %v386 = vunpack.c.h.b16 %v331
        %v387 = vunpack.c.l.b16 %v332
        %v388 = vunpack.c.h.b16 %v332
        %v389 = vunpack.c.l.b16 %v333
        %v390 = vunpack.c.h.b16 %v333
        %v391 = vunpack.c.l.b16 %v334
        %v392 = vunpack.c.h.b16 %v334
        %v393 = vunpack.c.l.b16 %v335
        %v394 = vunpack.c.h.b16 %v335
        %v395 = vunpack.c.l.b16 %v336
        %v396 = vunpack.c.h.b16 %v336
        %v397 = vpack.c.b16 %v367, %v365
        %v398 = vpack.c.b16 %v368, %v366
        %v399 = vpack.c.b16 %v371, %v369
        %v400 = vpack.c.b16 %v372, %v370
        %v401 = vpack.c.b16 %v375, %v373
        %v402 = vpack.c.b16 %v376, %v374
        %v403 = vpack.c.b16 %v379, %v377
        %v404 = vpack.c.b16 %v380, %v378
        %v405 = vpack.c.b16 %v383, %v381
        %v406 = vpack.c.b16 %v384, %v382
        %v407 = vpack.c.b16 %v387, %v385
        %v408 = vpack.c.b16 %v388, %v386
        %v409 = vpack.c.b16 %v391, %v389
        %v410 = vpack.c.b16 %v392, %v390
        %v411 = vpack.c.b16 %v395, %v393
        %v412 = vpack.c.b16 %v396, %v394
        %429 = vmatpush.bf16.msra.mxu0 %v411
        %430 = vmatpush.bf16.msra.mxu0 %v409
        %431 = vmatpush.bf16.msra.mxu0 %v407
        %432 = vmatpush.bf16.msra.mxu0 %v405
        %433 = vmatpush.bf16.msra.mxu0 %v403
        %434 = vmatpush.bf16.msra.mxu0 %v401
        %435 = vmatpush.bf16.msra.mxu0 %v399
        %436 = vmatpush.bf16.msra.mxu0 %v397
        %437 = vmatmul.bf16.gmra.mxu0 %v347
        %v438 = vpop.f32.mrf.mxu0
        %v439 = vadd.f32 %v339, %v438
        %v440 = vpop.f32.mrf.mxu0
        %v441 = vadd.f32 %v339, %v440
        %442 = vdwg.mxu0
        %443 = vmatpush.bf16.msra.mxu0 %v412
        %444 = vmatpush.bf16.msra.mxu0 %v410
        %445 = vmatpush.bf16.msra.mxu0 %v408
        %446 = vmatpush.bf16.msra.mxu0 %v406
        %447 = vmatpush.bf16.msra.mxu0 %v404
        %448 = vmatpush.bf16.msra.mxu0 %v402
        %449 = vmatpush.bf16.msra.mxu0 %v400
        %450 = vmatpush.bf16.msra.mxu0 %v398
        %451 = vmatmul.bf16.gmra.mxu0 %v347
        %v452 = vpop.f32.mrf.mxu0
        %v453 = vadd.f32 %v340, %v452
        %v454 = vpop.f32.mrf.mxu0
        %v455 = vadd.f32 %v340, %v454
        %456 = vdwg.mxu0
        %457 = vst [vmem:[%s304] sm:$0xff] %v439
        %458 = vst [vmem:[%s304 + $0x8] sm:$0xff] %v453
        %459 = vst [vmem:[%s304 + $0x10] sm:$0xff] %v441
        %460 = vst [vmem:[%s304 + $0x18] sm:$0xff] %v455
        %s461 = sand.u32 %s114, 1
        %s462 = sand.u32 %s114, 1
        %s463 = smul.addr %s462, 32
        %s464 = scalar_lea.vmem [#allocation3], %s463
        // Predicated region
        $region71: #{bert_bilstm_forward.5} parent=65 // pred_check
          %p465 = pneg %p124
        $region72: #{bert_bilstm_forward.5} parent=65 // pred_check_branch
          %467 = sbr.rel (%p465) target = $region74
        $region73: #{bert_bilstm_forward.5} parent=65 // pred_region
          %s468 = smul.u32 2, %s18
          %s469 = smul.u32 2, %s19
          %s470 = smul.addr %s468, 8
          %s471 = sadd.s32 %s469, %s470
          %s472 = smul.addr %s471, 8
          %s473 = scalar_lea.vmem %s3, %s472
          // Predicated region
          $region75: #{bert_bilstm_forward.5} parent=73 // pred_check
            _
          $region76: #{bert_bilstm_forward.5} parent=73 // pred_check_branch
            %475 = sbr.rel (0) target = $region78
          $region77: #{bert_bilstm_forward.5} parent=73 // pred_region
            // Predicated region
            $region79: #{bert_bilstm_forward.5} parent=77 // pred_check
              _
            $region80: #{bert_bilstm_forward.5} parent=77 // pred_check_branch
              %477 = sbr.rel (0) target = $region82
            $region81: #{bert_bilstm_forward.5} parent=77 // pred_region
              loop: start=0, step=1, limit=1
              $region83: #{bert_bilstm_forward.5} parent=81 // loop_pre_header
                _
              $region84: #{bert_bilstm_forward.5} parent=81 // loop_header
                %s479 = sphi 0, %s483
                %p480 = scmp.ge.s32.totalorder %s479, 1
                %s484 = sphi %s464, %s464
                %s485 = sphi %s473, %s473
              $region85: #{bert_bilstm_forward.5} parent=81 // loop_header_branch
                %482 = sbr.rel (%p480) target = $region89
              $region86: #{bert_bilstm_forward.5} parent=81 // loop_body
                %v486 = vld [vmem:[%s484] sm:$0xff]
                %487 = vst [vmem:[%s485] sm:$0xff] %v486
                %v488 = vld [vmem:[%s484 + $0x8] sm:$0xff]
                %489 = vst [vmem:[%s485 + $0x8] sm:$0xff] %v488
                %v490 = vld [vmem:[%s484 + $0x10] sm:$0xff]
                %491 = vst [vmem:[%s485 + $0x40] sm:$0xff] %v490
                %v492 = vld [vmem:[%s484 + $0x18] sm:$0xff]
                %493 = vst [vmem:[%s485 + $0x48] sm:$0xff] %v492
              $region87: #{bert_bilstm_forward.5} parent=81 // loop_footer
                %s483 = sadd.s32 1, %s479
              $region88: #{bert_bilstm_forward.5} parent=81 // loop_footer_branch
                %478 = sbr.rel target = $region84
              $region89: #{bert_bilstm_forward.5} parent=81 // loop_exit
                _
            $region82: #{bert_bilstm_forward.5} parent=77 // pred_fallthru
              _
            // Predicated region
            $region90: #{bert_bilstm_forward.5} parent=77 // pred_check
              _
            $region91: #{bert_bilstm_forward.5} parent=77 // pred_check_branch
              %495 = sbr.rel target = $region93
            $region92: #{bert_bilstm_forward.5} parent=77 // pred_region
              _
            $region93: #{bert_bilstm_forward.5} parent=77 // pred_fallthru
              _
          $region78: #{bert_bilstm_forward.5} parent=73 // pred_fallthru
            _
          %496 = vnop
        $region74: #{bert_bilstm_forward.5} parent=65 // pred_fallthru
          _
      $region66: #{bert_bilstm_forward.5} parent=5 // pred_fallthru
        _
      %p497 = scmp.le.s32.totalorder 2, %s9
      // Predicated region
      $region94: #{bert_bilstm_forward.5} parent=5 // pred_check
        %p498 = pneg %p497
      $region95: #{bert_bilstm_forward.5} parent=5 // pred_check_branch
        %500 = sbr.rel (%p498) target = $region97
      $region96: #{bert_bilstm_forward.5} parent=5 // pred_region
        %s501 = ssub.s32 %s9, 2
        // Predicated region
        $region98: #{bert_bilstm_forward.5} parent=96 // pred_check
          %p502 = pneg %p130
        $region99: #{bert_bilstm_forward.5} parent=96 // pred_check_branch
          %504 = sbr.rel (%p502) target = $region101
        $region100: #{bert_bilstm_forward.5} parent=96 // pred_region
          %s505 = sand.u32 %s115, 1
          %s506 = sand.u32 %s115, 1
          %s507 = smul.addr %s506, 32
          %s508 = scalar_lea.vmem [#allocation3], %s507
        $region101: #{bert_bilstm_forward.5} parent=96 // pred_fallthru
          _
      $region97: #{bert_bilstm_forward.5} parent=5 // pred_fallthru
        _
    $region6: #{bert_bilstm_forward.5} parent=1 // loop_footer
      %s13 = sadd.s32 1, %s9
    $region7: #{bert_bilstm_forward.5} parent=1 // loop_footer_branch
      %8 = sbr.rel target = $region3
    $region8: #{bert_bilstm_forward.5} parent=1 // loop_exit
      _

// kernel: bert_bilstm_forward.4
$region0: #{bert_bilstm_forward.4}
  #allocation0 [shape = 'u32[]', space=smem, size = 0x4, offset = 0x4, fixed_abs, tag = 'smem constant byte address 0x4 - core index']
  #allocation1 [shape = 'u32[72,128]{1,0:T(1,128)}', space=vmem, size = 0x9000, scoped, tag = 'internal scratch']
  %s0 = inlined_call_operand.vmem [shape: bf16[16,128], index: 0, kind: input, shape index: {}]
  %s1 = inlined_call_operand.vmem [shape: bf16[128,128], index: 1, kind: input, shape index: {}]
  %s2 = inlined_call_operand.vmem [shape: f32[1,128], index: 2, kind: input, shape index: {}]
  %s3 = inlined_call_operand.vmem [shape: f32[16,1], index: 3, kind: input, shape index: {}]
  %s4 = inlined_call_operand.vmem [shape: bf16[16,128], index: 4, kind: output, shape index: {}]
  %s5 = sld [smem:[#allocation0]]
  $region26: #{bert_bilstm_forward.4} parent=0
    _
  %s7 = ssub.s32 1, %s5
  %s8 = scalar_select 0, %s7, %s5
  // Predicated region
  $region2: #{bert_bilstm_forward.4} parent=0 // pred_check
    _
  $region3: #{bert_bilstm_forward.4} parent=0 // pred_check_branch
    %10 = sbr.rel (0) target = $region5
  $region4: #{bert_bilstm_forward.4} parent=0 // pred_region
    _
  $region5: #{bert_bilstm_forward.4} parent=0 // pred_fallthru
    _
  // Predicated region
  $region6: #{bert_bilstm_forward.4} parent=0 // pred_check
    _
  $region7: #{bert_bilstm_forward.4} parent=0 // pred_check_branch
    %12 = sbr.rel (0) target = $region9
  $region8: #{bert_bilstm_forward.4} parent=0 // pred_region
    _
  $region9: #{bert_bilstm_forward.4} parent=0 // pred_fallthru
    _
  // Predicated region
  $region10: #{bert_bilstm_forward.4} parent=0 // pred_check
    _
  $region11: #{bert_bilstm_forward.4} parent=0 // pred_check_branch
    %14 = sbr.rel (0) target = $region13
  $region12: #{bert_bilstm_forward.4} parent=0 // pred_region
    _
  $region13: #{bert_bilstm_forward.4} parent=0 // pred_fallthru
    _
  // Predicated region
  $region14: #{bert_bilstm_forward.4} parent=0 // pred_check
    _
  $region15: #{bert_bilstm_forward.4} parent=0 // pred_check_branch
    %16 = sbr.rel (0) target = $region17
  $region16: #{bert_bilstm_forward.4} parent=0 // pred_region
    _
  $region17: #{bert_bilstm_forward.4} parent=0 // pred_fallthru
    _
  %v17 = vld [vmem:[%s0] sm:$0xf]
  %v18 = vld [vmem:[%s0 + $0x4] sm:$0xf]
  %v19 = vld [vmem:[%s1] sm:$0xf]
  %v20 = vld [vmem:[%s1 + $0x4] sm:$0xf]
  %v21 = vld [vmem:[%s1 + $0x8] sm:$0xf]
  %v22 = vld [vmem:[%s1 + $0xc] sm:$0xf]
  %v23 = vld [vmem:[%s1 + $0x10] sm:$0xf]
  %v24 = vld [vmem:[%s1 + $0x14] sm:$0xf]
  %v25 = vld [vmem:[%s1 + $0x18] sm:$0xf]
  %v26 = vld [vmem:[%s1 + $0x1c] sm:$0xf]
  %v27 = vld [vmem:[%s1 + $0x20] sm:$0xf]
  %v28 = vld [vmem:[%s1 + $0x24] sm:$0xf]
  %v29 = vld [vmem:[%s1 + $0x28] sm:$0xf]
  %v30 = vld [vmem:[%s1 + $0x2c] sm:$0xf]
  %v31 = vld [vmem:[%s1 + $0x30] sm:$0xf]
  %v32 = vld [vmem:[%s1 + $0x34] sm:$0xf]
  %v33 = vld [vmem:[%s1 + $0x38] sm:$0xf]
  %v34 = vld [vmem:[%s1 + $0x3c] sm:$0xf]
  %v35 = vld [vmem:[%s2] sm:$0x1]
  %v37 = vperm.slane %v35, 0
  %v41 = vunpack.c.l.b16 %v17
  %v42 = vunpack.c.l.b16 %v18
  %v43 = vpack.c.b16 %v42, %v41
  %v61 = vunpack.c.l.b16 %v19
  %v62 = vunpack.c.l.b16 %v20
  %v63 = vunpack.c.l.b16 %v21
  %v64 = vunpack.c.l.b16 %v22
  %v65 = vunpack.c.l.b16 %v23
  %v66 = vunpack.c.l.b16 %v24
  %v67 = vunpack.c.l.b16 %v25
  %v68 = vunpack.c.l.b16 %v26
  %v69 = vunpack.c.l.b16 %v27
  %v70 = vunpack.c.l.b16 %v28
  %v71 = vunpack.c.l.b16 %v29
  %v72 = vunpack.c.l.b16 %v30
  %v73 = vunpack.c.l.b16 %v31
  %v74 = vunpack.c.l.b16 %v32
  %v75 = vunpack.c.l.b16 %v33
  %v76 = vunpack.c.l.b16 %v34
  %v77 = vpack.c.b16 %v62, %v61
  %v78 = vpack.c.b16 %v64, %v63
  %v79 = vpack.c.b16 %v66, %v65
  %v80 = vpack.c.b16 %v68, %v67
  %v81 = vpack.c.b16 %v70, %v69
  %v82 = vpack.c.b16 %v72, %v71
  %v83 = vpack.c.b16 %v74, %v73
  %v84 = vpack.c.b16 %v76, %v75
  %93 = vmatpush.bf16.msra.mxu0 %v84
  %94 = vmatpush.bf16.msra.mxu0 %v83
  %95 = vmatpush.bf16.msra.mxu0 %v82
  %96 = vmatpush.bf16.msra.mxu0 %v81
  %97 = vmatpush.bf16.msra.mxu0 %v80
  %98 = vmatpush.bf16.msra.mxu0 %v79
  %99 = vmatpush.bf16.msra.mxu0 %v78
  %100 = vmatpush.bf16.msra.mxu0 %v77
  %101 = vmatmul.bf16.gmra.mxu0 %v43
  %v102 = vpop.f32.mrf.mxu0
  %v103 = vadd.f32 %v37, %v102
  %v104 = vpop.f32.mrf.mxu0
  %v105 = vadd.f32 %v37, %v104
  %106 = vdwg.mxu0
  %v107 = vtanh.pop %v103
  %v108 = vtanh.pop %v105
  %v109 = vld [vmem:[%s3] sm:$0xff]
  %v110 = vld [vmem:[%s3 + $0x8] sm:$0xff]
  %112 = vset.pattern.permute.xlu0 0
  %113 = vperm.xlu0 %112, %v109
  %v114 = vpop.permute.xlu0 %113
  %117 = vset.pattern.permute.xlu0 0
  %118 = vperm.xlu0 %117, %v110
  %v119 = vpop.permute.xlu0 %118
  %v121 = vmul.f32 %v107, %v114
  %v122 = vmul.f32 %v108, %v119
  %v123 = vpack.c.bf16 %v121, %v121
  %v124 = vpack.c.bf16 %v122, %v122
  %125 = vst [vmem:[%s4] sm:$0xf] %v123
  %126 = vst [vmem:[%s4 + $0x4] sm:$0xf] %v124
  // Predicated region
  $region18: #{bert_bilstm_forward.4} parent=0 // pred_check
    _
  $region19: #{bert_bilstm_forward.4} parent=0 // pred_check_branch
    %128 = sbr.rel (0) target = $region21
  $region20: #{bert_bilstm_forward.4} parent=0 // pred_region
    _
  $region21: #{bert_bilstm_forward.4} parent=0 // pred_fallthru
    _
  // Predicated region
  $region22: #{bert_bilstm_forward.4} parent=0 // pred_check
    _
  $region23: #{bert_bilstm_forward.4} parent=0 // pred_check_branch
    %130 = sbr.rel (0) target = $region25
  $region24: #{bert_bilstm_forward.4} parent=0 // pred_region
    _
  $region25: #{bert_bilstm_forward.4} parent=0 // pred_fallthru
    _

// kernel: bert_bilstm_forward.7
$region0: #{bert_bilstm_forward.7}
  #allocation0 [shape = 'u32[]', space=smem, size = 0x4, offset = 0x4, fixed_abs, tag = 'smem constant byte address 0x4 - core index']
  #allocation1 [shape = 'u32[72,128]{1,0:T(1,128)}', space=vmem, size = 0x9000, scoped, tag = 'internal scratch']
  %s0 = inlined_call_operand.vmem [shape: bf16[16,256], index: 0, kind: input, shape index: {}]
  %s1 = inlined_call_operand.vmem [shape: bf16[256,128], index: 1, kind: input, shape index: {}]
  %s2 = inlined_call_operand.vmem [shape: f32[1,128], index: 2, kind: input, shape index: {}]
  %s3 = inlined_call_operand.vmem [shape: f32[16,128], index: 3, kind: output, shape index: {}]
  %s4 = sld [smem:[#allocation0]]
  $region22: #{bert_bilstm_forward.7} parent=0
    _
  %s6 = ssub.s32 1, %s4
  %s7 = scalar_select 0, %s6, %s4
  // Predicated region
  $region2: #{bert_bilstm_forward.7} parent=0 // pred_check
    _
  $region3: #{bert_bilstm_forward.7} parent=0 // pred_check_branch
    %9 = sbr.rel (0) target = $region5
  $region4: #{bert_bilstm_forward.7} parent=0 // pred_region
    _
  $region5: #{bert_bilstm_forward.7} parent=0 // pred_fallthru
    _
  // Predicated region
  $region6: #{bert_bilstm_forward.7} parent=0 // pred_check
    _
  $region7: #{bert_bilstm_forward.7} parent=0 // pred_check_branch
    %11 = sbr.rel (0) target = $region9
  $region8: #{bert_bilstm_forward.7} parent=0 // pred_region
    _
  $region9: #{bert_bilstm_forward.7} parent=0 // pred_fallthru
    _
  // Predicated region
  $region10: #{bert_bilstm_forward.7} parent=0 // pred_check
    _
  $region11: #{bert_bilstm_forward.7} parent=0 // pred_check_branch
    %13 = sbr.rel (0) target = $region13
  $region12: #{bert_bilstm_forward.7} parent=0 // pred_region
    _
  $region13: #{bert_bilstm_forward.7} parent=0 // pred_fallthru
    _
  %v14 = vld [vmem:[%s0] sm:$0xff]
  %v15 = vld [vmem:[%s0 + $0x8] sm:$0xff]
  %v16 = vld [vmem:[%s1] sm:$0xf]
  %v17 = vld [vmem:[%s1 + $0x4] sm:$0xf]
  %v18 = vld [vmem:[%s1 + $0x8] sm:$0xf]
  %v19 = vld [vmem:[%s1 + $0xc] sm:$0xf]
  %v20 = vld [vmem:[%s1 + $0x10] sm:$0xf]
  %v21 = vld [vmem:[%s1 + $0x14] sm:$0xf]
  %v22 = vld [vmem:[%s1 + $0x18] sm:$0xf]
  %v23 = vld [vmem:[%s1 + $0x1c] sm:$0xf]
  %v24 = vld [vmem:[%s1 + $0x20] sm:$0xf]
  %v25 = vld [vmem:[%s1 + $0x24] sm:$0xf]
  %v26 = vld [vmem:[%s1 + $0x28] sm:$0xf]
  %v27 = vld [vmem:[%s1 + $0x2c] sm:$0xf]
  %v28 = vld [vmem:[%s1 + $0x30] sm:$0xf]
  %v29 = vld [vmem:[%s1 + $0x34] sm:$0xf]
  %v30 = vld [vmem:[%s1 + $0x38] sm:$0xf]
  %v31 = vld [vmem:[%s1 + $0x3c] sm:$0xf]
  %v32 = vld [vmem:[%s1 + $0x40] sm:$0xf]
  %v33 = vld [vmem:[%s1 + $0x44] sm:$0xf]
  %v34 = vld [vmem:[%s1 + $0x48] sm:$0xf]
  %v35 = vld [vmem:[%s1 + $0x4c] sm:$0xf]
  %v36 = vld [vmem:[%s1 + $0x50] sm:$0xf]
  %v37 = vld [vmem:[%s1 + $0x54] sm:$0xf]
  %v38 = vld [vmem:[%s1 + $0x58] sm:$0xf]
  %v39 = vld [vmem:[%s1 + $0x5c] sm:$0xf]
  %v40 = vld [vmem:[%s1 + $0x60] sm:$0xf]
  %v41 = vld [vmem:[%s1 + $0x64] sm:$0xf]
  %v42 = vld [vmem:[%s1 + $0x68] sm:$0xf]
  %v43 = vld [vmem:[%s1 + $0x6c] sm:$0xf]
  %v44 = vld [vmem:[%s1 + $0x70] sm:$0xf]
  %v45 = vld [vmem:[%s1 + $0x74] sm:$0xf]
  %v46 = vld [vmem:[%s1 + $0x78] sm:$0xf]
  %v47 = vld [vmem:[%s1 + $0x7c] sm:$0xf]
  %v48 = vld [vmem:[%s2] sm:$0x1]
  %v50 = vperm.slane %v48, 0
  %v54 = vunpack.c.l.b16 %v14
  %v55 = vunpack.c.h.b16 %v14
  %v56 = vunpack.c.l.b16 %v15
  %v57 = vunpack.c.h.b16 %v15
  %v58 = vpack.c.b16 %v56, %v54
  %v59 = vpack.c.b16 %v57, %v55
  %v94 = vunpack.c.l.b16 %v16
  %v95 = vunpack.c.l.b16 %v17
  %v96 = vunpack.c.l.b16 %v18
  %v97 = vunpack.c.l.b16 %v19
  %v98 = vunpack.c.l.b16 %v20
  %v99 = vunpack.c.l.b16 %v21
  %v100 = vunpack.c.l.b16 %v22
  %v101 = vunpack.c.l.b16 %v23
  %v102 = vunpack.c.l.b16 %v24
  %v103 = vunpack.c.l.b16 %v25
  %v104 = vunpack.c.l.b16 %v26
  %v105 = vunpack.c.l.b16 %v27
  %v106 = vunpack.c.l.b16 %v28
  %v107 = vunpack.c.l.b16 %v29
  %v108 = vunpack.c.l.b16 %v30
  %v109 = vunpack.c.l.b16 %v31
  %v110 = vunpack.c.l.b16 %v32
  %v111 = vunpack.c.l.b16 %v33
  %v112 = vunpack.c.l.b16 %v34
  %v113 = vunpack.c.l.b16 %v35
  %v114 = vunpack.c.l.b16 %v36
  %v115 = vunpack.c.l.b16 %v37
  %v116 = vunpack.c.l.b16 %v38
  %v117 = vunpack.c.l.b16 %v39
  %v118 = vunpack.c.l.b16 %v40
  %v119 = vunpack.c.l.b16 %v41
  %v120 = vunpack.c.l.b16 %v42
  %v121 = vunpack.c.l.b16 %v43
  %v122 = vunpack.c.l.b16 %v44
  %v123 = vunpack.c.l.b16 %v45
  %v124 = vunpack.c.l.b16 %v46
  %v125 = vunpack.c.l.b16 %v47
  %v126 = vpack.c.b16 %v95, %v94
  %v127 = vpack.c.b16 %v97, %v96
  %v128 = vpack.c.b16 %v99, %v98
  %v129 = vpack.c.b16 %v101, %v100
  %v130 = vpack.c.b16 %v103, %v102
  %v131 = vpack.c.b16 %v105, %v104
  %v132 = vpack.c.b16 %v107, %v106
  %v133 = vpack.c.b16 %v109, %v108
  %v134 = vpack.c.b16 %v111, %v110
  %v135 = vpack.c.b16 %v113, %v112
  %v136 = vpack.c.b16 %v115, %v114
  %v137 = vpack.c.b16 %v117, %v116
  %v138 = vpack.c.b16 %v119, %v118
  %v139 = vpack.c.b16 %v121, %v120
  %v140 = vpack.c.b16 %v123, %v122
  %v141 = vpack.c.b16 %v125, %v124
  %158 = vmatpush.bf16.msra.mxu0 %v133
  %159 = vmatpush.bf16.msra.mxu0 %v132
  %160 = vmatpush.bf16.msra.mxu0 %v131
  %161 = vmatpush.bf16.msra.mxu0 %v130
  %162 = vmatpush.bf16.msra.mxu0 %v129
  %163 = vmatpush.bf16.msra.mxu0 %v128
  %164 = vmatpush.bf16.msra.mxu0 %v127
  %165 = vmatpush.bf16.msra.mxu0 %v126
  %166 = vmatmul.bf16.gmra.mxu0 %v58
  %v167 = vpop.f32.mrf.mxu0
  %v168 = vadd.f32 %v50, %v167
  %v169 = vpop.f32.mrf.mxu0
  %v170 = vadd.f32 %v50, %v169
  %171 = vdwg.mxu0
  %172 = vmatpush.bf16.msra.mxu0 %v141
  %173 = vmatpush.bf16.msra.mxu0 %v140
  %174 = vmatpush.bf16.msra.mxu0 %v139
  %175 = vmatpush.bf16.msra.mxu0 %v138
  %176 = vmatpush.bf16.msra.mxu0 %v137
  %177 = vmatpush.bf16.msra.mxu0 %v136
  %178 = vmatpush.bf16.msra.mxu0 %v135
  %179 = vmatpush.bf16.msra.mxu0 %v134
  %180 = vmatmul.bf16.gmra.mxu0 %v59
  %v181 = vpop.f32.mrf.mxu0
  %v182 = vadd.f32 %v168, %v181
  %v183 = vpop.f32.mrf.mxu0
  %v184 = vadd.f32 %v170, %v183
  %185 = vdwg.mxu0
  %186 = vst [vmem:[%s3] sm:$0xff] %v182
  %187 = vst [vmem:[%s3 + $0x8] sm:$0xff] %v184
  // Predicated region
  $region14: #{bert_bilstm_forward.7} parent=0 // pred_check
    _
  $region15: #{bert_bilstm_forward.7} parent=0 // pred_check_branch
    %189 = sbr.rel (0) target = $region17
  $region16: #{bert_bilstm_forward.7} parent=0 // pred_region
    _
  $region17: #{bert_bilstm_forward.7} parent=0 // pred_fallthru
    _
  // Predicated region
  $region18: #{bert_bilstm_forward.7} parent=0 // pred_check
    _
  $region19: #{bert_bilstm_forward.7} parent=0 // pred_check_branch
    %191 = sbr.rel (0) target = $region21
  $region20: #{bert_bilstm_forward.7} parent=0 // pred_region
    _
  $region21: #{bert_bilstm_forward.7} parent=0 // pred_fallthru
    _

// kernel: bert_bilstm_forward.6
$region0: #{bert_bilstm_forward.6}
  #allocation0 [shape = 'u32[]', space=smem, size = 0x4, offset = 0x4, fixed_abs, tag = 'smem constant byte address 0x4 - core index']
  #allocation1 [shape = 'u32[72,128]{1,0:T(1,128)}', space=vmem, size = 0x9000, scoped, tag = 'internal scratch']
  #allocation2 [shape = 'f32[2,128]{1,0:T(2,128)}', space=vmem, size = 0x400, scoped, tag = 'scratch operand']
  #allocation3 [shape = 'f32[2,128]{1,0:T(2,128)}', space=vmem, size = 0x400, scoped, tag = 'scratch operand']
  %s0 = inlined_call_operand.vmem [shape: f32[8,2,1024], index: 0, kind: input, shape index: {}]
  %s1 = inlined_call_operand.vmem [shape: bf16[128,1024], index: 1, kind: input, shape index: {}]
  %s2 = inlined_call_operand.vmem [shape: bf16[8,2,256], index: 2, kind: output, shape index: {}]
  %s3 = sld [smem:[#allocation0]]
  $region151: #{bert_bilstm_forward.6} parent=0
    _
  %s5 = ssub.s32 1, %s3
  %s6 = scalar_select 0, %s5, %s3
  $region1: #{bert_bilstm_forward.6} parent=0
    #allocation4 [shape = 'u8[65536]{0}', space=vmem, size = 0x10000, scoped, tag = 'input window, operand 0']
    #allocation5 [shape = 'u8[262144]{0}', space=vmem, size = 0x40000, scoped, tag = 'input window, operand 1']
    #allocation6 [shape = 'u8[8192]{0}', space=vmem, size = 0x2000, scoped, tag = 'output window, operand 0']
    loop: start=0, step=1, limit=4
    $region2: #{bert_bilstm_forward.6} parent=1 // loop_pre_header
      _
    $region3: #{bert_bilstm_forward.6} parent=1 // loop_header
      %s8 = sphi 0, %s12
      %p9 = scmp.ge.s32.totalorder %s8, 4
      %s15 = sphi 0, %s27
      %s16 = sphi 0, %s23
      %s17 = sphi 0, %s15
      %s18 = sphi 0, %s16
      %s19 = sphi 0, %s17
      %s20 = sphi 0, %s18
      %s40 = sphi 0, %s42
      %s43 = sphi 0, %s40
      %s44 = sphi 0, %s43
      %s60 = sphi 0, %s44
      %s66 = sphi 0, %s68
      %s69 = sphi 0, %s66
      %s70 = sphi 0, %s69
      %s86 = sphi 0, %s70
      %s102 = sphi 0, %s104
      %s105 = sphi 0, %s102
      %s106 = sphi 0, %s105
      %s122 = sphi 0, %s106
    $region4: #{bert_bilstm_forward.6} parent=1 // loop_header_branch
      %11 = sbr.rel (%p9) target = $region8
    $region5: #{bert_bilstm_forward.6} parent=1 // loop_body
      %s13 = ssub.s32 %s8, 1
      %s14 = ssub.s32 %s8, 2
      %s21 = sadd.s32 1, %s16
      %p22 = scmp.ge.s32.totalorder %s21, 1
      %s23 = scalar_select %p22, 0, %s21
      %s24 = sadd.s32 1, %s15
      %s25 = scalar_select %p22, %s24, %s15
      %p26 = scmp.ge.s32.totalorder %s25, 2
      %s27 = scalar_select %p26, 0, %s25
      %s28 = smul.u32 %s16, 2
      %s29 = ssub.s32 0, %s28
      %s30 = smul.u32 %s15, %s29
      %s31 = sadd.s32 %s16, %s30
      %s32 = smul.u32 %s23, 2
      %s33 = ssub.s32 0, %s32
      %s34 = smul.u32 %s27, %s33
      %s35 = sadd.s32 %s23, %s34
      %s36 = ssub.s32 %s31, %s35
      %s37 = ssub.s32 %s15, %s27
      %s38 = sor.u32 %s36, %s37
      %p39 = scmp.eq.s32.totalorder %s38, 0
      %s41 = sadd.s32 %s40, 1
      %s42 = scalar_select %p39, %s40, %s41
      %p45 = pneg %p39
      %p46 = scmp.eq.s32.totalorder %s8, 1
      %p47 = por %p45, %p46
      %p48 = scmp.ne.s32.totalorder %s40, %s43
      %p49 = scmp.eq.s32.totalorder %s8, 0
      %p50 = por %p48, %p49
      %p51 = scmp.ne.s32.totalorder %s40, %s43
      %p52 = scmp.eq.s32.totalorder %s13, 1
      %p53 = por %p51, %p52
      %p54 = scmp.ne.s32.totalorder %s43, %s44
      %p55 = scmp.eq.s32.totalorder %s13, 0
      %p56 = por %p54, %p55
      %p57 = scmp.ne.s32.totalorder %s43, %s44
      %p58 = scmp.eq.s32.totalorder %s14, 1
      %p59 = por %p57, %p58
      %p61 = scmp.ne.s32.totalorder %s44, %s60
      %p62 = scmp.eq.s32.totalorder %s14, 0
      %p63 = por %p61, %p62
      %s64 = ssub.s32 %s15, %s27
      %p65 = scmp.eq.s32.totalorder %s64, 0
      %s67 = sadd.s32 %s66, 1
      %s68 = scalar_select %p65, %s66, %s67
      %p71 = pneg %p65
      %p72 = scmp.eq.s32.totalorder %s8, 1
      %p73 = por %p71, %p72
      %p74 = scmp.ne.s32.totalorder %s66, %s69
      %p75 = scmp.eq.s32.totalorder %s8, 0
      %p76 = por %p74, %p75
      %p77 = scmp.ne.s32.totalorder %s66, %s69
      %p78 = scmp.eq.s32.totalorder %s13, 1
      %p79 = por %p77, %p78
      %p80 = scmp.ne.s32.totalorder %s69, %s70
      %p81 = scmp.eq.s32.totalorder %s13, 0
      %p82 = por %p80, %p81
      %p83 = scmp.ne.s32.totalorder %s69, %s70
      %p84 = scmp.eq.s32.totalorder %s14, 1
      %p85 = por %p83, %p84
      %p87 = scmp.ne.s32.totalorder %s70, %s86
      %p88 = scmp.eq.s32.totalorder %s14, 0
      %p89 = por %p87, %p88
      %s90 = smul.u32 %s16, 2
      %s91 = ssub.s32 0, %s90
      %s92 = smul.u32 %s15, %s91
      %s93 = sadd.s32 %s16, %s92
      %s94 = smul.u32 %s23, 2
      %s95 = ssub.s32 0, %s94
      %s96 = smul.u32 %s27, %s95
      %s97 = sadd.s32 %s23, %s96
      %s98 = ssub.s32 %s93, %s97
      %s99 = ssub.s32 %s15, %s27
      %s100 = sor.u32 %s98, %s99
      %p101 = scmp.eq.s32.totalorder %s100, 0
      %s103 = sadd.s32 %s102, 1
      %s104 = scalar_select %p101, %s102, %s103
      %p107 = pneg %p101
      %p108 = scmp.eq.s32.totalorder %s8, 1
      %p109 = por %p107, %p108
      %p110 = scmp.ne.s32.totalorder %s102, %s105
      %p111 = scmp.eq.s32.totalorder %s8, 0
      %p112 = por %p110, %p111
      %p113 = scmp.ne.s32.totalorder %s102, %s105
      %p114 = scmp.eq.s32.totalorder %s13, 1
      %p115 = por %p113, %p114
      %p116 = scmp.ne.s32.totalorder %s105, %s106
      %p117 = scmp.eq.s32.totalorder %s13, 0
      %p118 = por %p116, %p117
      %p119 = scmp.ne.s32.totalorder %s105, %s106
      %p120 = scmp.eq.s32.totalorder %s14, 1
      %p121 = por %p119, %p120
      %p123 = scmp.ne.s32.totalorder %s106, %s122
      %p124 = scmp.eq.s32.totalorder %s14, 0
      %p125 = por %p123, %p124
      %p126 = scmp.le.s32.totalorder 1, %s8
      %p127 = scmp.lt.s32.totalorder %s8, 3
      %p128 = pnand %p126, %p127
      %p129 = pneg %p128
      // Predicated region
      $region9: #{bert_bilstm_forward.6} parent=5 // pred_check
        _
      $region10: #{bert_bilstm_forward.6} parent=5 // pred_check_branch
        %131 = sbr.rel (%p128) target = $region12
      $region11: #{bert_bilstm_forward.6} parent=5 // pred_region
        %s132 = ssub.s32 %s8, 1
      $region12: #{bert_bilstm_forward.6} parent=5 // pred_fallthru
        _
      %p133 = scmp.lt.s32.totalorder %s8, 2
      // Predicated region
      $region13: #{bert_bilstm_forward.6} parent=5 // pred_check
        %p134 = pneg %p133
      $region14: #{bert_bilstm_forward.6} parent=5 // pred_check_branch
        %136 = sbr.rel (%p134) target = $region16
      $region15: #{bert_bilstm_forward.6} parent=5 // pred_region
        // Predicated region
        $region17: #{bert_bilstm_forward.6} parent=15 // pred_check
          %p137 = pneg %p50
        $region18: #{bert_bilstm_forward.6} parent=15 // pred_check_branch
          %139 = sbr.rel (%p137) target = $region20
        $region19: #{bert_bilstm_forward.6} parent=15 // pred_region
          %s140 = sand.u32 %s40, 1
          %s141 = sand.u32 %s40, 1
          %s142 = smul.addr %s141, 64
          %s143 = scalar_lea.vmem [#allocation4], %s142
          %s144 = smul.u32 %s16, 2
          %s145 = ssub.s32 0, %s144
          %s146 = smul.u32 %s15, %s145
          %s147 = sadd.s32 %s16, %s146
          %s148 = smul.u32 8, %s147
          %s149 = smul.u32 4, %s15
          %s150 = smul.addr %s148, 8
          %s151 = sadd.s32 %s149, %s150
          %s152 = smul.addr %s151, 2
          %s153 = scalar_lea.vmem %s0, %s152
          // Predicated region
          $region21: #{bert_bilstm_forward.6} parent=19 // pred_check
            _
          $region22: #{bert_bilstm_forward.6} parent=19 // pred_check_branch
            %155 = sbr.rel (0) target = $region24
          $region23: #{bert_bilstm_forward.6} parent=19 // pred_region
            // Predicated region
            $region25: #{bert_bilstm_forward.6} parent=23 // pred_check
              _
            $region26: #{bert_bilstm_forward.6} parent=23 // pred_check_branch
              %157 = sbr.rel (0) target = $region28
            $region27: #{bert_bilstm_forward.6} parent=23 // pred_region
              // Predicated region
              $region40: #{bert_bilstm_forward.6} parent=27 // pred_check
                _
              $region41: #{bert_bilstm_forward.6} parent=27 // pred_check_branch
                %187 = sbr.rel (0) target = $region43
              $region42: #{bert_bilstm_forward.6} parent=27 // pred_region
                loop: start=0, step=1, limit=1
                $region44: #{bert_bilstm_forward.6} parent=42 // loop_pre_header
                  _
                $region45: #{bert_bilstm_forward.6} parent=42 // loop_header
                  %s189 = sphi 0, %s193
                  %p190 = scmp.ge.s32.totalorder %s189, 1
                  %s194 = sphi %s153, %s153
                  %s195 = sphi %s143, %s143
                $region46: #{bert_bilstm_forward.6} parent=42 // loop_header_branch
                  %192 = sbr.rel (%p190) target = $region50
                $region47: #{bert_bilstm_forward.6} parent=42 // loop_body
                  %v196 = vld [vmem:[%s194] sm:$0xff]
                  %197 = vst [vmem:[%s195] sm:$0xff] %v196
                  %v198 = vld [vmem:[%s194 + $0x10] sm:$0xff]
                  %199 = vst [vmem:[%s195 + $0x8] sm:$0xff] %v198
                  %v200 = vld [vmem:[%s194 + $0x20] sm:$0xff]
                  %201 = vst [vmem:[%s195 + $0x10] sm:$0xff] %v200
                  %v202 = vld [vmem:[%s194 + $0x30] sm:$0xff]
                  %203 = vst [vmem:[%s195 + $0x18] sm:$0xff] %v202
                  %v204 = vld [vmem:[%s194 + $0x40] sm:$0xff]
                  %205 = vst [vmem:[%s195 + $0x20] sm:$0xff] %v204
                  %v206 = vld [vmem:[%s194 + $0x50] sm:$0xff]
                  %207 = vst [vmem:[%s195 + $0x28] sm:$0xff] %v206
                  %v208 = vld [vmem:[%s194 + $0x60] sm:$0xff]
                  %209 = vst [vmem:[%s195 + $0x30] sm:$0xff] %v208
                  %v210 = vld [vmem:[%s194 + $0x70] sm:$0xff]
                  %211 = vst [vmem:[%s195 + $0x38] sm:$0xff] %v210
                $region48: #{bert_bilstm_forward.6} parent=42 // loop_footer
                  %s193 = sadd.s32 1, %s189
                $region49: #{bert_bilstm_forward.6} parent=42 // loop_footer_branch
                  %188 = sbr.rel target = $region45
                $region50: #{bert_bilstm_forward.6} parent=42 // loop_exit
                  _
              $region43: #{bert_bilstm_forward.6} parent=27 // pred_fallthru
                _
              // Predicated region
              $region51: #{bert_bilstm_forward.6} parent=27 // pred_check
                _
              $region52: #{bert_bilstm_forward.6} parent=27 // pred_check_branch
                %213 = sbr.rel target = $region54
              $region53: #{bert_bilstm_forward.6} parent=27 // pred_region
                _
              $region54: #{bert_bilstm_forward.6} parent=27 // pred_fallthru
                _
            $region28: #{bert_bilstm_forward.6} parent=23 // pred_fallthru
              _
            // Predicated region
            $region29: #{bert_bilstm_forward.6} parent=23 // pred_check
              _
            $region30: #{bert_bilstm_forward.6} parent=23 // pred_check_branch
              %159 = sbr.rel target = $region32
            $region31: #{bert_bilstm_forward.6} parent=23 // pred_region
              %s161 = ssub.s32 256, 1
              loop: start=0, step=1, limit=1
              $region33: #{bert_bilstm_forward.6} parent=31 // loop_pre_header
                _
              $region34: #{bert_bilstm_forward.6} parent=31 // loop_header
                %s163 = sphi 0, %s167
                %p164 = scmp.ge.s32.totalorder %s163, 1
                %s168 = sphi %s153, %s153
                %s169 = sphi %s143, %s143
              $region35: #{bert_bilstm_forward.6} parent=31 // loop_header_branch
                %166 = sbr.rel (%p164) target = $region39
              $region36: #{bert_bilstm_forward.6} parent=31 // loop_body
                %v170 = vld [vmem:[%s168] sm:%s161]
                %171 = vst [vmem:[%s169] sm:%s161] %v170
                %v172 = vld [vmem:[%s168 + $0x10] sm:%s161]
                %173 = vst [vmem:[%s169 + $0x8] sm:%s161] %v172
                %v174 = vld [vmem:[%s168 + $0x20] sm:%s161]
                %175 = vst [vmem:[%s169 + $0x10] sm:%s161] %v174
                %v176 = vld [vmem:[%s168 + $0x30] sm:%s161]
                %177 = vst [vmem:[%s169 + $0x18] sm:%s161] %v176
                %v178 = vld [vmem:[%s168 + $0x40] sm:%s161]
                %179 = vst [vmem:[%s169 + $0x20] sm:%s161] %v178
                %v180 = vld [vmem:[%s168 + $0x50] sm:%s161]
                %181 = vst [vmem:[%s169 + $0x28] sm:%s161] %v180
                %v182 = vld [vmem:[%s168 + $0x60] sm:%s161]
                %183 = vst [vmem:[%s169 + $0x30] sm:%s161] %v182
                %v184 = vld [vmem:[%s168 + $0x70] sm:%s161]
                %185 = vst [vmem:[%s169 + $0x38] sm:%s161] %v184
              $region37: #{bert_bilstm_forward.6} parent=31 // loop_footer
                %s167 = sadd.s32 1, %s163
              $region38: #{bert_bilstm_forward.6} parent=31 // loop_footer_branch
                %162 = sbr.rel target = $region34
              $region39: #{bert_bilstm_forward.6} parent=31 // loop_exit
                _
            $region32: #{bert_bilstm_forward.6} parent=23 // pred_fallthru
              _
          $region24: #{bert_bilstm_forward.6} parent=19 // pred_fallthru
            _
          %214 = vnop
        $region20: #{bert_bilstm_forward.6} parent=15 // pred_fallthru
          _
        // Predicated region
        $region55: #{bert_bilstm_forward.6} parent=15 // pred_check
          %p215 = pneg %p76
        $region56: #{bert_bilstm_forward.6} parent=15 // pred_check_branch
          %217 = sbr.rel (%p215) target = $region58
        $region57: #{bert_bilstm_forward.6} parent=15 // pred_region
          %s218 = sand.u32 %s66, 1
          %s219 = sand.u32 %s66, 1
          %s220 = smul.addr %s219, 256
          %s221 = scalar_lea.vmem [#allocation5], %s220
          %s222 = smul.u32 4, %s15
          %s223 = smul.addr %s222, 4
          %s224 = scalar_lea.vmem %s1, %s223
          // Predicated region
          $region59: #{bert_bilstm_forward.6} parent=57 // pred_check
            _
          $region60: #{bert_bilstm_forward.6} parent=57 // pred_check_branch
            %226 = sbr.rel (0) target = $region62
          $region61: #{bert_bilstm_forward.6} parent=57 // pred_region
            // Predicated region
            $region63: #{bert_bilstm_forward.6} parent=61 // pred_check
              _
            $region64: #{bert_bilstm_forward.6} parent=61 // pred_check_branch
              %228 = sbr.rel (0) target = $region66
            $region65: #{bert_bilstm_forward.6} parent=61 // pred_region
              loop: start=0, step=1, limit=1
              $region67: #{bert_bilstm_forward.6} parent=65 // loop_pre_header
                _
              $region68: #{bert_bilstm_forward.6} parent=65 // loop_header
                %s230 = sphi 0, %s234
                %p231 = scmp.ge.s32.totalorder %s230, 1
                %s235 = sphi %s224, %s224
                %s236 = sphi %s221, %s221
              $region69: #{bert_bilstm_forward.6} parent=65 // loop_header_branch
                %233 = sbr.rel (%p231) target = $region73
              $region70: #{bert_bilstm_forward.6} parent=65 // loop_body
                %v237 = vld [vmem:[%s235] sm:$0xff]
                %238 = vst [vmem:[%s236] sm:$0xff] %v237
                %v239 = vld [vmem:[%s235 + $0x8] sm:$0xff]
                %240 = vst [vmem:[%s236 + $0x8] sm:$0xff] %v239
                %v241 = vld [vmem:[%s235 + $0x20] sm:$0xff]
                %242 = vst [vmem:[%s236 + $0x10] sm:$0xff] %v241
                %v243 = vld [vmem:[%s235 + $0x28] sm:$0xff]
                %244 = vst [vmem:[%s236 + $0x18] sm:$0xff] %v243
                %v245 = vld [vmem:[%s235 + $0x40] sm:$0xff]
                %246 = vst [vmem:[%s236 + $0x20] sm:$0xff] %v245
                %v247 = vld [vmem:[%s235 + $0x48] sm:$0xff]
                %248 = vst [vmem:[%s236 + $0x28] sm:$0xff] %v247
                %v249 = vld [vmem:[%s235 + $0x60] sm:$0xff]
                %250 = vst [vmem:[%s236 + $0x30] sm:$0xff] %v249
                %v251 = vld [vmem:[%s235 + $0x68] sm:$0xff]
                %252 = vst [vmem:[%s236 + $0x38] sm:$0xff] %v251
                %v253 = vld [vmem:[%s235 + $0x80] sm:$0xff]
                %254 = vst [vmem:[%s236 + $0x40] sm:$0xff] %v253
                %v255 = vld [vmem:[%s235 + $0x88] sm:$0xff]
                %256 = vst [vmem:[%s236 + $0x48] sm:$0xff] %v255
                %v257 = vld [vmem:[%s235 + $0xa0] sm:$0xff]
                %258 = vst [vmem:[%s236 + $0x50] sm:$0xff] %v257
                %v259 = vld [vmem:[%s235 + $0xa8] sm:$0xff]
                %260 = vst [vmem:[%s236 + $0x58] sm:$0xff] %v259
                %v261 = vld [vmem:[%s235 + $0xc0] sm:$0xff]
                %262 = vst [vmem:[%s236 + $0x60] sm:$0xff] %v261
                %v263 = vld [vmem:[%s235 + $0xc8] sm:$0xff]
                %264 = vst [vmem:[%s236 + $0x68] sm:$0xff] %v263
                %v265 = vld [vmem:[%s235 + $0xe0] sm:$0xff]
                %266 = vst [vmem:[%s236 + $0x70] sm:$0xff] %v265
                %v267 = vld [vmem:[%s235 + $0xe8] sm:$0xff]
                %268 = vst [vmem:[%s236 + $0x78] sm:$0xff] %v267
                %v269 = vld [vmem:[%s235 + $0x100] sm:$0xff]
                %270 = vst [vmem:[%s236 + $0x80] sm:$0xff] %v269
                %v271 = vld [vmem:[%s235 + $0x108] sm:$0xff]
                %272 = vst [vmem:[%s236 + $0x88] sm:$0xff] %v271
                %v273 = vld [vmem:[%s235 + $0x120] sm:$0xff]
                %274 = vst [vmem:[%s236 + $0x90] sm:$0xff] %v273
                %v275 = vld [vmem:[%s235 + $0x128] sm:$0xff]
                %276 = vst [vmem:[%s236 + $0x98] sm:$0xff] %v275
                %v277 = vld [vmem:[%s235 + $0x140] sm:$0xff]
                %278 = vst [vmem:[%s236 + $0xa0] sm:$0xff] %v277
                %v279 = vld [vmem:[%s235 + $0x148] sm:$0xff]
                %280 = vst [vmem:[%s236 + $0xa8] sm:$0xff] %v279
                %v281 = vld [vmem:[%s235 + $0x160] sm:$0xff]
                %282 = vst [vmem:[%s236 + $0xb0] sm:$0xff] %v281
                %v283 = vld [vmem:[%s235 + $0x168] sm:$0xff]
                %284 = vst [vmem:[%s236 + $0xb8] sm:$0xff] %v283
                %v285 = vld [vmem:[%s235 + $0x180] sm:$0xff]
                %286 = vst [vmem:[%s236 + $0xc0] sm:$0xff] %v285
                %v287 = vld [vmem:[%s235 + $0x188] sm:$0xff]
                %288 = vst [vmem:[%s236 + $0xc8] sm:$0xff] %v287
                %v289 = vld [vmem:[%s235 + $0x1a0] sm:$0xff]
                %290 = vst [vmem:[%s236 + $0xd0] sm:$0xff] %v289
                %v291 = vld [vmem:[%s235 + $0x1a8] sm:$0xff]
                %292 = vst [vmem:[%s236 + $0xd8] sm:$0xff] %v291
                %v293 = vld [vmem:[%s235 + $0x1c0] sm:$0xff]
                %294 = vst [vmem:[%s236 + $0xe0] sm:$0xff] %v293
                %v295 = vld [vmem:[%s235 + $0x1c8] sm:$0xff]
                %296 = vst [vmem:[%s236 + $0xe8] sm:$0xff] %v295
                %v297 = vld [vmem:[%s235 + $0x1e0] sm:$0xff]
                %298 = vst [vmem:[%s236 + $0xf0] sm:$0xff] %v297
                %v299 = vld [vmem:[%s235 + $0x1e8] sm:$0xff]
                %300 = vst [vmem:[%s236 + $0xf8] sm:$0xff] %v299
              $region71: #{bert_bilstm_forward.6} parent=65 // loop_footer
                %s234 = sadd.s32 1, %s230
              $region72: #{bert_bilstm_forward.6} parent=65 // loop_footer_branch
                %229 = sbr.rel target = $region68
              $region73: #{bert_bilstm_forward.6} parent=65 // loop_exit
                _
            $region66: #{bert_bilstm_forward.6} parent=61 // pred_fallthru
              _
            // Predicated region
            $region74: #{bert_bilstm_forward.6} parent=61 // pred_check
              _
            $region75: #{bert_bilstm_forward.6} parent=61 // pred_check_branch
              %302 = sbr.rel target = $region77
            $region76: #{bert_bilstm_forward.6} parent=61 // pred_region
              _
            $region77: #{bert_bilstm_forward.6} parent=61 // pred_fallthru
              _
          $region62: #{bert_bilstm_forward.6} parent=57 // pred_fallthru
            _
          %303 = vnop
        $region58: #{bert_bilstm_forward.6} parent=15 // pred_fallthru
          _
      $region16: #{bert_bilstm_forward.6} parent=5 // pred_fallthru
        _
      %p304 = scmp.le.s32.totalorder 1, %s8
      %p305 = scmp.lt.s32.totalorder %s8, 3
      %p306 = pnand %p304, %p305
      %p307 = pneg %p306
      // Predicated region
      $region78: #{bert_bilstm_forward.6} parent=5 // pred_check
        _
      $region79: #{bert_bilstm_forward.6} parent=5 // pred_check_branch
        %309 = sbr.rel (%p306) target = $region81
      $region80: #{bert_bilstm_forward.6} parent=5 // pred_region
        %s310 = ssub.s32 %s8, 1
        %s311 = sand.u32 %s43, 1
        %s312 = sand.u32 %s43, 1
        %s313 = smul.addr %s312, 64
        %s314 = scalar_lea.vmem [#allocation4], %s313
        // Predicated region
        $region82: #{bert_bilstm_forward.6} parent=80 // pred_check
          %p315 = pneg %p56
        $region83: #{bert_bilstm_forward.6} parent=80 // pred_check_branch
          %317 = sbr.rel (%p315) target = $region85
        $region84: #{bert_bilstm_forward.6} parent=80 // pred_region
          _
        $region85: #{bert_bilstm_forward.6} parent=80 // pred_fallthru
          _
        %s318 = sand.u32 %s69, 1
        %s319 = sand.u32 %s69, 1
        %s320 = smul.addr %s319, 256
        %s321 = scalar_lea.vmem [#allocation5], %s320
        // Predicated region
        $region86: #{bert_bilstm_forward.6} parent=80 // pred_check
          %p322 = pneg %p82
        $region87: #{bert_bilstm_forward.6} parent=80 // pred_check_branch
          %324 = sbr.rel (%p322) target = $region89
        $region88: #{bert_bilstm_forward.6} parent=80 // pred_region
          _
        $region89: #{bert_bilstm_forward.6} parent=80 // pred_fallthru
          _
        %s325 = sand.u32 %s43, 1
        %s326 = sand.u32 %s43, 1
        %s327 = smul.addr %s326, 64
        %s328 = scalar_lea.vmem [#allocation4], %s327
        %p329 = pneg %p56
        %p330 = pneg %p53
        %s331 = sand.u32 %s69, 1
        %s332 = sand.u32 %s69, 1
        %s333 = smul.addr %s332, 256
        %s334 = scalar_lea.vmem [#allocation5], %s333
        %p335 = pneg %p82
        %p336 = pneg %p79
        %p337 = pneg %p118
        %p338 = pneg %p115
        %s339 = sand.u32 %s105, 1
        %s340 = sand.u32 %s105, 1
        %s341 = smul.addr %s340, 8
        %s342 = scalar_lea.vmem [#allocation6], %s341
        %s343 = smul.u32 %s18, 2
        %s344 = ssub.s32 0, %s343
        %s345 = smul.u32 %s17, %s344
        %s346 = sadd.s32 %s18, %s345
        %s347 = smul.u32 8, %s346
        %s348 = smul.u32 4, %s17
        %s349 = smul.u32 4, %s17
        %s350 = smul.u32 %s18, 2
        %s351 = ssub.s32 0, %s350
        %s352 = smul.u32 %s17, %s351
        %s353 = sadd.s32 %s18, %s352
        %s354 = smul.u32 8, %s353
        %p355 = scmp.eq.s32.totalorder %s18, 0
        // Predicated region
        $region90: #{bert_bilstm_forward.6} parent=80 // pred_check
          %p356 = pneg %p355
        $region91: #{bert_bilstm_forward.6} parent=80 // pred_check_branch
          %358 = sbr.rel (%p356) target = $region93
        $region92: #{bert_bilstm_forward.6} parent=80 // pred_region
          %359 = vst [vmem:[#allocation2] sm:$0x3] 0.0
          %360 = vst [vmem:[#allocation3] sm:$0x3] 0.0
        $region93: #{bert_bilstm_forward.6} parent=80 // pred_fallthru
          _
        %v361 = vld [vmem:[%s321] sm:$0xff]
        %v362 = vld [vmem:[%s321 + $0x8] sm:$0xff]
        %v363 = vld [vmem:[%s321 + $0x10] sm:$0xff]
        %v364 = vld [vmem:[%s321 + $0x18] sm:$0xff]
        %v365 = vld [vmem:[%s321 + $0x20] sm:$0xff]
        %v366 = vld [vmem:[%s321 + $0x28] sm:$0xff]
        %v367 = vld [vmem:[%s321 + $0x30] sm:$0xff]
        %v368 = vld [vmem:[%s321 + $0x38] sm:$0xff]
        %v369 = vld [vmem:[%s321 + $0x40] sm:$0xff]
        %v370 = vld [vmem:[%s321 + $0x48] sm:$0xff]
        %v371 = vld [vmem:[%s321 + $0x50] sm:$0xff]
        %v372 = vld [vmem:[%s321 + $0x58] sm:$0xff]
        %v373 = vld [vmem:[%s321 + $0x60] sm:$0xff]
        %v374 = vld [vmem:[%s321 + $0x68] sm:$0xff]
        %v375 = vld [vmem:[%s321 + $0x70] sm:$0xff]
        %v376 = vld [vmem:[%s321 + $0x78] sm:$0xff]
        %v377 = vld [vmem:[%s321 + $0x80] sm:$0xff]
        %v378 = vld [vmem:[%s321 + $0x88] sm:$0xff]
        %v379 = vld [vmem:[%s321 + $0x90] sm:$0xff]
        %v380 = vld [vmem:[%s321 + $0x98] sm:$0xff]
        %v381 = vld [vmem:[%s321 + $0xa0] sm:$0xff]
        %v382 = vld [vmem:[%s321 + $0xa8] sm:$0xff]
        %v383 = vld [vmem:[%s321 + $0xb0] sm:$0xff]
        %v384 = vld [vmem:[%s321 + $0xb8] sm:$0xff]
        %v385 = vld [vmem:[%s321 + $0xc0] sm:$0xff]
        %v386 = vld [vmem:[%s321 + $0xc8] sm:$0xff]
        %v387 = vld [vmem:[%s321 + $0xd0] sm:$0xff]
        %v388 = vld [vmem:[%s321 + $0xd8] sm:$0xff]
        %v389 = vld [vmem:[%s321 + $0xe0] sm:$0xff]
        %v390 = vld [vmem:[%s321 + $0xe8] sm:$0xff]
        %v391 = vld [vmem:[%s321 + $0xf0] sm:$0xff]
        %v392 = vld [vmem:[%s321 + $0xf8] sm:$0xff]
        %p393 = scmp.eq.s32.totalorder %s17, 0
        // Predicated region
        $region94: #{bert_bilstm_forward.6} parent=80 // pred_check
          %p394 = pneg %p393
        $region95: #{bert_bilstm_forward.6} parent=80 // pred_check_branch
          %396 = sbr.rel (%p394) target = $region97
        $region96: #{bert_bilstm_forward.6} parent=80 // pred_region
          %v397 = vld [vmem:[%s314] sm:$0xff]
          %v398 = vld [vmem:[#allocation2] sm:$0x3]
          %v399 = vpack.c.bf16 %v398, %v398
          %v432 = vunpack.c.l.b16 %v361
          %v433 = vunpack.c.h.b16 %v361
          %v434 = vunpack.c.l.b16 %v362
          %v435 = vunpack.c.h.b16 %v362
          %v436 = vunpack.c.l.b16 %v363
          %v437 = vunpack.c.h.b16 %v363
          %v438 = vunpack.c.l.b16 %v364
          %v439 = vunpack.c.h.b16 %v364
          %v440 = vunpack.c.l.b16 %v365
          %v441 = vunpack.c.h.b16 %v365
          %v442 = vunpack.c.l.b16 %v366
          %v443 = vunpack.c.h.b16 %v366
          %v444 = vunpack.c.l.b16 %v367
          %v445 = vunpack.c.h.b16 %v367
          %v446 = vunpack.c.l.b16 %v368
          %v447 = vunpack.c.h.b16 %v368
          %v448 = vunpack.c.l.b16 %v369
          %v449 = vunpack.c.h.b16 %v369
          %v450 = vunpack.c.l.b16 %v370
          %v451 = vunpack.c.h.b16 %v370
          %v452 = vunpack.c.l.b16 %v371
          %v453 = vunpack.c.h.b16 %v371
          %v454 = vunpack.c.l.b16 %v372
          %v455 = vunpack.c.h.b16 %v372
          %v456 = vunpack.c.l.b16 %v373
          %v457 = vunpack.c.h.b16 %v373
          %v458 = vunpack.c.l.b16 %v374
          %v459 = vunpack.c.h.b16 %v374
          %v460 = vunpack.c.l.b16 %v375
          %v461 = vunpack.c.h.b16 %v375
          %v462 = vunpack.c.l.b16 %v376
          %v463 = vunpack.c.h.b16 %v376
          %v464 = vunpack.c.l.b16 %v377
          %v465 = vunpack.c.h.b16 %v377
          %v466 = vunpack.c.l.b16 %v378
          %v467 = vunpack.c.h.b16 %v378
          %v468 = vunpack.c.l.b16 %v379
          %v469 = vunpack.c.h.b16 %v379
          %v470 = vunpack.c.l.b16 %v380
          %v471 = vunpack.c.h.b16 %v380
          %v472 = vunpack.c.l.b16 %v381
          %v473 = vunpack.c.h.b16 %v381
          %v474 = vunpack.c.l.b16 %v382
          %v475 = vunpack.c.h.b16 %v382
          %v476 = vunpack.c.l.b16 %v383
          %v477 = vunpack.c.h.b16 %v383
          %v478 = vunpack.c.l.b16 %v384
          %v479 = vunpack.c.h.b16 %v384
          %v480 = vunpack.c.l.b16 %v385
          %v481 = vunpack.c.h.b16 %v385
          %v482 = vunpack.c.l.b16 %v386
          %v483 = vunpack.c.h.b16 %v386
          %v484 = vunpack.c.l.b16 %v387
          %v485 = vunpack.c.h.b16 %v387
          %v486 = vunpack.c.l.b16 %v388
          %v487 = vunpack.c.h.b16 %v388
          %v488 = vunpack.c.l.b16 %v389
          %v489 = vunpack.c.h.b16 %v389
          %v490 = vunpack.c.l.b16 %v390
          %v491 = vunpack.c.h.b16 %v390
          %v492 = vunpack.c.l.b16 %v391
          %v493 = vunpack.c.h.b16 %v391
          %v494 = vunpack.c.l.b16 %v392
          %v495 = vunpack.c.h.b16 %v392
          %v496 = vpack.c.b16 %v436, %v432
          %v497 = vpack.c.b16 %v437, %v433
          %v498 = vpack.c.b16 %v438, %v434
          %v499 = vpack.c.b16 %v439, %v435
          %v500 = vpack.c.b16 %v444, %v440
          %v501 = vpack.c.b16 %v445, %v441
          %v502 = vpack.c.b16 %v446, %v442
          %v503 = vpack.c.b16 %v447, %v443
          %v504 = vpack.c.b16 %v452, %v448
          %v505 = vpack.c.b16 %v453, %v449
          %v506 = vpack.c.b16 %v454, %v450
          %v507 = vpack.c.b16 %v455, %v451
          %v508 = vpack.c.b16 %v460, %v456
          %v509 = vpack.c.b16 %v461, %v457
          %v510 = vpack.c.b16 %v462, %v458
          %v511 = vpack.c.b16 %v463, %v459
          %v512 = vpack.c.b16 %v468, %v464
          %v513 = vpack.c.b16 %v469, %v465
          %v514 = vpack.c.b16 %v470, %v466
          %v515 = vpack.c.b16 %v471, %v467
          %v516 = vpack.c.b16 %v476, %v472
          %v517 = vpack.c.b16 %v477, %v473
          %v518 = vpack.c.b16 %v478, %v474
          %v519 = vpack.c.b16 %v479, %v475
          %v520 = vpack.c.b16 %v484, %v480
          %v521 = vpack.c.b16 %v485, %v481
          %v522 = vpack.c.b16 %v486, %v482
          %v523 = vpack.c.b16 %v487, %v483
          %v524 = vpack.c.b16 %v492, %v488
          %v525 = vpack.c.b16 %v493, %v489
          %v526 = vpack.c.b16 %v494, %v490
          %v527 = vpack.c.b16 %v495, %v491
          %560 = vmatpush.bf16.msra.mxu0 %v524
          %561 = vmatpush.bf16.msra.mxu0 %v520
          %562 = vmatpush.bf16.msra.mxu0 %v516
          %563 = vmatpush.bf16.msra.mxu0 %v512
          %564 = vmatpush.bf16.msra.mxu0 %v508
          %565 = vmatpush.bf16.msra.mxu0 %v504
          %566 = vmatpush.bf16.msra.mxu0 %v500
          %567 = vmatpush.bf16.msra.mxu0 %v496
          %568 = vmatmul.bf16.gmra.mxu0 %v399
          %v569 = vpop.f32.mrf.mxu0
          %v570 = vadd.f32 0.0, %v569
          %v571 = vpop.f32.mrf.mxu0
          %572 = vdwg.mxu0
          %573 = vmatpush.bf16.msra.mxu0 %v525
          %574 = vmatpush.bf16.msra.mxu0 %v521
          %575 = vmatpush.bf16.msra.mxu0 %v517
          %576 = vmatpush.bf16.msra.mxu0 %v513
          %577 = vmatpush.bf16.msra.mxu0 %v509
          %578 = vmatpush.bf16.msra.mxu0 %v505
          %579 = vmatpush.bf16.msra.mxu0 %v501
          %580 = vmatpush.bf16.msra.mxu0 %v497
          %581 = vmatmul.bf16.gmra.mxu0 %v399
          %v582 = vpop.f32.mrf.mxu0
          %v583 = vadd.f32 0.0, %v582
          %v584 = vpop.f32.mrf.mxu0
          %585 = vdwg.mxu0
          %586 = vmatpush.bf16.msra.mxu0 %v526
          %587 = vmatpush.bf16.msra.mxu0 %v522
          %588 = vmatpush.bf16.msra.mxu0 %v518
          %589 = vmatpush.bf16.msra.mxu0 %v514
          %590 = vmatpush.bf16.msra.mxu0 %v510
          %591 = vmatpush.bf16.msra.mxu0 %v506
          %592 = vmatpush.bf16.msra.mxu0 %v502
          %593 = vmatpush.bf16.msra.mxu0 %v498
          %594 = vmatmul.bf16.gmra.mxu0 %v399
          %v595 = vpop.f32.mrf.mxu0
          %v596 = vadd.f32 0.0, %v595
          %v597 = vpop.f32.mrf.mxu0
          %598 = vdwg.mxu0
          %599 = vmatpush.bf16.msra.mxu0 %v527
          %600 = vmatpush.bf16.msra.mxu0 %v523
          %601 = vmatpush.bf16.msra.mxu0 %v519
          %602 = vmatpush.bf16.msra.mxu0 %v515
          %603 = vmatpush.bf16.msra.mxu0 %v511
          %604 = vmatpush.bf16.msra.mxu0 %v507
          %605 = vmatpush.bf16.msra.mxu0 %v503
          %606 = vmatpush.bf16.msra.mxu0 %v499
          %607 = vmatmul.bf16.gmra.mxu0 %v399
          %v608 = vpop.f32.mrf.mxu0
          %v609 = vadd.f32 0.0, %v608
          %v610 = vpop.f32.mrf.mxu0
          %611 = vdwg.mxu0
          %v616 = vrot.slane %v583, 6
          %v617 = vrot.slane %v596, 4
          %v618 = vrot.slane %v609, 2
          %vm619 = vcmask 1041408
          %v620 = vsel %vm619, %v570, %v616
          %vm621 = vcmask 1045508
          %v622 = vsel %vm621, %v617, %v618
          %vm623 = vcmask 1043456
          %v624 = vsel %vm623, %v620, %v622
          %v626 = vadd.f32 %v397, %v624
          %v627 = vxor.u32 %v626, 2147483648
          %v628 = vmul.f32 %v627, 1.442695
          %v629 = vpow.pop %v628
          %v630 = vadd.f32 %v629, 1.0
          %v631 = vrcp.pop %v630
          %v632 = vmul.f32 %v630, %v631
          %v633 = vsub.f32 1.0, %v632
          %v634 = vmul.f32 %v631, %v633
          %v635 = vadd.f32 %v631, %v634
          %vm636 = vweird.f32 %v630
          %vm637 = vweird.f32 %v631
          %vm638 = vmor %vm636, %vm637
          %v639 = vsel %vm638, %v631, %v635
          %v640 = vand.u32 2147483647, %v630
          %vm641 = vcmp.eq.f32.partialorder %v640, 8.507059e+37
          %v642 = vand.u32 %v630, 2147483648
          %v643 = vor.u32 1.1754944e-38, %v642
          %v644 = vsel %vm641, %v643, %v639
          %v645 = vmul.f32 1.0, %v644
          %v647 = vrot.slane %v626, 2
          %v649 = vxor.u32 %v647, 2147483648
          %v650 = vmul.f32 %v649, 1.442695
          %v651 = vpow.pop %v650
          %v652 = vadd.f32 %v651, 1.0
          %v653 = vrcp.pop %v652
          %v654 = vmul.f32 %v652, %v653
          %v655 = vsub.f32 1.0, %v654
          %v656 = vmul.f32 %v653, %v655
          %v657 = vadd.f32 %v653, %v656
          %vm658 = vweird.f32 %v652
          %vm659 = vweird.f32 %v653
          %vm660 = vmor %vm658, %vm659
          %v661 = vsel %vm660, %v653, %v657
          %v662 = vand.u32 2147483647, %v652
          %vm663 = vcmp.eq.f32.partialorder %v662, 8.507059e+37
          %v664 = vand.u32 %v652, 2147483648
          %v665 = vor.u32 1.1754944e-38, %v664
          %v666 = vsel %vm663, %v665, %v661
          %v667 = vmul.f32 1.0, %v666
          %v668 = vrot.slane %v626, 4
          %v670 = vtanh.pop %v668
          %v671 = vrot.slane %v626, 6
          %v673 = vxor.u32 %v671, 2147483648
          %v674 = vmul.f32 %v673, 1.442695
          %v675 = vpow.pop %v674
          %v676 = vadd.f32 %v675, 1.0
          %v677 = vrcp.pop %v676
          %v678 = vmul.f32 %v676, %v677
          %v679 = vsub.f32 1.0, %v678
          %v680 = vmul.f32 %v677, %v679
          %v681 = vadd.f32 %v677, %v680
          %vm682 = vweird.f32 %v676
          %vm683 = vweird.f32 %v677
          %vm684 = vmor %vm682, %vm683
          %v685 = vsel %vm684, %v677, %v681
          %v686 = vand.u32 2147483647, %v676
          %vm687 = vcmp.eq.f32.partialorder %v686, 8.507059e+37
          %v688 = vand.u32 %v676, 2147483648
          %v689 = vor.u32 1.1754944e-38, %v688
          %v690 = vsel %vm687, %v689, %v685
          %v691 = vmul.f32 1.0, %v690
          %v692 = vld [vmem:[#allocation3] sm:$0x3]
          %v693 = vmul.f32 %v667, %v692
          %v694 = vmul.f32 %v645, %v670
          %v695 = vadd.f32 %v693, %v694
          %v696 = vtanh.pop %v695
          %v697 = vmul.f32 %v691, %v696
          %698 = vst [vmem:[#allocation3] sm:$0x3] %v695
          %699 = vst [vmem:[#allocation2] sm:$0x3] %v697
          %v700 = vpack.c.bf16 %v697, %v697
          %701 = vst [vmem:[%s342] sm:$0x1] %v700
          %s702 = scalar_lea.vmem %s314, 8 [#allocation4]
          %v703 = vld [vmem:[%s702] sm:$0xff]
          %v704 = vld [vmem:[#allocation2] sm:$0x3]
          %v705 = vpack.c.bf16 %v704, %v704
          %706 = vmatpush.bf16.msra.mxu0 %v524
          %707 = vmatpush.bf16.msra.mxu0 %v520
          %708 = vmatpush.bf16.msra.mxu0 %v516
          %709 = vmatpush.bf16.msra.mxu0 %v512
          %710 = vmatpush.bf16.msra.mxu0 %v508
          %711 = vmatpush.bf16.msra.mxu0 %v504
          %712 = vmatpush.bf16.msra.mxu0 %v500
          %713 = vmatpush.bf16.msra.mxu0 %v496
          %714 = vmatmul.bf16.gmra.mxu0 %v705
          %v715 = vpop.f32.mrf.mxu0
          %v716 = vadd.f32 0.0, %v715
          %v717 = vpop.f32.mrf.mxu0
          %718 = vdwg.mxu0
          %719 = vmatpush.bf16.msra.mxu0 %v525
          %720 = vmatpush.bf16.msra.mxu0 %v521
          %721 = vmatpush.bf16.msra.mxu0 %v517
          %722 = vmatpush.bf16.msra.mxu0 %v513
          %723 = vmatpush.bf16.msra.mxu0 %v509
          %724 = vmatpush.bf16.msra.mxu0 %v505
          %725 = vmatpush.bf16.msra.mxu0 %v501
          %726 = vmatpush.bf16.msra.mxu0 %v497
          %727 = vmatmul.bf16.gmra.mxu0 %v705
          %v728 = vpop.f32.mrf.mxu0
          %v729 = vadd.f32 0.0, %v728
          %v730 = vpop.f32.mrf.mxu0
          %731 = vdwg.mxu0
          %732 = vmatpush.bf16.msra.mxu0 %v526
          %733 = vmatpush.bf16.msra.mxu0 %v522
          %734 = vmatpush.bf16.msra.mxu0 %v518
          %735 = vmatpush.bf16.msra.mxu0 %v514
          %736 = vmatpush.bf16.msra.mxu0 %v510
          %737 = vmatpush.bf16.msra.mxu0 %v506
          %738 = vmatpush.bf16.msra.mxu0 %v502
          %739 = vmatpush.bf16.msra.mxu0 %v498
          %740 = vmatmul.bf16.gmra.mxu0 %v705
          %v741 = vpop.f32.mrf.mxu0
          %v742 = vadd.f32 0.0, %v741
          %v743 = vpop.f32.mrf.mxu0
          %744 = vdwg.mxu0
          %745 = vmatpush.bf16.msra.mxu0 %v527
          %746 = vmatpush.bf16.msra.mxu0 %v523
          %747 = vmatpush.bf16.msra.mxu0 %v519
          %748 = vmatpush.bf16.msra.mxu0 %v515
          %749 = vmatpush.bf16.msra.mxu0 %v511
          %750 = vmatpush.bf16.msra.mxu0 %v507
          %751 = vmatpush.bf16.msra.mxu0 %v503
          %752 = vmatpush.bf16.msra.mxu0 %v499
          %753 = vmatmul.bf16.gmra.mxu0 %v705
          %v754 = vpop.f32.mrf.mxu0
          %v755 = vadd.f32 0.0, %v754
          %v756 = vpop.f32.mrf.mxu0
          %757 = vdwg.mxu0
          %v762 = vrot.slane %v729, 6
          %v763 = vrot.slane %v742, 4
          %v764 = vrot.slane %v755, 2
          %v765 = vsel %vm619, %v716, %v762
          %v766 = vsel %vm621, %v763, %v764
          %v767 = vsel %vm623, %v765, %v766
          %v769 = vadd.f32 %v703, %v767
          %v770 = vxor.u32 %v769, 2147483648
          %v771 = vmul.f32 %v770, 1.442695
          %v772 = vpow.pop %v771
          %v773 = vadd.f32 %v772, 1.0
          %v774 = vrcp.pop %v773
          %v775 = vmul.f32 %v773, %v774
          %v776 = vsub.f32 1.0, %v775
          %v777 = vmul.f32 %v774, %v776
          %v778 = vadd.f32 %v774, %v777
          %vm779 = vweird.f32 %v773
          %vm780 = vweird.f32 %v774
          %vm781 = vmor %vm779, %vm780
          %v782 = vsel %vm781, %v774, %v778
          %v783 = vand.u32 2147483647, %v773
          %vm784 = vcmp.eq.f32.partialorder %v783, 8.507059e+37
          %v785 = vand.u32 %v773, 2147483648
          %v786 = vor.u32 1.1754944e-38, %v785
          %v787 = vsel %vm784, %v786, %v782
          %v788 = vmul.f32 1.0, %v787
          %v790 = vrot.slane %v769, 2
          %v792 = vxor.u32 %v790, 2147483648
          %v793 = vmul.f32 %v792, 1.442695
          %v794 = vpow.pop %v793
          %v795 = vadd.f32 %v794, 1.0
          %v796 = vrcp.pop %v795
          %v797 = vmul.f32 %v795, %v796
          %v798 = vsub.f32 1.0, %v797
          %v799 = vmul.f32 %v796, %v798
          %v800 = vadd.f32 %v796, %v799
          %vm801 = vweird.f32 %v795
          %vm802 = vweird.f32 %v796
          %vm803 = vmor %vm801, %vm802
          %v804 = vsel %vm803, %v796, %v800
          %v805 = vand.u32 2147483647, %v795
          %vm806 = vcmp.eq.f32.partialorder %v805, 8.507059e+37
          %v807 = vand.u32 %v795, 2147483648
          %v808 = vor.u32 1.1754944e-38, %v807
          %v809 = vsel %vm806, %v808, %v804
          %v810 = vmul.f32 1.0, %v809
          %v811 = vrot.slane %v769, 4
          %v813 = vtanh.pop %v811
          %v814 = vrot.slane %v769, 6
          %v816 = vxor.u32 %v814, 2147483648
          %v817 = vmul.f32 %v816, 1.442695
          %v818 = vpow.pop %v817
          %v819 = vadd.f32 %v818, 1.0
          %v820 = vrcp.pop %v819
          %v821 = vmul.f32 %v819, %v820
          %v822 = vsub.f32 1.0, %v821
          %v823 = vmul.f32 %v820, %v822
          %v824 = vadd.f32 %v820, %v823
          %vm825 = vweird.f32 %v819
          %vm826 = vweird.f32 %v820
          %vm827 = vmor %vm825, %vm826
          %v828 = vsel %vm827, %v820, %v824
          %v829 = vand.u32 2147483647, %v819
          %vm830 = vcmp.eq.f32.partialorder %v829, 8.507059e+37
          %v831 = vand.u32 %v819, 2147483648
          %v832 = vor.u32 1.1754944e-38, %v831
          %v833 = vsel %vm830, %v832, %v828
          %v834 = vmul.f32 1.0, %v833
          %v835 = vld [vmem:[#allocation3] sm:$0x3]
          %v836 = vmul.f32 %v810, %v835
          %v837 = vmul.f32 %v788, %v813
          %v838 = vadd.f32 %v836, %v837
          %v839 = vtanh.pop %v838
          %v840 = vmul.f32 %v834, %v839
          %841 = vst [vmem:[#allocation3] sm:$0x3] %v838
          %842 = vst [vmem:[#allocation2] sm:$0x3] %v840
          %v843 = vpack.c.bf16 %v840, %v840
          %s844 = scalar_lea.vmem %s342, 1 [#allocation6]
          %845 = vst [vmem:[%s844] sm:$0x1] %v843
          %s846 = scalar_lea.vmem %s314, 16 [#allocation4]
          %v847 = vld [vmem:[%s846] sm:$0xff]
          %v848 = vld [vmem:[#allocation2] sm:$0x3]
          %v849 = vpack.c.bf16 %v848, %v848
          %850 = vmatpush.bf16.msra.mxu0 %v524
          %851 = vmatpush.bf16.msra.mxu0 %v520
          %852 = vmatpush.bf16.msra.mxu0 %v516
          %853 = vmatpush.bf16.msra.mxu0 %v512
          %854 = vmatpush.bf16.msra.mxu0 %v508
          %855 = vmatpush.bf16.msra.mxu0 %v504
          %856 = vmatpush.bf16.msra.mxu0 %v500
          %857 = vmatpush.bf16.msra.mxu0 %v496
          %858 = vmatmul.bf16.gmra.mxu0 %v849
          %v859 = vpop.f32.mrf.mxu0
          %v860 = vadd.f32 0.0, %v859
          %v861 = vpop.f32.mrf.mxu0
          %862 = vdwg.mxu0
          %863 = vmatpush.bf16.msra.mxu0 %v525
          %864 = vmatpush.bf16.msra.mxu0 %v521
          %865 = vmatpush.bf16.msra.mxu0 %v517
          %866 = vmatpush.bf16.msra.mxu0 %v513
          %867 = vmatpush.bf16.msra.mxu0 %v509
          %868 = vmatpush.bf16.msra.mxu0 %v505
          %869 = vmatpush.bf16.msra.mxu0 %v501
          %870 = vmatpush.bf16.msra.mxu0 %v497
          %871 = vmatmul.bf16.gmra.mxu0 %v849
          %v872 = vpop.f32.mrf.mxu0
          %v873 = vadd.f32 0.0, %v872
          %v874 = vpop.f32.mrf.mxu0
          %875 = vdwg.mxu0
          %876 = vmatpush.bf16.msra.mxu0 %v526
          %877 = vmatpush.bf16.msra.mxu0 %v522
          %878 = vmatpush.bf16.msra.mxu0 %v518
          %879 = vmatpush.bf16.msra.mxu0 %v514
          %880 = vmatpush.bf16.msra.mxu0 %v510
          %881 = vmatpush.bf16.msra.mxu0 %v506
          %882 = vmatpush.bf16.msra.mxu0 %v502
          %883 = vmatpush.bf16.msra.mxu0 %v498
          %884 = vmatmul.bf16.gmra.mxu0 %v849
          %v885 = vpop.f32.mrf.mxu0
          %v886 = vadd.f32 0.0, %v885
          %v887 = vpop.f32.mrf.mxu0
          %888 = vdwg.mxu0
          %889 = vmatpush.bf16.msra.mxu0 %v527
          %890 = vmatpush.bf16.msra.mxu0 %v523
          %891 = vmatpush.bf16.msra.mxu0 %v519
          %892 = vmatpush.bf16.msra.mxu0 %v515
          %893 = vmatpush.bf16.msra.mxu0 %v511
          %894 = vmatpush.bf16.msra.mxu0 %v507
          %895 = vmatpush.bf16.msra.mxu0 %v503
          %896 = vmatpush.bf16.msra.mxu0 %v499
          %897 = vmatmul.bf16.gmra.mxu0 %v849
          %v898 = vpop.f32.mrf.mxu0
          %v899 = vadd.f32 0.0, %v898
          %v900 = vpop.f32.mrf.mxu0
          %901 = vdwg.mxu0
          %v906 = vrot.slane %v873, 6
          %v907 = vrot.slane %v886, 4
          %v908 = vrot.slane %v899, 2
          %v909 = vsel %vm619, %v860, %v906
          %v910 = vsel %vm621, %v907, %v908
          %v911 = vsel %vm623, %v909, %v910
          %v913 = vadd.f32 %v847, %v911
          %v914 = vxor.u32 %v913, 2147483648
          %v915 = vmul.f32 %v914, 1.442695
          %v916 = vpow.pop %v915
          %v917 = vadd.f32 %v916, 1.0
          %v918 = vrcp.pop %v917
          %v919 = vmul.f32 %v917, %v918
          %v920 = vsub.f32 1.0, %v919
          %v921 = vmul.f32 %v918, %v920
          %v922 = vadd.f32 %v918, %v921
          %vm923 = vweird.f32 %v917
          %vm924 = vweird.f32 %v918
          %vm925 = vmor %vm923, %vm924
          %v926 = vsel %vm925, %v918, %v922
          %v927 = vand.u32 2147483647, %v917
          %vm928 = vcmp.eq.f32.partialorder %v927, 8.507059e+37
          %v929 = vand.u32 %v917, 2147483648
          %v930 = vor.u32 1.1754944e-38, %v929
          %v931 = vsel %vm928, %v930, %v926
          %v932 = vmul.f32 1.0, %v931
          %v934 = vrot.slane %v913, 2
          %v936 = vxor.u32 %v934, 2147483648
          %v937 = vmul.f32 %v936, 1.442695
          %v938 = vpow.pop %v937
          %v939 = vadd.f32 %v938, 1.0
          %v940 = vrcp.pop %v939
          %v941 = vmul.f32 %v939, %v940
          %v942 = vsub.f32 1.0, %v941
          %v943 = vmul.f32 %v940, %v942
          %v944 = vadd.f32 %v940, %v943
          %vm945 = vweird.f32 %v939
          %vm946 = vweird.f32 %v940
          %vm947 = vmor %vm945, %vm946
          %v948 = vsel %vm947, %v940, %v944
          %v949 = vand.u32 2147483647, %v939
          %vm950 = vcmp.eq.f32.partialorder %v949, 8.507059e+37
          %v951 = vand.u32 %v939, 2147483648
          %v952 = vor.u32 1.1754944e-38, %v951
          %v953 = vsel %vm950, %v952, %v948
          %v954 = vmul.f32 1.0, %v953
          %v955 = vrot.slane %v913, 4
          %v957 = vtanh.pop %v955
          %v958 = vrot.slane %v913, 6
          %v960 = vxor.u32 %v958, 2147483648
          %v961 = vmul.f32 %v960, 1.442695
          %v962 = vpow.pop %v961
          %v963 = vadd.f32 %v962, 1.0
          %v964 = vrcp.pop %v963
          %v965 = vmul.f32 %v963, %v964
          %v966 = vsub.f32 1.0, %v965
          %v967 = vmul.f32 %v964, %v966
          %v968 = vadd.f32 %v964, %v967
          %vm969 = vweird.f32 %v963
          %vm970 = vweird.f32 %v964
          %vm971 = vmor %vm969, %vm970
          %v972 = vsel %vm971, %v964, %v968
          %v973 = vand.u32 2147483647, %v963
          %vm974 = vcmp.eq.f32.partialorder %v973, 8.507059e+37
          %v975 = vand.u32 %v963, 2147483648
          %v976 = vor.u32 1.1754944e-38, %v975
          %v977 = vsel %vm974, %v976, %v972
          %v978 = vmul.f32 1.0, %v977
          %v979 = vld [vmem:[#allocation3] sm:$0x3]
          %v980 = vmul.f32 %v954, %v979
          %v981 = vmul.f32 %v932, %v957
          %v982 = vadd.f32 %v980, %v981
          %v983 = vtanh.pop %v982
          %v984 = vmul.f32 %v978, %v983
          %985 = vst [vmem:[#allocation3] sm:$0x3] %v982
          %986 = vst [vmem:[#allocation2] sm:$0x3] %v984
          %v987 = vpack.c.bf16 %v984, %v984
          %s988 = scalar_lea.vmem %s342, 2 [#allocation6]
          %989 = vst [vmem:[%s988] sm:$0x1] %v987
          %s990 = scalar_lea.vmem %s314, 24 [#allocation4]
          %v991 = vld [vmem:[%s990] sm:$0xff]
          %v992 = vld [vmem:[#allocation2] sm:$0x3]
          %v993 = vpack.c.bf16 %v992, %v992
          %994 = vmatpush.bf16.msra.mxu0 %v524
          %995 = vmatpush.bf16.msra.mxu0 %v520
          %996 = vmatpush.bf16.msra.mxu0 %v516
          %997 = vmatpush.bf16.msra.mxu0 %v512
          %998 = vmatpush.bf16.msra.mxu0 %v508
          %999 = vmatpush.bf16.msra.mxu0 %v504
          %1000 = vmatpush.bf16.msra.mxu0 %v500
          %1001 = vmatpush.bf16.msra.mxu0 %v496
          %1002 = vmatmul.bf16.gmra.mxu0 %v993
          %v1003 = vpop.f32.mrf.mxu0
          %v1004 = vadd.f32 0.0, %v1003
          %v1005 = vpop.f32.mrf.mxu0
          %1006 = vdwg.mxu0
          %1007 = vmatpush.bf16.msra.mxu0 %v525
          %1008 = vmatpush.bf16.msra.mxu0 %v521
          %1009 = vmatpush.bf16.msra.mxu0 %v517
          %1010 = vmatpush.bf16.msra.mxu0 %v513
          %1011 = vmatpush.bf16.msra.mxu0 %v509
          %1012 = vmatpush.bf16.msra.mxu0 %v505
          %1013 = vmatpush.bf16.msra.mxu0 %v501
          %1014 = vmatpush.bf16.msra.mxu0 %v497
          %1015 = vmatmul.bf16.gmra.mxu0 %v993
          %v1016 = vpop.f32.mrf.mxu0
          %v1017 = vadd.f32 0.0, %v1016
          %v1018 = vpop.f32.mrf.mxu0
          %1019 = vdwg.mxu0
          %1020 = vmatpush.bf16.msra.mxu0 %v526
          %1021 = vmatpush.bf16.msra.mxu0 %v522
          %1022 = vmatpush.bf16.msra.mxu0 %v518
          %1023 = vmatpush.bf16.msra.mxu0 %v514
          %1024 = vmatpush.bf16.msra.mxu0 %v510
          %1025 = vmatpush.bf16.msra.mxu0 %v506
          %1026 = vmatpush.bf16.msra.mxu0 %v502
          %1027 = vmatpush.bf16.msra.mxu0 %v498
          %1028 = vmatmul.bf16.gmra.mxu0 %v993
          %v1029 = vpop.f32.mrf.mxu0
          %v1030 = vadd.f32 0.0, %v1029
          %v1031 = vpop.f32.mrf.mxu0
          %1032 = vdwg.mxu0
          %1033 = vmatpush.bf16.msra.mxu0 %v527
          %1034 = vmatpush.bf16.msra.mxu0 %v523
          %1035 = vmatpush.bf16.msra.mxu0 %v519
          %1036 = vmatpush.bf16.msra.mxu0 %v515
          %1037 = vmatpush.bf16.msra.mxu0 %v511
          %1038 = vmatpush.bf16.msra.mxu0 %v507
          %1039 = vmatpush.bf16.msra.mxu0 %v503
          %1040 = vmatpush.bf16.msra.mxu0 %v499
          %1041 = vmatmul.bf16.gmra.mxu0 %v993
          %v1042 = vpop.f32.mrf.mxu0
          %v1043 = vadd.f32 0.0, %v1042
          %v1044 = vpop.f32.mrf.mxu0
          %1045 = vdwg.mxu0
          %v1050 = vrot.slane %v1017, 6
          %v1051 = vrot.slane %v1030, 4
          %v1052 = vrot.slane %v1043, 2
          %v1053 = vsel %vm619, %v1004, %v1050
          %v1054 = vsel %vm621, %v1051, %v1052
          %v1055 = vsel %vm623, %v1053, %v1054
          %v1057 = vadd.f32 %v991, %v1055
          %v1058 = vxor.u32 %v1057, 2147483648
          %v1059 = vmul.f32 %v1058, 1.442695
          %v1060 = vpow.pop %v1059
          %v1061 = vadd.f32 %v1060, 1.0
          %v1062 = vrcp.pop %v1061
          %v1063 = vmul.f32 %v1061, %v1062
          %v1064 = vsub.f32 1.0, %v1063
          %v1065 = vmul.f32 %v1062, %v1064
          %v1066 = vadd.f32 %v1062, %v1065
          %vm1067 = vweird.f32 %v1061
          %vm1068 = vweird.f32 %v1062
          %vm1069 = vmor %vm1067, %vm1068
          %v1070 = vsel %vm1069, %v1062, %v1066
          %v1071 = vand.u32 2147483647, %v1061
          %vm1072 = vcmp.eq.f32.partialorder %v1071, 8.507059e+37
          %v1073 = vand.u32 %v1061, 2147483648
          %v1074 = vor.u32 1.1754944e-38, %v1073
          %v1075 = vsel %vm1072, %v1074, %v1070
          %v1076 = vmul.f32 1.0, %v1075
          %v1078 = vrot.slane %v1057, 2
          %v1080 = vxor.u32 %v1078, 2147483648
          %v1081 = vmul.f32 %v1080, 1.442695
          %v1082 = vpow.pop %v1081
          %v1083 = vadd.f32 %v1082, 1.0
          %v1084 = vrcp.pop %v1083
          %v1085 = vmul.f32 %v1083, %v1084
          %v1086 = vsub.f32 1.0, %v1085
          %v1087 = vmul.f32 %v1084, %v1086
          %v1088 = vadd.f32 %v1084, %v1087
          %vm1089 = vweird.f32 %v1083
          %vm1090 = vweird.f32 %v1084
          %vm1091 = vmor %vm1089, %vm1090
          %v1092 = vsel %vm1091, %v1084, %v1088
          %v1093 = vand.u32 2147483647, %v1083
          %vm1094 = vcmp.eq.f32.partialorder %v1093, 8.507059e+37
          %v1095 = vand.u32 %v1083, 2147483648
          %v1096 = vor.u32 1.1754944e-38, %v1095
          %v1097 = vsel %vm1094, %v1096, %v1092
          %v1098 = vmul.f32 1.0, %v1097
          %v1099 = vrot.slane %v1057, 4
          %v1101 = vtanh.pop %v1099
          %v1102 = vrot.slane %v1057, 6
          %v1104 = vxor.u32 %v1102, 2147483648
          %v1105 = vmul.f32 %v1104, 1.442695
          %v1106 = vpow.pop %v1105
          %v1107 = vadd.f32 %v1106, 1.0
          %v1108 = vrcp.pop %v1107
          %v1109 = vmul.f32 %v1107, %v1108
          %v1110 = vsub.f32 1.0, %v1109
          %v1111 = vmul.f32 %v1108, %v1110
          %v1112 = vadd.f32 %v1108, %v1111
          %vm1113 = vweird.f32 %v1107
          %vm1114 = vweird.f32 %v1108
          %vm1115 = vmor %vm1113, %vm1114
          %v1116 = vsel %vm1115, %v1108, %v1112
          %v1117 = vand.u32 2147483647, %v1107
          %vm1118 = vcmp.eq.f32.partialorder %v1117, 8.507059e+37
          %v1119 = vand.u32 %v1107, 2147483648
          %v1120 = vor.u32 1.1754944e-38, %v1119
          %v1121 = vsel %vm1118, %v1120, %v1116
          %v1122 = vmul.f32 1.0, %v1121
          %v1123 = vld [vmem:[#allocation3] sm:$0x3]
          %v1124 = vmul.f32 %v1098, %v1123
          %v1125 = vmul.f32 %v1076, %v1101
          %v1126 = vadd.f32 %v1124, %v1125
          %v1127 = vtanh.pop %v1126
          %v1128 = vmul.f32 %v1122, %v1127
          %1129 = vst [vmem:[#allocation3] sm:$0x3] %v1126
          %1130 = vst [vmem:[#allocation2] sm:$0x3] %v1128
          %v1131 = vpack.c.bf16 %v1128, %v1128
          %s1132 = scalar_lea.vmem %s342, 3 [#allocation6]
          %1133 = vst [vmem:[%s1132] sm:$0x1] %v1131
          %s1134 = scalar_lea.vmem %s314, 32 [#allocation4]
          %v1135 = vld [vmem:[%s1134] sm:$0xff]
          %v1136 = vld [vmem:[#allocation2] sm:$0x3]
          %v1137 = vpack.c.bf16 %v1136, %v1136
          %1138 = vmatpush.bf16.msra.mxu0 %v524
          %1139 = vmatpush.bf16.msra.mxu0 %v520
          %1140 = vmatpush.bf16.msra.mxu0 %v516
          %1141 = vmatpush.bf16.msra.mxu0 %v512
          %1142 = vmatpush.bf16.msra.mxu0 %v508
          %1143 = vmatpush.bf16.msra.mxu0 %v504
          %1144 = vmatpush.bf16.msra.mxu0 %v500
          %1145 = vmatpush.bf16.msra.mxu0 %v496
          %1146 = vmatmul.bf16.gmra.mxu0 %v1137
          %v1147 = vpop.f32.mrf.mxu0
          %v1148 = vadd.f32 0.0, %v1147
          %v1149 = vpop.f32.mrf.mxu0
          %1150 = vdwg.mxu0
          %1151 = vmatpush.bf16.msra.mxu0 %v525
          %1152 = vmatpush.bf16.msra.mxu0 %v521
          %1153 = vmatpush.bf16.msra.mxu0 %v517
          %1154 = vmatpush.bf16.msra.mxu0 %v513
          %1155 = vmatpush.bf16.msra.mxu0 %v509
          %1156 = vmatpush.bf16.msra.mxu0 %v505
          %1157 = vmatpush.bf16.msra.mxu0 %v501
          %1158 = vmatpush.bf16.msra.mxu0 %v497
          %1159 = vmatmul.bf16.gmra.mxu0 %v1137
          %v1160 = vpop.f32.mrf.mxu0
          %v1161 = vadd.f32 0.0, %v1160
          %v1162 = vpop.f32.mrf.mxu0
          %1163 = vdwg.mxu0
          %1164 = vmatpush.bf16.msra.mxu0 %v526
          %1165 = vmatpush.bf16.msra.mxu0 %v522
          %1166 = vmatpush.bf16.msra.mxu0 %v518
          %1167 = vmatpush.bf16.msra.mxu0 %v514
          %1168 = vmatpush.bf16.msra.mxu0 %v510
          %1169 = vmatpush.bf16.msra.mxu0 %v506
          %1170 = vmatpush.bf16.msra.mxu0 %v502
          %1171 = vmatpush.bf16.msra.mxu0 %v498
          %1172 = vmatmul.bf16.gmra.mxu0 %v1137
          %v1173 = vpop.f32.mrf.mxu0
          %v1174 = vadd.f32 0.0, %v1173
          %v1175 = vpop.f32.mrf.mxu0
          %1176 = vdwg.mxu0
          %1177 = vmatpush.bf16.msra.mxu0 %v527
          %1178 = vmatpush.bf16.msra.mxu0 %v523
          %1179 = vmatpush.bf16.msra.mxu0 %v519
          %1180 = vmatpush.bf16.msra.mxu0 %v515
          %1181 = vmatpush.bf16.msra.mxu0 %v511
          %1182 = vmatpush.bf16.msra.mxu0 %v507
          %1183 = vmatpush.bf16.msra.mxu0 %v503
          %1184 = vmatpush.bf16.msra.mxu0 %v499
          %1185 = vmatmul.bf16.gmra.mxu0 %v1137
          %v1186 = vpop.f32.mrf.mxu0
          %v1187 = vadd.f32 0.0, %v1186
          %v1188 = vpop.f32.mrf.mxu0
          %1189 = vdwg.mxu0
          %v1194 = vrot.slane %v1161, 6
          %v1195 = vrot.slane %v1174, 4
          %v1196 = vrot.slane %v1187, 2
          %v1197 = vsel %vm619, %v1148, %v1194
          %v1198 = vsel %vm621, %v1195, %v1196
          %v1199 = vsel %vm623, %v1197, %v1198
          %v1201 = vadd.f32 %v1135, %v1199
          %v1202 = vxor.u32 %v1201, 2147483648
          %v1203 = vmul.f32 %v1202, 1.442695
          %v1204 = vpow.pop %v1203
          %v1205 = vadd.f32 %v1204, 1.0
          %v1206 = vrcp.pop %v1205
          %v1207 = vmul.f32 %v1205, %v1206
          %v1208 = vsub.f32 1.0, %v1207
          %v1209 = vmul.f32 %v1206, %v1208
          %v1210 = vadd.f32 %v1206, %v1209
          %vm1211 = vweird.f32 %v1205
          %vm1212 = vweird.f32 %v1206
          %vm1213 = vmor %vm1211, %vm1212
          %v1214 = vsel %vm1213, %v1206, %v1210
          %v1215 = vand.u32 2147483647, %v1205
          %vm1216 = vcmp.eq.f32.partialorder %v1215, 8.507059e+37
          %v1217 = vand.u32 %v1205, 2147483648
          %v1218 = vor.u32 1.1754944e-38, %v1217
          %v1219 = vsel %vm1216, %v1218, %v1214
          %v1220 = vmul.f32 1.0, %v1219
          %v1222 = vrot.slane %v1201, 2
          %v1224 = vxor.u32 %v1222, 2147483648
          %v1225 = vmul.f32 %v1224, 1.442695
          %v1226 = vpow.pop %v1225
          %v1227 = vadd.f32 %v1226, 1.0
          %v1228 = vrcp.pop %v1227
          %v1229 = vmul.f32 %v1227, %v1228
          %v1230 = vsub.f32 1.0, %v1229
          %v1231 = vmul.f32 %v1228, %v1230
          %v1232 = vadd.f32 %v1228, %v1231
          %vm1233 = vweird.f32 %v1227
          %vm1234 = vweird.f32 %v1228
          %vm1235 = vmor %vm1233, %vm1234
          %v1236 = vsel %vm1235, %v1228, %v1232
          %v1237 = vand.u32 2147483647, %v1227
          %vm1238 = vcmp.eq.f32.partialorder %v1237, 8.507059e+37
          %v1239 = vand.u32 %v1227, 2147483648
          %v1240 = vor.u32 1.1754944e-38, %v1239
          %v1241 = vsel %vm1238, %v1240, %v1236
          %v1242 = vmul.f32 1.0, %v1241
          %v1243 = vrot.slane %v1201, 4
          %v1245 = vtanh.pop %v1243
          %v1246 = vrot.slane %v1201, 6
          %v1248 = vxor.u32 %v1246, 2147483648
          %v1249 = vmul.f32 %v1248, 1.442695
          %v1250 = vpow.pop %v1249
          %v1251 = vadd.f32 %v1250, 1.0
          %v1252 = vrcp.pop %v1251
          %v1253 = vmul.f32 %v1251, %v1252
          %v1254 = vsub.f32 1.0, %v1253
          %v1255 = vmul.f32 %v1252, %v1254
          %v1256 = vadd.f32 %v1252, %v1255
          %vm1257 = vweird.f32 %v1251
          %vm1258 = vweird.f32 %v1252
          %vm1259 = vmor %vm1257, %vm1258
          %v1260 = vsel %vm1259, %v1252, %v1256
          %v1261 = vand.u32 2147483647, %v1251
          %vm1262 = vcmp.eq.f32.partialorder %v1261, 8.507059e+37
          %v1263 = vand.u32 %v1251, 2147483648
          %v1264 = vor.u32 1.1754944e-38, %v1263
          %v1265 = vsel %vm1262, %v1264, %v1260
          %v1266 = vmul.f32 1.0, %v1265
          %v1267 = vld [vmem:[#allocation3] sm:$0x3]
          %v1268 = vmul.f32 %v1242, %v1267
          %v1269 = vmul.f32 %v1220, %v1245
          %v1270 = vadd.f32 %v1268, %v1269
          %v1271 = vtanh.pop %v1270
          %v1272 = vmul.f32 %v1266, %v1271
          %1273 = vst [vmem:[#allocation3] sm:$0x3] %v1270
          %1274 = vst [vmem:[#allocation2] sm:$0x3] %v1272
          %v1275 = vpack.c.bf16 %v1272, %v1272
          %s1276 = scalar_lea.vmem %s342, 4 [#allocation6]
          %1277 = vst [vmem:[%s1276] sm:$0x1] %v1275
          %s1278 = scalar_lea.vmem %s314, 40 [#allocation4]
          %v1279 = vld [vmem:[%s1278] sm:$0xff]
          %v1280 = vld [vmem:[#allocation2] sm:$0x3]
          %v1281 = vpack.c.bf16 %v1280, %v1280
          %1282 = vmatpush.bf16.msra.mxu0 %v524
          %1283 = vmatpush.bf16.msra.mxu0 %v520
          %1284 = vmatpush.bf16.msra.mxu0 %v516
          %1285 = vmatpush.bf16.msra.mxu0 %v512
          %1286 = vmatpush.bf16.msra.mxu0 %v508
          %1287 = vmatpush.bf16.msra.mxu0 %v504
          %1288 = vmatpush.bf16.msra.mxu0 %v500
          %1289 = vmatpush.bf16.msra.mxu0 %v496
          %1290 = vmatmul.bf16.gmra.mxu0 %v1281
          %v1291 = vpop.f32.mrf.mxu0
          %v1292 = vadd.f32 0.0, %v1291
          %v1293 = vpop.f32.mrf.mxu0
          %1294 = vdwg.mxu0
          %1295 = vmatpush.bf16.msra.mxu0 %v525
          %1296 = vmatpush.bf16.msra.mxu0 %v521
          %1297 = vmatpush.bf16.msra.mxu0 %v517
          %1298 = vmatpush.bf16.msra.mxu0 %v513
          %1299 = vmatpush.bf16.msra.mxu0 %v509
          %1300 = vmatpush.bf16.msra.mxu0 %v505
          %1301 = vmatpush.bf16.msra.mxu0 %v501
          %1302 = vmatpush.bf16.msra.mxu0 %v497
          %1303 = vmatmul.bf16.gmra.mxu0 %v1281
          %v1304 = vpop.f32.mrf.mxu0
          %v1305 = vadd.f32 0.0, %v1304
          %v1306 = vpop.f32.mrf.mxu0
          %1307 = vdwg.mxu0
          %1308 = vmatpush.bf16.msra.mxu0 %v526
          %1309 = vmatpush.bf16.msra.mxu0 %v522
          %1310 = vmatpush.bf16.msra.mxu0 %v518
          %1311 = vmatpush.bf16.msra.mxu0 %v514
          %1312 = vmatpush.bf16.msra.mxu0 %v510
          %1313 = vmatpush.bf16.msra.mxu0 %v506
          %1314 = vmatpush.bf16.msra.mxu0 %v502
          %1315 = vmatpush.bf16.msra.mxu0 %v498
          %1316 = vmatmul.bf16.gmra.mxu0 %v1281
          %v1317 = vpop.f32.mrf.mxu0
          %v1318 = vadd.f32 0.0, %v1317
          %v1319 = vpop.f32.mrf.mxu0
          %1320 = vdwg.mxu0
          %1321 = vmatpush.bf16.msra.mxu0 %v527
          %1322 = vmatpush.bf16.msra.mxu0 %v523
          %1323 = vmatpush.bf16.msra.mxu0 %v519
          %1324 = vmatpush.bf16.msra.mxu0 %v515
          %1325 = vmatpush.bf16.msra.mxu0 %v511
          %1326 = vmatpush.bf16.msra.mxu0 %v507
          %1327 = vmatpush.bf16.msra.mxu0 %v503
          %1328 = vmatpush.bf16.msra.mxu0 %v499
          %1329 = vmatmul.bf16.gmra.mxu0 %v1281
          %v1330 = vpop.f32.mrf.mxu0
          %v1331 = vadd.f32 0.0, %v1330
          %v1332 = vpop.f32.mrf.mxu0
          %1333 = vdwg.mxu0
          %v1338 = vrot.slane %v1305, 6
          %v1339 = vrot.slane %v1318, 4
          %v1340 = vrot.slane %v1331, 2
          %v1341 = vsel %vm619, %v1292, %v1338
          %v1342 = vsel %vm621, %v1339, %v1340
          %v1343 = vsel %vm623, %v1341, %v1342
          %v1345 = vadd.f32 %v1279, %v1343
          %v1346 = vxor.u32 %v1345, 2147483648
          %v1347 = vmul.f32 %v1346, 1.442695
          %v1348 = vpow.pop %v1347
          %v1349 = vadd.f32 %v1348, 1.0
          %v1350 = vrcp.pop %v1349
          %v1351 = vmul.f32 %v1349, %v1350
          %v1352 = vsub.f32 1.0, %v1351
          %v1353 = vmul.f32 %v1350, %v1352
          %v1354 = vadd.f32 %v1350, %v1353
          %vm1355 = vweird.f32 %v1349
          %vm1356 = vweird.f32 %v1350
          %vm1357 = vmor %vm1355, %vm1356
          %v1358 = vsel %vm1357, %v1350, %v1354
          %v1359 = vand.u32 2147483647, %v1349
          %vm1360 = vcmp.eq.f32.partialorder %v1359, 8.507059e+37
          %v1361 = vand.u32 %v1349, 2147483648
          %v1362 = vor.u32 1.1754944e-38, %v1361
          %v1363 = vsel %vm1360, %v1362, %v1358
          %v1364 = vmul.f32 1.0, %v1363
          %v1366 = vrot.slane %v1345, 2
          %v1368 = vxor.u32 %v1366, 2147483648
          %v1369 = vmul.f32 %v1368, 1.442695
          %v1370 = vpow.pop %v1369
          %v1371 = vadd.f32 %v1370, 1.0
          %v1372 = vrcp.pop %v1371
          %v1373 = vmul.f32 %v1371, %v1372
          %v1374 = vsub.f32 1.0, %v1373
          %v1375 = vmul.f32 %v1372, %v1374
          %v1376 = vadd.f32 %v1372, %v1375
          %vm1377 = vweird.f32 %v1371
          %vm1378 = vweird.f32 %v1372
          %vm1379 = vmor %vm1377, %vm1378
          %v1380 = vsel %vm1379, %v1372, %v1376
          %v1381 = vand.u32 2147483647, %v1371
          %vm1382 = vcmp.eq.f32.partialorder %v1381, 8.507059e+37
          %v1383 = vand.u32 %v1371, 2147483648
          %v1384 = vor.u32 1.1754944e-38, %v1383
          %v1385 = vsel %vm1382, %v1384, %v1380
          %v1386 = vmul.f32 1.0, %v1385
          %v1387 = vrot.slane %v1345, 4
          %v1389 = vtanh.pop %v1387
          %v1390 = vrot.slane %v1345, 6
          %v1392 = vxor.u32 %v1390, 2147483648
          %v1393 = vmul.f32 %v1392, 1.442695
          %v1394 = vpow.pop %v1393
          %v1395 = vadd.f32 %v1394, 1.0
          %v1396 = vrcp.pop %v1395
          %v1397 = vmul.f32 %v1395, %v1396
          %v1398 = vsub.f32 1.0, %v1397
          %v1399 = vmul.f32 %v1396, %v1398
          %v1400 = vadd.f32 %v1396, %v1399
          %vm1401 = vweird.f32 %v1395
          %vm1402 = vweird.f32 %v1396
          %vm1403 = vmor %vm1401, %vm1402
          %v1404 = vsel %vm1403, %v1396, %v1400
          %v1405 = vand.u32 2147483647, %v1395
          %vm1406 = vcmp.eq.f32.partialorder %v1405, 8.507059e+37
          %v1407 = vand.u32 %v1395, 2147483648
          %v1408 = vor.u32 1.1754944e-38, %v1407
          %v1409 = vsel %vm1406, %v1408, %v1404
          %v1410 = vmul.f32 1.0, %v1409
          %v1411 = vld [vmem:[#allocation3] sm:$0x3]
          %v1412 = vmul.f32 %v1386, %v1411
          %v1413 = vmul.f32 %v1364, %v1389
          %v1414 = vadd.f32 %v1412, %v1413
          %v1415 = vtanh.pop %v1414
          %v1416 = vmul.f32 %v1410, %v1415
          %1417 = vst [vmem:[#allocation3] sm:$0x3] %v1414
          %1418 = vst [vmem:[#allocation2] sm:$0x3] %v1416
          %v1419 = vpack.c.bf16 %v1416, %v1416
          %s1420 = scalar_lea.vmem %s342, 5 [#allocation6]
          %1421 = vst [vmem:[%s1420] sm:$0x1] %v1419
          %s1422 = scalar_lea.vmem %s314, 48 [#allocation4]
          %v1423 = vld [vmem:[%s1422] sm:$0xff]
          %v1424 = vld [vmem:[#allocation2] sm:$0x3]
          %v1425 = vpack.c.bf16 %v1424, %v1424
          %1426 = vmatpush.bf16.msra.mxu0 %v524
          %1427 = vmatpush.bf16.msra.mxu0 %v520
          %1428 = vmatpush.bf16.msra.mxu0 %v516
          %1429 = vmatpush.bf16.msra.mxu0 %v512
          %1430 = vmatpush.bf16.msra.mxu0 %v508
          %1431 = vmatpush.bf16.msra.mxu0 %v504
          %1432 = vmatpush.bf16.msra.mxu0 %v500
          %1433 = vmatpush.bf16.msra.mxu0 %v496
          %1434 = vmatmul.bf16.gmra.mxu0 %v1425
          %v1435 = vpop.f32.mrf.mxu0
          %v1436 = vadd.f32 0.0, %v1435
          %v1437 = vpop.f32.mrf.mxu0
          %1438 = vdwg.mxu0
          %1439 = vmatpush.bf16.msra.mxu0 %v525
          %1440 = vmatpush.bf16.msra.mxu0 %v521
          %1441 = vmatpush.bf16.msra.mxu0 %v517
          %1442 = vmatpush.bf16.msra.mxu0 %v513
          %1443 = vmatpush.bf16.msra.mxu0 %v509
          %1444 = vmatpush.bf16.msra.mxu0 %v505
          %1445 = vmatpush.bf16.msra.mxu0 %v501
          %1446 = vmatpush.bf16.msra.mxu0 %v497
          %1447 = vmatmul.bf16.gmra.mxu0 %v1425
          %v1448 = vpop.f32.mrf.mxu0
          %v1449 = vadd.f32 0.0, %v1448
          %v1450 = vpop.f32.mrf.mxu0
          %1451 = vdwg.mxu0
          %1452 = vmatpush.bf16.msra.mxu0 %v526
          %1453 = vmatpush.bf16.msra.mxu0 %v522
          %1454 = vmatpush.bf16.msra.mxu0 %v518
          %1455 = vmatpush.bf16.msra.mxu0 %v514
          %1456 = vmatpush.bf16.msra.mxu0 %v510
          %1457 = vmatpush.bf16.msra.mxu0 %v506
          %1458 = vmatpush.bf16.msra.mxu0 %v502
          %1459 = vmatpush.bf16.msra.mxu0 %v498
          %1460 = vmatmul.bf16.gmra.mxu0 %v1425
          %v1461 = vpop.f32.mrf.mxu0
          %v1462 = vadd.f32 0.0, %v1461
          %v1463 = vpop.f32.mrf.mxu0
          %1464 = vdwg.mxu0
          %1465 = vmatpush.bf16.msra.mxu0 %v527
          %1466 = vmatpush.bf16.msra.mxu0 %v523
          %1467 = vmatpush.bf16.msra.mxu0 %v519
          %1468 = vmatpush.bf16.msra.mxu0 %v515
          %1469 = vmatpush.bf16.msra.mxu0 %v511
          %1470 = vmatpush.bf16.msra.mxu0 %v507
          %1471 = vmatpush.bf16.msra.mxu0 %v503
          %1472 = vmatpush.bf16.msra.mxu0 %v499
          %1473 = vmatmul.bf16.gmra.mxu0 %v1425
          %v1474 = vpop.f32.mrf.mxu0
          %v1475 = vadd.f32 0.0, %v1474
          %v1476 = vpop.f32.mrf.mxu0
          %1477 = vdwg.mxu0
          %v1482 = vrot.slane %v1449, 6
          %v1483 = vrot.slane %v1462, 4
          %v1484 = vrot.slane %v1475, 2
          %v1485 = vsel %vm619, %v1436, %v1482
          %v1486 = vsel %vm621, %v1483, %v1484
          %v1487 = vsel %vm623, %v1485, %v1486
          %v1489 = vadd.f32 %v1423, %v1487
          %v1490 = vxor.u32 %v1489, 2147483648
          %v1491 = vmul.f32 %v1490, 1.442695
          %v1492 = vpow.pop %v1491
          %v1493 = vadd.f32 %v1492, 1.0
          %v1494 = vrcp.pop %v1493
          %v1495 = vmul.f32 %v1493, %v1494
          %v1496 = vsub.f32 1.0, %v1495
          %v1497 = vmul.f32 %v1494, %v1496
          %v1498 = vadd.f32 %v1494, %v1497
          %vm1499 = vweird.f32 %v1493
          %vm1500 = vweird.f32 %v1494
          %vm1501 = vmor %vm1499, %vm1500
          %v1502 = vsel %vm1501, %v1494, %v1498
          %v1503 = vand.u32 2147483647, %v1493
          %vm1504 = vcmp.eq.f32.partialorder %v1503, 8.507059e+37
          %v1505 = vand.u32 %v1493, 2147483648
          %v1506 = vor.u32 1.1754944e-38, %v1505
          %v1507 = vsel %vm1504, %v1506, %v1502
          %v1508 = vmul.f32 1.0, %v1507
          %v1510 = vrot.slane %v1489, 2
          %v1512 = vxor.u32 %v1510, 2147483648
          %v1513 = vmul.f32 %v1512, 1.442695
          %v1514 = vpow.pop %v1513
          %v1515 = vadd.f32 %v1514, 1.0
          %v1516 = vrcp.pop %v1515
          %v1517 = vmul.f32 %v1515, %v1516
          %v1518 = vsub.f32 1.0, %v1517
          %v1519 = vmul.f32 %v1516, %v1518
          %v1520 = vadd.f32 %v1516, %v1519
          %vm1521 = vweird.f32 %v1515
          %vm1522 = vweird.f32 %v1516
          %vm1523 = vmor %vm1521, %vm1522
          %v1524 = vsel %vm1523, %v1516, %v1520
          %v1525 = vand.u32 2147483647, %v1515
          %vm1526 = vcmp.eq.f32.partialorder %v1525, 8.507059e+37
          %v1527 = vand.u32 %v1515, 2147483648
          %v1528 = vor.u32 1.1754944e-38, %v1527
          %v1529 = vsel %vm1526, %v1528, %v1524
          %v1530 = vmul.f32 1.0, %v1529
          %v1531 = vrot.slane %v1489, 4
          %v1533 = vtanh.pop %v1531
          %v1534 = vrot.slane %v1489, 6
          %v1536 = vxor.u32 %v1534, 2147483648
          %v1537 = vmul.f32 %v1536, 1.442695
          %v1538 = vpow.pop %v1537
          %v1539 = vadd.f32 %v1538, 1.0
          %v1540 = vrcp.pop %v1539
          %v1541 = vmul.f32 %v1539, %v1540
          %v1542 = vsub.f32 1.0, %v1541
          %v1543 = vmul.f32 %v1540, %v1542
          %v1544 = vadd.f32 %v1540, %v1543
          %vm1545 = vweird.f32 %v1539
          %vm1546 = vweird.f32 %v1540
          %vm1547 = vmor %vm1545, %vm1546
          %v1548 = vsel %vm1547, %v1540, %v1544
          %v1549 = vand.u32 2147483647, %v1539
          %vm1550 = vcmp.eq.f32.partialorder %v1549, 8.507059e+37
          %v1551 = vand.u32 %v1539, 2147483648
          %v1552 = vor.u32 1.1754944e-38, %v1551
          %v1553 = vsel %vm1550, %v1552, %v1548
          %v1554 = vmul.f32 1.0, %v1553
          %v1555 = vld [vmem:[#allocation3] sm:$0x3]
          %v1556 = vmul.f32 %v1530, %v1555
          %v1557 = vmul.f32 %v1508, %v1533
          %v1558 = vadd.f32 %v1556, %v1557
          %v1559 = vtanh.pop %v1558
          %v1560 = vmul.f32 %v1554, %v1559
          %1561 = vst [vmem:[#allocation3] sm:$0x3] %v1558
          %1562 = vst [vmem:[#allocation2] sm:$0x3] %v1560
          %v1563 = vpack.c.bf16 %v1560, %v1560
          %s1564 = scalar_lea.vmem %s342, 6 [#allocation6]
          %1565 = vst [vmem:[%s1564] sm:$0x1] %v1563
          %s1566 = scalar_lea.vmem %s314, 56 [#allocation4]
          %v1567 = vld [vmem:[%s1566] sm:$0xff]
          %v1568 = vld [vmem:[#allocation2] sm:$0x3]
          %v1569 = vpack.c.bf16 %v1568, %v1568
          %1570 = vmatpush.bf16.msra.mxu0 %v524
          %1571 = vmatpush.bf16.msra.mxu0 %v520
          %1572 = vmatpush.bf16.msra.mxu0 %v516
          %1573 = vmatpush.bf16.msra.mxu0 %v512
          %1574 = vmatpush.bf16.msra.mxu0 %v508
          %1575 = vmatpush.bf16.msra.mxu0 %v504
          %1576 = vmatpush.bf16.msra.mxu0 %v500
          %1577 = vmatpush.bf16.msra.mxu0 %v496
          %1578 = vmatmul.bf16.gmra.mxu0 %v1569
          %v1579 = vpop.f32.mrf.mxu0
          %v1580 = vadd.f32 0.0, %v1579
          %v1581 = vpop.f32.mrf.mxu0
          %1582 = vdwg.mxu0
          %1583 = vmatpush.bf16.msra.mxu0 %v525
          %1584 = vmatpush.bf16.msra.mxu0 %v521
          %1585 = vmatpush.bf16.msra.mxu0 %v517
          %1586 = vmatpush.bf16.msra.mxu0 %v513
          %1587 = vmatpush.bf16.msra.mxu0 %v509
          %1588 = vmatpush.bf16.msra.mxu0 %v505
          %1589 = vmatpush.bf16.msra.mxu0 %v501
          %1590 = vmatpush.bf16.msra.mxu0 %v497
          %1591 = vmatmul.bf16.gmra.mxu0 %v1569
          %v1592 = vpop.f32.mrf.mxu0
          %v1593 = vadd.f32 0.0, %v1592
          %v1594 = vpop.f32.mrf.mxu0
          %1595 = vdwg.mxu0
          %1596 = vmatpush.bf16.msra.mxu0 %v526
          %1597 = vmatpush.bf16.msra.mxu0 %v522
          %1598 = vmatpush.bf16.msra.mxu0 %v518
          %1599 = vmatpush.bf16.msra.mxu0 %v514
          %1600 = vmatpush.bf16.msra.mxu0 %v510
          %1601 = vmatpush.bf16.msra.mxu0 %v506
          %1602 = vmatpush.bf16.msra.mxu0 %v502
          %1603 = vmatpush.bf16.msra.mxu0 %v498
          %1604 = vmatmul.bf16.gmra.mxu0 %v1569
          %v1605 = vpop.f32.mrf.mxu0
          %v1606 = vadd.f32 0.0, %v1605
          %v1607 = vpop.f32.mrf.mxu0
          %1608 = vdwg.mxu0
          %1609 = vmatpush.bf16.msra.mxu0 %v527
          %1610 = vmatpush.bf16.msra.mxu0 %v523
          %1611 = vmatpush.bf16.msra.mxu0 %v519
          %1612 = vmatpush.bf16.msra.mxu0 %v515
          %1613 = vmatpush.bf16.msra.mxu0 %v511
          %1614 = vmatpush.bf16.msra.mxu0 %v507
          %1615 = vmatpush.bf16.msra.mxu0 %v503
          %1616 = vmatpush.bf16.msra.mxu0 %v499
          %1617 = vmatmul.bf16.gmra.mxu0 %v1569
          %v1618 = vpop.f32.mrf.mxu0
          %v1619 = vadd.f32 0.0, %v1618
          %v1620 = vpop.f32.mrf.mxu0
          %1621 = vdwg.mxu0
          %v1626 = vrot.slane %v1593, 6
          %v1627 = vrot.slane %v1606, 4
          %v1628 = vrot.slane %v1619, 2
          %v1629 = vsel %vm619, %v1580, %v1626
          %v1630 = vsel %vm621, %v1627, %v1628
          %v1631 = vsel %vm623, %v1629, %v1630
          %v1633 = vadd.f32 %v1567, %v1631
          %v1634 = vxor.u32 %v1633, 2147483648
          %v1635 = vmul.f32 %v1634, 1.442695
          %v1636 = vpow.pop %v1635
          %v1637 = vadd.f32 %v1636, 1.0
          %v1638 = vrcp.pop %v1637
          %v1639 = vmul.f32 %v1637, %v1638
          %v1640 = vsub.f32 1.0, %v1639
          %v1641 = vmul.f32 %v1638, %v1640
          %v1642 = vadd.f32 %v1638, %v1641
          %vm1643 = vweird.f32 %v1637
          %vm1644 = vweird.f32 %v1638
          %vm1645 = vmor %vm1643, %vm1644
          %v1646 = vsel %vm1645, %v1638, %v1642
          %v1647 = vand.u32 2147483647, %v1637
          %vm1648 = vcmp.eq.f32.partialorder %v1647, 8.507059e+37
          %v1649 = vand.u32 %v1637, 2147483648
          %v1650 = vor.u32 1.1754944e-38, %v1649
          %v1651 = vsel %vm1648, %v1650, %v1646
          %v1652 = vmul.f32 1.0, %v1651
          %v1654 = vrot.slane %v1633, 2
          %v1656 = vxor.u32 %v1654, 2147483648
          %v1657 = vmul.f32 %v1656, 1.442695
          %v1658 = vpow.pop %v1657
          %v1659 = vadd.f32 %v1658, 1.0
          %v1660 = vrcp.pop %v1659
          %v1661 = vmul.f32 %v1659, %v1660
          %v1662 = vsub.f32 1.0, %v1661
          %v1663 = vmul.f32 %v1660, %v1662
          %v1664 = vadd.f32 %v1660, %v1663
          %vm1665 = vweird.f32 %v1659
          %vm1666 = vweird.f32 %v1660
          %vm1667 = vmor %vm1665, %vm1666
          %v1668 = vsel %vm1667, %v1660, %v1664
          %v1669 = vand.u32 2147483647, %v1659
          %vm1670 = vcmp.eq.f32.partialorder %v1669, 8.507059e+37
          %v1671 = vand.u32 %v1659, 2147483648
          %v1672 = vor.u32 1.1754944e-38, %v1671
          %v1673 = vsel %vm1670, %v1672, %v1668
          %v1674 = vmul.f32 1.0, %v1673
          %v1675 = vrot.slane %v1633, 4
          %v1677 = vtanh.pop %v1675
          %v1678 = vrot.slane %v1633, 6
          %v1680 = vxor.u32 %v1678, 2147483648
          %v1681 = vmul.f32 %v1680, 1.442695
          %v1682 = vpow.pop %v1681
          %v1683 = vadd.f32 %v1682, 1.0
          %v1684 = vrcp.pop %v1683
          %v1685 = vmul.f32 %v1683, %v1684
          %v1686 = vsub.f32 1.0, %v1685
          %v1687 = vmul.f32 %v1684, %v1686
          %v1688 = vadd.f32 %v1684, %v1687
          %vm1689 = vweird.f32 %v1683
          %vm1690 = vweird.f32 %v1684
          %vm1691 = vmor %vm1689, %vm1690
          %v1692 = vsel %vm1691, %v1684, %v1688
          %v1693 = vand.u32 2147483647, %v1683
          %vm1694 = vcmp.eq.f32.partialorder %v1693, 8.507059e+37
          %v1695 = vand.u32 %v1683, 2147483648
          %v1696 = vor.u32 1.1754944e-38, %v1695
          %v1697 = vsel %vm1694, %v1696, %v1692
          %v1698 = vmul.f32 1.0, %v1697
          %v1699 = vld [vmem:[#allocation3] sm:$0x3]
          %v1700 = vmul.f32 %v1674, %v1699
          %v1701 = vmul.f32 %v1652, %v1677
          %v1702 = vadd.f32 %v1700, %v1701
          %v1703 = vtanh.pop %v1702
          %v1704 = vmul.f32 %v1698, %v1703
          %1705 = vst [vmem:[#allocation3] sm:$0x3] %v1702
          %1706 = vst [vmem:[#allocation2] sm:$0x3] %v1704
          %v1707 = vpack.c.bf16 %v1704, %v1704
          %s1708 = scalar_lea.vmem %s342, 7 [#allocation6]
          %1709 = vst [vmem:[%s1708] sm:$0x1] %v1707
        $region97: #{bert_bilstm_forward.6} parent=80 // pred_fallthru
          _
        %p1710 = scmp.eq.s32.totalorder %s17, 1
        // Predicated region
        $region98: #{bert_bilstm_forward.6} parent=80 // pred_check
          %p1711 = pneg %p1710
        $region99: #{bert_bilstm_forward.6} parent=80 // pred_check_branch
          %1713 = sbr.rel (%p1711) target = $region101
        $region100: #{bert_bilstm_forward.6} parent=80 // pred_region
          %s1714 = scalar_lea.vmem %s314, 56 [#allocation4]
          %v1715 = vld [vmem:[%s1714] sm:$0xff]
          %v1716 = vld [vmem:[#allocation2] sm:$0x3]
          %v1717 = vpack.c.bf16 %v1716, %v1716
          %v1750 = vunpack.c.l.b16 %v361
          %v1751 = vunpack.c.h.b16 %v361
          %v1752 = vunpack.c.l.b16 %v362
          %v1753 = vunpack.c.h.b16 %v362
          %v1754 = vunpack.c.l.b16 %v363
          %v1755 = vunpack.c.h.b16 %v363
          %v1756 = vunpack.c.l.b16 %v364
          %v1757 = vunpack.c.h.b16 %v364
          %v1758 = vunpack.c.l.b16 %v365
          %v1759 = vunpack.c.h.b16 %v365
          %v1760 = vunpack.c.l.b16 %v366
          %v1761 = vunpack.c.h.b16 %v366
          %v1762 = vunpack.c.l.b16 %v367
          %v1763 = vunpack.c.h.b16 %v367
          %v1764 = vunpack.c.l.b16 %v368
          %v1765 = vunpack.c.h.b16 %v368
          %v1766 = vunpack.c.l.b16 %v369
          %v1767 = vunpack.c.h.b16 %v369
          %v1768 = vunpack.c.l.b16 %v370
          %v1769 = vunpack.c.h.b16 %v370
          %v1770 = vunpack.c.l.b16 %v371
          %v1771 = vunpack.c.h.b16 %v371
          %v1772 = vunpack.c.l.b16 %v372
          %v1773 = vunpack.c.h.b16 %v372
          %v1774 = vunpack.c.l.b16 %v373
          %v1775 = vunpack.c.h.b16 %v373
          %v1776 = vunpack.c.l.b16 %v374
          %v1777 = vunpack.c.h.b16 %v374
          %v1778 = vunpack.c.l.b16 %v375
          %v1779 = vunpack.c.h.b16 %v375
          %v1780 = vunpack.c.l.b16 %v376
          %v1781 = vunpack.c.h.b16 %v376
          %v1782 = vunpack.c.l.b16 %v377
          %v1783 = vunpack.c.h.b16 %v377
          %v1784 = vunpack.c.l.b16 %v378
          %v1785 = vunpack.c.h.b16 %v378
          %v1786 = vunpack.c.l.b16 %v379
          %v1787 = vunpack.c.h.b16 %v379
          %v1788 = vunpack.c.l.b16 %v380
          %v1789 = vunpack.c.h.b16 %v380
          %v1790 = vunpack.c.l.b16 %v381
          %v1791 = vunpack.c.h.b16 %v381
          %v1792 = vunpack.c.l.b16 %v382
          %v1793 = vunpack.c.h.b16 %v382
          %v1794 = vunpack.c.l.b16 %v383
          %v1795 = vunpack.c.h.b16 %v383
          %v1796 = vunpack.c.l.b16 %v384
          %v1797 = vunpack.c.h.b16 %v384
          %v1798 = vunpack.c.l.b16 %v385
          %v1799 = vunpack.c.h.b16 %v385
          %v1800 = vunpack.c.l.b16 %v386
          %v1801 = vunpack.c.h.b16 %v386
          %v1802 = vunpack.c.l.b16 %v387
          %v1803 = vunpack.c.h.b16 %v387
          %v1804 = vunpack.c.l.b16 %v388
          %v1805 = vunpack.c.h.b16 %v388
          %v1806 = vunpack.c.l.b16 %v389
          %v1807 = vunpack.c.h.b16 %v389
          %v1808 = vunpack.c.l.b16 %v390
          %v1809 = vunpack.c.h.b16 %v390
          %v1810 = vunpack.c.l.b16 %v391
          %v1811 = vunpack.c.h.b16 %v391
          %v1812 = vunpack.c.l.b16 %v392
          %v1813 = vunpack.c.h.b16 %v392
          %v1814 = vpack.c.b16 %v1754, %v1750
          %v1815 = vpack.c.b16 %v1755, %v1751
          %v1816 = vpack.c.b16 %v1756, %v1752
          %v1817 = vpack.c.b16 %v1757, %v1753
          %v1818 = vpack.c.b16 %v1762, %v1758
          %v1819 = vpack.c.b16 %v1763, %v1759
          %v1820 = vpack.c.b16 %v1764, %v1760
          %v1821 = vpack.c.b16 %v1765, %v1761
          %v1822 = vpack.c.b16 %v1770, %v1766
          %v1823 = vpack.c.b16 %v1771, %v1767
          %v1824 = vpack.c.b16 %v1772, %v1768
          %v1825 = vpack.c.b16 %v1773, %v1769
          %v1826 = vpack.c.b16 %v1778, %v1774
          %v1827 = vpack.c.b16 %v1779, %v1775
          %v1828 = vpack.c.b16 %v1780, %v1776
          %v1829 = vpack.c.b16 %v1781, %v1777
          %v1830 = vpack.c.b16 %v1786, %v1782
          %v1831 = vpack.c.b16 %v1787, %v1783
          %v1832 = vpack.c.b16 %v1788, %v1784
          %v1833 = vpack.c.b16 %v1789, %v1785
          %v1834 = vpack.c.b16 %v1794, %v1790
          %v1835 = vpack.c.b16 %v1795, %v1791
          %v1836 = vpack.c.b16 %v1796, %v1792
          %v1837 = vpack.c.b16 %v1797, %v1793
          %v1838 = vpack.c.b16 %v1802, %v1798
          %v1839 = vpack.c.b16 %v1803, %v1799
          %v1840 = vpack.c.b16 %v1804, %v1800
          %v1841 = vpack.c.b16 %v1805, %v1801
          %v1842 = vpack.c.b16 %v1810, %v1806
          %v1843 = vpack.c.b16 %v1811, %v1807
          %v1844 = vpack.c.b16 %v1812, %v1808
          %v1845 = vpack.c.b16 %v1813, %v1809
          %1878 = vmatpush.bf16.msra.mxu0 %v1842
          %1879 = vmatpush.bf16.msra.mxu0 %v1838
          %1880 = vmatpush.bf16.msra.mxu0 %v1834
          %1881 = vmatpush.bf16.msra.mxu0 %v1830
          %1882 = vmatpush.bf16.msra.mxu0 %v1826
          %1883 = vmatpush.bf16.msra.mxu0 %v1822
          %1884 = vmatpush.bf16.msra.mxu0 %v1818
          %1885 = vmatpush.bf16.msra.mxu0 %v1814
          %1886 = vmatmul.bf16.gmra.mxu0 %v1717
          %v1887 = vpop.f32.mrf.mxu0
          %v1888 = vadd.f32 0.0, %v1887
          %v1889 = vpop.f32.mrf.mxu0
          %1890 = vdwg.mxu0
          %1891 = vmatpush.bf16.msra.mxu0 %v1843
          %1892 = vmatpush.bf16.msra.mxu0 %v1839
          %1893 = vmatpush.bf16.msra.mxu0 %v1835
          %1894 = vmatpush.bf16.msra.mxu0 %v1831
          %1895 = vmatpush.bf16.msra.mxu0 %v1827
          %1896 = vmatpush.bf16.msra.mxu0 %v1823
          %1897 = vmatpush.bf16.msra.mxu0 %v1819
          %1898 = vmatpush.bf16.msra.mxu0 %v1815
          %1899 = vmatmul.bf16.gmra.mxu0 %v1717
          %v1900 = vpop.f32.mrf.mxu0
          %v1901 = vadd.f32 0.0, %v1900
          %v1902 = vpop.f32.mrf.mxu0
          %1903 = vdwg.mxu0
          %1904 = vmatpush.bf16.msra.mxu0 %v1844
          %1905 = vmatpush.bf16.msra.mxu0 %v1840
          %1906 = vmatpush.bf16.msra.mxu0 %v1836
          %1907 = vmatpush.bf16.msra.mxu0 %v1832
          %1908 = vmatpush.bf16.msra.mxu0 %v1828
          %1909 = vmatpush.bf16.msra.mxu0 %v1824
          %1910 = vmatpush.bf16.msra.mxu0 %v1820
          %1911 = vmatpush.bf16.msra.mxu0 %v1816
          %1912 = vmatmul.bf16.gmra.mxu0 %v1717
          %v1913 = vpop.f32.mrf.mxu0
          %v1914 = vadd.f32 0.0, %v1913
          %v1915 = vpop.f32.mrf.mxu0
          %1916 = vdwg.mxu0
          %1917 = vmatpush.bf16.msra.mxu0 %v1845
          %1918 = vmatpush.bf16.msra.mxu0 %v1841
          %1919 = vmatpush.bf16.msra.mxu0 %v1837
          %1920 = vmatpush.bf16.msra.mxu0 %v1833
          %1921 = vmatpush.bf16.msra.mxu0 %v1829
          %1922 = vmatpush.bf16.msra.mxu0 %v1825
          %1923 = vmatpush.bf16.msra.mxu0 %v1821
          %1924 = vmatpush.bf16.msra.mxu0 %v1817
          %1925 = vmatmul.bf16.gmra.mxu0 %v1717
          %v1926 = vpop.f32.mrf.mxu0
          %v1927 = vadd.f32 0.0, %v1926
          %v1928 = vpop.f32.mrf.mxu0
          %1929 = vdwg.mxu0
          %v1934 = vrot.slane %v1901, 6
          %v1935 = vrot.slane %v1914, 4
          %v1936 = vrot.slane %v1927, 2
          %vm1937 = vcmask 1041408
          %v1938 = vsel %vm1937, %v1888, %v1934
          %vm1939 = vcmask 1045508
          %v1940 = vsel %vm1939, %v1935, %v1936
          %vm1941 = vcmask 1043456
          %v1942 = vsel %vm1941, %v1938, %v1940
          %v1944 = vadd.f32 %v1715, %v1942
          %v1945 = vxor.u32 %v1944, 2147483648
          %v1946 = vmul.f32 %v1945, 1.442695
          %v1947 = vpow.pop %v1946
          %v1948 = vadd.f32 %v1947, 1.0
          %v1949 = vrcp.pop %v1948
          %v1950 = vmul.f32 %v1948, %v1949
          %v1951 = vsub.f32 1.0, %v1950
          %v1952 = vmul.f32 %v1949, %v1951
          %v1953 = vadd.f32 %v1949, %v1952
          %vm1954 = vweird.f32 %v1948
          %vm1955 = vweird.f32 %v1949
          %vm1956 = vmor %vm1954, %vm1955
          %v1957 = vsel %vm1956, %v1949, %v1953
          %v1958 = vand.u32 2147483647, %v1948
          %vm1959 = vcmp.eq.f32.partialorder %v1958, 8.507059e+37
          %v1960 = vand.u32 %v1948, 2147483648
          %v1961 = vor.u32 1.1754944e-38, %v1960
          %v1962 = vsel %vm1959, %v1961, %v1957
          %v1963 = vmul.f32 1.0, %v1962
          %v1965 = vrot.slane %v1944, 2
          %v1967 = vxor.u32 %v1965, 2147483648
          %v1968 = vmul.f32 %v1967, 1.442695
          %v1969 = vpow.pop %v1968
          %v1970 = vadd.f32 %v1969, 1.0
          %v1971 = vrcp.pop %v1970
          %v1972 = vmul.f32 %v1970, %v1971
          %v1973 = vsub.f32 1.0, %v1972
          %v1974 = vmul.f32 %v1971, %v1973
          %v1975 = vadd.f32 %v1971, %v1974
          %vm1976 = vweird.f32 %v1970
          %vm1977 = vweird.f32 %v1971
          %vm1978 = vmor %vm1976, %vm1977
          %v1979 = vsel %vm1978, %v1971, %v1975
          %v1980 = vand.u32 2147483647, %v1970
          %vm1981 = vcmp.eq.f32.partialorder %v1980, 8.507059e+37
          %v1982 = vand.u32 %v1970, 2147483648
          %v1983 = vor.u32 1.1754944e-38, %v1982
          %v1984 = vsel %vm1981, %v1983, %v1979
          %v1985 = vmul.f32 1.0, %v1984
          %v1986 = vrot.slane %v1944, 4
          %v1988 = vtanh.pop %v1986
          %v1989 = vrot.slane %v1944, 6
          %v1991 = vxor.u32 %v1989, 2147483648
          %v1992 = vmul.f32 %v1991, 1.442695
          %v1993 = vpow.pop %v1992
          %v1994 = vadd.f32 %v1993, 1.0
          %v1995 = vrcp.pop %v1994
          %v1996 = vmul.f32 %v1994, %v1995
          %v1997 = vsub.f32 1.0, %v1996
          %v1998 = vmul.f32 %v1995, %v1997
          %v1999 = vadd.f32 %v1995, %v1998
          %vm2000 = vweird.f32 %v1994
          %vm2001 = vweird.f32 %v1995
          %vm2002 = vmor %vm2000, %vm2001
          %v2003 = vsel %vm2002, %v1995, %v1999
          %v2004 = vand.u32 2147483647, %v1994
          %vm2005 = vcmp.eq.f32.partialorder %v2004, 8.507059e+37
          %v2006 = vand.u32 %v1994, 2147483648
          %v2007 = vor.u32 1.1754944e-38, %v2006
          %v2008 = vsel %vm2005, %v2007, %v2003
          %v2009 = vmul.f32 1.0, %v2008
          %v2010 = vld [vmem:[#allocation3] sm:$0x3]
          %v2011 = vmul.f32 %v1985, %v2010
          %v2012 = vmul.f32 %v1963, %v1988
          %v2013 = vadd.f32 %v2011, %v2012
          %v2014 = vtanh.pop %v2013
          %v2015 = vmul.f32 %v2009, %v2014
          %2016 = vst [vmem:[#allocation3] sm:$0x3] %v2013
          %2017 = vst [vmem:[#allocation2] sm:$0x3] %v2015
          %v2018 = vpack.c.bf16 %v2015, %v2015
          %s2019 = scalar_lea.vmem %s342, 7 [#allocation6]
          %2020 = vst [vmem:[%s2019] sm:$0x1] %v2018
          %s2021 = scalar_lea.vmem %s314, 48 [#allocation4]
          %v2022 = vld [vmem:[%s2021] sm:$0xff]
          %v2023 = vld [vmem:[#allocation2] sm:$0x3]
          %v2024 = vpack.c.bf16 %v2023, %v2023
          %2025 = vmatpush.bf16.msra.mxu0 %v1842
          %2026 = vmatpush.bf16.msra.mxu0 %v1838
          %2027 = vmatpush.bf16.msra.mxu0 %v1834
          %2028 = vmatpush.bf16.msra.mxu0 %v1830
          %2029 = vmatpush.bf16.msra.mxu0 %v1826
          %2030 = vmatpush.bf16.msra.mxu0 %v1822
          %2031 = vmatpush.bf16.msra.mxu0 %v1818
          %2032 = vmatpush.bf16.msra.mxu0 %v1814
          %2033 = vmatmul.bf16.gmra.mxu0 %v2024
          %v2034 = vpop.f32.mrf.mxu0
          %v2035 = vadd.f32 0.0, %v2034
          %v2036 = vpop.f32.mrf.mxu0
          %2037 = vdwg.mxu0
          %2038 = vmatpush.bf16.msra.mxu0 %v1843
          %2039 = vmatpush.bf16.msra.mxu0 %v1839
          %2040 = vmatpush.bf16.msra.mxu0 %v1835
          %2041 = vmatpush.bf16.msra.mxu0 %v1831
          %2042 = vmatpush.bf16.msra.mxu0 %v1827
          %2043 = vmatpush.bf16.msra.mxu0 %v1823
          %2044 = vmatpush.bf16.msra.mxu0 %v1819
          %2045 = vmatpush.bf16.msra.mxu0 %v1815
          %2046 = vmatmul.bf16.gmra.mxu0 %v2024
          %v2047 = vpop.f32.mrf.mxu0
          %v2048 = vadd.f32 0.0, %v2047
          %v2049 = vpop.f32.mrf.mxu0
          %2050 = vdwg.mxu0
          %2051 = vmatpush.bf16.msra.mxu0 %v1844
          %2052 = vmatpush.bf16.msra.mxu0 %v1840
          %2053 = vmatpush.bf16.msra.mxu0 %v1836
          %2054 = vmatpush.bf16.msra.mxu0 %v1832
          %2055 = vmatpush.bf16.msra.mxu0 %v1828
          %2056 = vmatpush.bf16.msra.mxu0 %v1824
          %2057 = vmatpush.bf16.msra.mxu0 %v1820
          %2058 = vmatpush.bf16.msra.mxu0 %v1816
          %2059 = vmatmul.bf16.gmra.mxu0 %v2024
          %v2060 = vpop.f32.mrf.mxu0
          %v2061 = vadd.f32 0.0, %v2060
          %v2062 = vpop.f32.mrf.mxu0
          %2063 = vdwg.mxu0
          %2064 = vmatpush.bf16.msra.mxu0 %v1845
          %2065 = vmatpush.bf16.msra.mxu0 %v1841
          %2066 = vmatpush.bf16.msra.mxu0 %v1837
          %2067 = vmatpush.bf16.msra.mxu0 %v1833
          %2068 = vmatpush.bf16.msra.mxu0 %v1829
          %2069 = vmatpush.bf16.msra.mxu0 %v1825
          %2070 = vmatpush.bf16.msra.mxu0 %v1821
          %2071 = vmatpush.bf16.msra.mxu0 %v1817
          %2072 = vmatmul.bf16.gmra.mxu0 %v2024
          %v2073 = vpop.f32.mrf.mxu0
          %v2074 = vadd.f32 0.0, %v2073
          %v2075 = vpop.f32.mrf.mxu0
          %2076 = vdwg.mxu0
          %v2081 = vrot.slane %v2048, 6
          %v2082 = vrot.slane %v2061, 4
          %v2083 = vrot.slane %v2074, 2
          %v2084 = vsel %vm1937, %v2035, %v2081
          %v2085 = vsel %vm1939, %v2082, %v2083
          %v2086 = vsel %vm1941, %v2084, %v2085
          %v2088 = vadd.f32 %v2022, %v2086
          %v2089 = vxor.u32 %v2088, 2147483648
          %v2090 = vmul.f32 %v2089, 1.442695
          %v2091 = vpow.pop %v2090
          %v2092 = vadd.f32 %v2091, 1.0
          %v2093 = vrcp.pop %v2092
          %v2094 = vmul.f32 %v2092, %v2093
          %v2095 = vsub.f32 1.0, %v2094
          %v2096 = vmul.f32 %v2093, %v2095
          %v2097 = vadd.f32 %v2093, %v2096
          %vm2098 = vweird.f32 %v2092
          %vm2099 = vweird.f32 %v2093
          %vm2100 = vmor %vm2098, %vm2099
          %v2101 = vsel %vm2100, %v2093, %v2097
          %v2102 = vand.u32 2147483647, %v2092
          %vm2103 = vcmp.eq.f32.partialorder %v2102, 8.507059e+37
          %v2104 = vand.u32 %v2092, 2147483648
          %v2105 = vor.u32 1.1754944e-38, %v2104
          %v2106 = vsel %vm2103, %v2105, %v2101
          %v2107 = vmul.f32 1.0, %v2106
          %v2109 = vrot.slane %v2088, 2
          %v2111 = vxor.u32 %v2109, 2147483648
          %v2112 = vmul.f32 %v2111, 1.442695
          %v2113 = vpow.pop %v2112
          %v2114 = vadd.f32 %v2113, 1.0
          %v2115 = vrcp.pop %v2114
          %v2116 = vmul.f32 %v2114, %v2115
          %v2117 = vsub.f32 1.0, %v2116
          %v2118 = vmul.f32 %v2115, %v2117
          %v2119 = vadd.f32 %v2115, %v2118
          %vm2120 = vweird.f32 %v2114
          %vm2121 = vweird.f32 %v2115
          %vm2122 = vmor %vm2120, %vm2121
          %v2123 = vsel %vm2122, %v2115, %v2119
          %v2124 = vand.u32 2147483647, %v2114
          %vm2125 = vcmp.eq.f32.partialorder %v2124, 8.507059e+37
          %v2126 = vand.u32 %v2114, 2147483648
          %v2127 = vor.u32 1.1754944e-38, %v2126
          %v2128 = vsel %vm2125, %v2127, %v2123
          %v2129 = vmul.f32 1.0, %v2128
          %v2130 = vrot.slane %v2088, 4
          %v2132 = vtanh.pop %v2130
          %v2133 = vrot.slane %v2088, 6
          %v2135 = vxor.u32 %v2133, 2147483648
          %v2136 = vmul.f32 %v2135, 1.442695
          %v2137 = vpow.pop %v2136
          %v2138 = vadd.f32 %v2137, 1.0
          %v2139 = vrcp.pop %v2138
          %v2140 = vmul.f32 %v2138, %v2139
          %v2141 = vsub.f32 1.0, %v2140
          %v2142 = vmul.f32 %v2139, %v2141
          %v2143 = vadd.f32 %v2139, %v2142
          %vm2144 = vweird.f32 %v2138
          %vm2145 = vweird.f32 %v2139
          %vm2146 = vmor %vm2144, %vm2145
          %v2147 = vsel %vm2146, %v2139, %v2143
          %v2148 = vand.u32 2147483647, %v2138
          %vm2149 = vcmp.eq.f32.partialorder %v2148, 8.507059e+37
          %v2150 = vand.u32 %v2138, 2147483648
          %v2151 = vor.u32 1.1754944e-38, %v2150
          %v2152 = vsel %vm2149, %v2151, %v2147
          %v2153 = vmul.f32 1.0, %v2152
          %v2154 = vld [vmem:[#allocation3] sm:$0x3]
          %v2155 = vmul.f32 %v2129, %v2154
          %v2156 = vmul.f32 %v2107, %v2132
          %v2157 = vadd.f32 %v2155, %v2156
          %v2158 = vtanh.pop %v2157
          %v2159 = vmul.f32 %v2153, %v2158
          %2160 = vst [vmem:[#allocation3] sm:$0x3] %v2157
          %2161 = vst [vmem:[#allocation2] sm:$0x3] %v2159
          %v2162 = vpack.c.bf16 %v2159, %v2159
          %s2163 = scalar_lea.vmem %s342, 6 [#allocation6]
          %2164 = vst [vmem:[%s2163] sm:$0x1] %v2162
          %s2165 = scalar_lea.vmem %s314, 40 [#allocation4]
          %v2166 = vld [vmem:[%s2165] sm:$0xff]
          %v2167 = vld [vmem:[#allocation2] sm:$0x3]
          %v2168 = vpack.c.bf16 %v2167, %v2167
          %2169 = vmatpush.bf16.msra.mxu0 %v1842
          %2170 = vmatpush.bf16.msra.mxu0 %v1838
          %2171 = vmatpush.bf16.msra.mxu0 %v1834
          %2172 = vmatpush.bf16.msra.mxu0 %v1830
          %2173 = vmatpush.bf16.msra.mxu0 %v1826
          %2174 = vmatpush.bf16.msra.mxu0 %v1822
          %2175 = vmatpush.bf16.msra.mxu0 %v1818
          %2176 = vmatpush.bf16.msra.mxu0 %v1814
          %2177 = vmatmul.bf16.gmra.mxu0 %v2168
          %v2178 = vpop.f32.mrf.mxu0
          %v2179 = vadd.f32 0.0, %v2178
          %v2180 = vpop.f32.mrf.mxu0
          %2181 = vdwg.mxu0
          %2182 = vmatpush.bf16.msra.mxu0 %v1843
          %2183 = vmatpush.bf16.msra.mxu0 %v1839
          %2184 = vmatpush.bf16.msra.mxu0 %v1835
          %2185 = vmatpush.bf16.msra.mxu0 %v1831
          %2186 = vmatpush.bf16.msra.mxu0 %v1827
          %2187 = vmatpush.bf16.msra.mxu0 %v1823
          %2188 = vmatpush.bf16.msra.mxu0 %v1819
          %2189 = vmatpush.bf16.msra.mxu0 %v1815
          %2190 = vmatmul.bf16.gmra.mxu0 %v2168
          %v2191 = vpop.f32.mrf.mxu0
          %v2192 = vadd.f32 0.0, %v2191
          %v2193 = vpop.f32.mrf.mxu0
          %2194 = vdwg.mxu0
          %2195 = vmatpush.bf16.msra.mxu0 %v1844
          %2196 = vmatpush.bf16.msra.mxu0 %v1840
          %2197 = vmatpush.bf16.msra.mxu0 %v1836
          %2198 = vmatpush.bf16.msra.mxu0 %v1832
          %2199 = vmatpush.bf16.msra.mxu0 %v1828
          %2200 = vmatpush.bf16.msra.mxu0 %v1824
          %2201 = vmatpush.bf16.msra.mxu0 %v1820
          %2202 = vmatpush.bf16.msra.mxu0 %v1816
          %2203 = vmatmul.bf16.gmra.mxu0 %v2168
          %v2204 = vpop.f32.mrf.mxu0
          %v2205 = vadd.f32 0.0, %v2204
          %v2206 = vpop.f32.mrf.mxu0
          %2207 = vdwg.mxu0
          %2208 = vmatpush.bf16.msra.mxu0 %v1845
          %2209 = vmatpush.bf16.msra.mxu0 %v1841
          %2210 = vmatpush.bf16.msra.mxu0 %v1837
          %2211 = vmatpush.bf16.msra.mxu0 %v1833
          %2212 = vmatpush.bf16.msra.mxu0 %v1829
          %2213 = vmatpush.bf16.msra.mxu0 %v1825
          %2214 = vmatpush.bf16.msra.mxu0 %v1821
          %2215 = vmatpush.bf16.msra.mxu0 %v1817
          %2216 = vmatmul.bf16.gmra.mxu0 %v2168
          %v2217 = vpop.f32.mrf.mxu0
          %v2218 = vadd.f32 0.0, %v2217
          %v2219 = vpop.f32.mrf.mxu0
          %2220 = vdwg.mxu0
          %v2225 = vrot.slane %v2192, 6
          %v2226 = vrot.slane %v2205, 4
          %v2227 = vrot.slane %v2218, 2
          %v2228 = vsel %vm1937, %v2179, %v2225
          %v2229 = vsel %vm1939, %v2226, %v2227
          %v2230 = vsel %vm1941, %v2228, %v2229
          %v2232 = vadd.f32 %v2166, %v2230
          %v2233 = vxor.u32 %v2232, 2147483648
          %v2234 = vmul.f32 %v2233, 1.442695
          %v2235 = vpow.pop %v2234
          %v2236 = vadd.f32 %v2235, 1.0
          %v2237 = vrcp.pop %v2236
          %v2238 = vmul.f32 %v2236, %v2237
          %v2239 = vsub.f32 1.0, %v2238
          %v2240 = vmul.f32 %v2237, %v2239
          %v2241 = vadd.f32 %v2237, %v2240
          %vm2242 = vweird.f32 %v2236
          %vm2243 = vweird.f32 %v2237
          %vm2244 = vmor %vm2242, %vm2243
          %v2245 = vsel %vm2244, %v2237, %v2241
          %v2246 = vand.u32 2147483647, %v2236
          %vm2247 = vcmp.eq.f32.partialorder %v2246, 8.507059e+37
          %v2248 = vand.u32 %v2236, 2147483648
          %v2249 = vor.u32 1.1754944e-38, %v2248
          %v2250 = vsel %vm2247, %v2249, %v2245
          %v2251 = vmul.f32 1.0, %v2250
          %v2253 = vrot.slane %v2232, 2
          %v2255 = vxor.u32 %v2253, 2147483648
          %v2256 = vmul.f32 %v2255, 1.442695
          %v2257 = vpow.pop %v2256
          %v2258 = vadd.f32 %v2257, 1.0
          %v2259 = vrcp.pop %v2258
          %v2260 = vmul.f32 %v2258, %v2259
          %v2261 = vsub.f32 1.0, %v2260
          %v2262 = vmul.f32 %v2259, %v2261
          %v2263 = vadd.f32 %v2259, %v2262
          %vm2264 = vweird.f32 %v2258
          %vm2265 = vweird.f32 %v2259
          %vm2266 = vmor %vm2264, %vm2265
          %v2267 = vsel %vm2266, %v2259, %v2263
          %v2268 = vand.u32 2147483647, %v2258
          %vm2269 = vcmp.eq.f32.partialorder %v2268, 8.507059e+37
          %v2270 = vand.u32 %v2258, 2147483648
          %v2271 = vor.u32 1.1754944e-38, %v2270
          %v2272 = vsel %vm2269, %v2271, %v2267
          %v2273 = vmul.f32 1.0, %v2272
          %v2274 = vrot.slane %v2232, 4
          %v2276 = vtanh.pop %v2274
          %v2277 = vrot.slane %v2232, 6
          %v2279 = vxor.u32 %v2277, 2147483648
          %v2280 = vmul.f32 %v2279, 1.442695
          %v2281 = vpow.pop %v2280
          %v2282 = vadd.f32 %v2281, 1.0
          %v2283 = vrcp.pop %v2282
          %v2284 = vmul.f32 %v2282, %v2283
          %v2285 = vsub.f32 1.0, %v2284
          %v2286 = vmul.f32 %v2283, %v2285
          %v2287 = vadd.f32 %v2283, %v2286
          %vm2288 = vweird.f32 %v2282
          %vm2289 = vweird.f32 %v2283
          %vm2290 = vmor %vm2288, %vm2289
          %v2291 = vsel %vm2290, %v2283, %v2287
          %v2292 = vand.u32 2147483647, %v2282
          %vm2293 = vcmp.eq.f32.partialorder %v2292, 8.507059e+37
          %v2294 = vand.u32 %v2282, 2147483648
          %v2295 = vor.u32 1.1754944e-38, %v2294
          %v2296 = vsel %vm2293, %v2295, %v2291
          %v2297 = vmul.f32 1.0, %v2296
          %v2298 = vld [vmem:[#allocation3] sm:$0x3]
          %v2299 = vmul.f32 %v2273, %v2298
          %v2300 = vmul.f32 %v2251, %v2276
          %v2301 = vadd.f32 %v2299, %v2300
          %v2302 = vtanh.pop %v2301
          %v2303 = vmul.f32 %v2297, %v2302
          %2304 = vst [vmem:[#allocation3] sm:$0x3] %v2301
          %2305 = vst [vmem:[#allocation2] sm:$0x3] %v2303
          %v2306 = vpack.c.bf16 %v2303, %v2303
          %s2307 = scalar_lea.vmem %s342, 5 [#allocation6]
          %2308 = vst [vmem:[%s2307] sm:$0x1] %v2306
          %s2309 = scalar_lea.vmem %s314, 32 [#allocation4]
          %v2310 = vld [vmem:[%s2309] sm:$0xff]
          %v2311 = vld [vmem:[#allocation2] sm:$0x3]
          %v2312 = vpack.c.bf16 %v2311, %v2311
          %2313 = vmatpush.bf16.msra.mxu0 %v1842
          %2314 = vmatpush.bf16.msra.mxu0 %v1838
          %2315 = vmatpush.bf16.msra.mxu0 %v1834
          %2316 = vmatpush.bf16.msra.mxu0 %v1830
          %2317 = vmatpush.bf16.msra.mxu0 %v1826
          %2318 = vmatpush.bf16.msra.mxu0 %v1822
          %2319 = vmatpush.bf16.msra.mxu0 %v1818
          %2320 = vmatpush.bf16.msra.mxu0 %v1814
          %2321 = vmatmul.bf16.gmra.mxu0 %v2312
          %v2322 = vpop.f32.mrf.mxu0
          %v2323 = vadd.f32 0.0, %v2322
          %v2324 = vpop.f32.mrf.mxu0
          %2325 = vdwg.mxu0
          %2326 = vmatpush.bf16.msra.mxu0 %v1843
          %2327 = vmatpush.bf16.msra.mxu0 %v1839
          %2328 = vmatpush.bf16.msra.mxu0 %v1835
          %2329 = vmatpush.bf16.msra.mxu0 %v1831
          %2330 = vmatpush.bf16.msra.mxu0 %v1827
          %2331 = vmatpush.bf16.msra.mxu0 %v1823
          %2332 = vmatpush.bf16.msra.mxu0 %v1819
          %2333 = vmatpush.bf16.msra.mxu0 %v1815
          %2334 = vmatmul.bf16.gmra.mxu0 %v2312
          %v2335 = vpop.f32.mrf.mxu0
          %v2336 = vadd.f32 0.0, %v2335
          %v2337 = vpop.f32.mrf.mxu0
          %2338 = vdwg.mxu0
          %2339 = vmatpush.bf16.msra.mxu0 %v1844
          %2340 = vmatpush.bf16.msra.mxu0 %v1840
          %2341 = vmatpush.bf16.msra.mxu0 %v1836
          %2342 = vmatpush.bf16.msra.mxu0 %v1832
          %2343 = vmatpush.bf16.msra.mxu0 %v1828
          %2344 = vmatpush.bf16.msra.mxu0 %v1824
          %2345 = vmatpush.bf16.msra.mxu0 %v1820
          %2346 = vmatpush.bf16.msra.mxu0 %v1816
          %2347 = vmatmul.bf16.gmra.mxu0 %v2312
          %v2348 = vpop.f32.mrf.mxu0
          %v2349 = vadd.f32 0.0, %v2348
          %v2350 = vpop.f32.mrf.mxu0
          %2351 = vdwg.mxu0
          %2352 = vmatpush.bf16.msra.mxu0 %v1845
          %2353 = vmatpush.bf16.msra.mxu0 %v1841
          %2354 = vmatpush.bf16.msra.mxu0 %v1837
          %2355 = vmatpush.bf16.msra.mxu0 %v1833
          %2356 = vmatpush.bf16.msra.mxu0 %v1829
          %2357 = vmatpush.bf16.msra.mxu0 %v1825
          %2358 = vmatpush.bf16.msra.mxu0 %v1821
          %2359 = vmatpush.bf16.msra.mxu0 %v1817
          %2360 = vmatmul.bf16.gmra.mxu0 %v2312
          %v2361 = vpop.f32.mrf.mxu0
          %v2362 = vadd.f32 0.0, %v2361
          %v2363 = vpop.f32.mrf.mxu0
          %2364 = vdwg.mxu0
          %v2369 = vrot.slane %v2336, 6
          %v2370 = vrot.slane %v2349, 4
          %v2371 = vrot.slane %v2362, 2
          %v2372 = vsel %vm1937, %v2323, %v2369
          %v2373 = vsel %vm1939, %v2370, %v2371
          %v2374 = vsel %vm1941, %v2372, %v2373
          %v2376 = vadd.f32 %v2310, %v2374
          %v2377 = vxor.u32 %v2376, 2147483648
          %v2378 = vmul.f32 %v2377, 1.442695
          %v2379 = vpow.pop %v2378
          %v2380 = vadd.f32 %v2379, 1.0
          %v2381 = vrcp.pop %v2380
          %v2382 = vmul.f32 %v2380, %v2381
          %v2383 = vsub.f32 1.0, %v2382
          %v2384 = vmul.f32 %v2381, %v2383
          %v2385 = vadd.f32 %v2381, %v2384
          %vm2386 = vweird.f32 %v2380
          %vm2387 = vweird.f32 %v2381
          %vm2388 = vmor %vm2386, %vm2387
          %v2389 = vsel %vm2388, %v2381, %v2385
          %v2390 = vand.u32 2147483647, %v2380
          %vm2391 = vcmp.eq.f32.partialorder %v2390, 8.507059e+37
          %v2392 = vand.u32 %v2380, 2147483648
          %v2393 = vor.u32 1.1754944e-38, %v2392
          %v2394 = vsel %vm2391, %v2393, %v2389
          %v2395 = vmul.f32 1.0, %v2394
          %v2397 = vrot.slane %v2376, 2
          %v2399 = vxor.u32 %v2397, 2147483648
          %v2400 = vmul.f32 %v2399, 1.442695
          %v2401 = vpow.pop %v2400
          %v2402 = vadd.f32 %v2401, 1.0
          %v2403 = vrcp.pop %v2402
          %v2404 = vmul.f32 %v2402, %v2403
          %v2405 = vsub.f32 1.0, %v2404
          %v2406 = vmul.f32 %v2403, %v2405
          %v2407 = vadd.f32 %v2403, %v2406
          %vm2408 = vweird.f32 %v2402
          %vm2409 = vweird.f32 %v2403
          %vm2410 = vmor %vm2408, %vm2409
          %v2411 = vsel %vm2410, %v2403, %v2407
          %v2412 = vand.u32 2147483647, %v2402
          %vm2413 = vcmp.eq.f32.partialorder %v2412, 8.507059e+37
          %v2414 = vand.u32 %v2402, 2147483648
          %v2415 = vor.u32 1.1754944e-38, %v2414
          %v2416 = vsel %vm2413, %v2415, %v2411
          %v2417 = vmul.f32 1.0, %v2416
          %v2418 = vrot.slane %v2376, 4
          %v2420 = vtanh.pop %v2418
          %v2421 = vrot.slane %v2376, 6
          %v2423 = vxor.u32 %v2421, 2147483648
          %v2424 = vmul.f32 %v2423, 1.442695
          %v2425 = vpow.pop %v2424
          %v2426 = vadd.f32 %v2425, 1.0
          %v2427 = vrcp.pop %v2426
          %v2428 = vmul.f32 %v2426, %v2427
          %v2429 = vsub.f32 1.0, %v2428
          %v2430 = vmul.f32 %v2427, %v2429
          %v2431 = vadd.f32 %v2427, %v2430
          %vm2432 = vweird.f32 %v2426
          %vm2433 = vweird.f32 %v2427
          %vm2434 = vmor %vm2432, %vm2433
          %v2435 = vsel %vm2434, %v2427, %v2431
          %v2436 = vand.u32 2147483647, %v2426
          %vm2437 = vcmp.eq.f32.partialorder %v2436, 8.507059e+37
          %v2438 = vand.u32 %v2426, 2147483648
          %v2439 = vor.u32 1.1754944e-38, %v2438
          %v2440 = vsel %vm2437, %v2439, %v2435
          %v2441 = vmul.f32 1.0, %v2440
          %v2442 = vld [vmem:[#allocation3] sm:$0x3]
          %v2443 = vmul.f32 %v2417, %v2442
          %v2444 = vmul.f32 %v2395, %v2420
          %v2445 = vadd.f32 %v2443, %v2444
          %v2446 = vtanh.pop %v2445
          %v2447 = vmul.f32 %v2441, %v2446
          %2448 = vst [vmem:[#allocation3] sm:$0x3] %v2445
          %2449 = vst [vmem:[#allocation2] sm:$0x3] %v2447
          %v2450 = vpack.c.bf16 %v2447, %v2447
          %s2451 = scalar_lea.vmem %s342, 4 [#allocation6]
          %2452 = vst [vmem:[%s2451] sm:$0x1] %v2450
          %s2453 = scalar_lea.vmem %s314, 24 [#allocation4]
          %v2454 = vld [vmem:[%s2453] sm:$0xff]
          %v2455 = vld [vmem:[#allocation2] sm:$0x3]
          %v2456 = vpack.c.bf16 %v2455, %v2455
          %2457 = vmatpush.bf16.msra.mxu0 %v1842
          %2458 = vmatpush.bf16.msra.mxu0 %v1838
          %2459 = vmatpush.bf16.msra.mxu0 %v1834
          %2460 = vmatpush.bf16.msra.mxu0 %v1830
          %2461 = vmatpush.bf16.msra.mxu0 %v1826
          %2462 = vmatpush.bf16.msra.mxu0 %v1822
          %2463 = vmatpush.bf16.msra.mxu0 %v1818
          %2464 = vmatpush.bf16.msra.mxu0 %v1814
          %2465 = vmatmul.bf16.gmra.mxu0 %v2456
          %v2466 = vpop.f32.mrf.mxu0
          %v2467 = vadd.f32 0.0, %v2466
          %v2468 = vpop.f32.mrf.mxu0
          %2469 = vdwg.mxu0
          %2470 = vmatpush.bf16.msra.mxu0 %v1843
          %2471 = vmatpush.bf16.msra.mxu0 %v1839
          %2472 = vmatpush.bf16.msra.mxu0 %v1835
          %2473 = vmatpush.bf16.msra.mxu0 %v1831
          %2474 = vmatpush.bf16.msra.mxu0 %v1827
          %2475 = vmatpush.bf16.msra.mxu0 %v1823
          %2476 = vmatpush.bf16.msra.mxu0 %v1819
          %2477 = vmatpush.bf16.msra.mxu0 %v1815
          %2478 = vmatmul.bf16.gmra.mxu0 %v2456
          %v2479 = vpop.f32.mrf.mxu0
          %v2480 = vadd.f32 0.0, %v2479
          %v2481 = vpop.f32.mrf.mxu0
          %2482 = vdwg.mxu0
          %2483 = vmatpush.bf16.msra.mxu0 %v1844
          %2484 = vmatpush.bf16.msra.mxu0 %v1840
          %2485 = vmatpush.bf16.msra.mxu0 %v1836
          %2486 = vmatpush.bf16.msra.mxu0 %v1832
          %2487 = vmatpush.bf16.msra.mxu0 %v1828
          %2488 = vmatpush.bf16.msra.mxu0 %v1824
          %2489 = vmatpush.bf16.msra.mxu0 %v1820
          %2490 = vmatpush.bf16.msra.mxu0 %v1816
          %2491 = vmatmul.bf16.gmra.mxu0 %v2456
          %v2492 = vpop.f32.mrf.mxu0
          %v2493 = vadd.f32 0.0, %v2492
          %v2494 = vpop.f32.mrf.mxu0
          %2495 = vdwg.mxu0
          %2496 = vmatpush.bf16.msra.mxu0 %v1845
          %2497 = vmatpush.bf16.msra.mxu0 %v1841
          %2498 = vmatpush.bf16.msra.mxu0 %v1837
          %2499 = vmatpush.bf16.msra.mxu0 %v1833
          %2500 = vmatpush.bf16.msra.mxu0 %v1829
          %2501 = vmatpush.bf16.msra.mxu0 %v1825
          %2502 = vmatpush.bf16.msra.mxu0 %v1821
          %2503 = vmatpush.bf16.msra.mxu0 %v1817
          %2504 = vmatmul.bf16.gmra.mxu0 %v2456
          %v2505 = vpop.f32.mrf.mxu0
          %v2506 = vadd.f32 0.0, %v2505
          %v2507 = vpop.f32.mrf.mxu0
          %2508 = vdwg.mxu0
          %v2513 = vrot.slane %v2480, 6
          %v2514 = vrot.slane %v2493, 4
          %v2515 = vrot.slane %v2506, 2
          %v2516 = vsel %vm1937, %v2467, %v2513
          %v2517 = vsel %vm1939, %v2514, %v2515
          %v2518 = vsel %vm1941, %v2516, %v2517
          %v2520 = vadd.f32 %v2454, %v2518
          %v2521 = vxor.u32 %v2520, 2147483648
          %v2522 = vmul.f32 %v2521, 1.442695
          %v2523 = vpow.pop %v2522
          %v2524 = vadd.f32 %v2523, 1.0
          %v2525 = vrcp.pop %v2524
          %v2526 = vmul.f32 %v2524, %v2525
          %v2527 = vsub.f32 1.0, %v2526
          %v2528 = vmul.f32 %v2525, %v2527
          %v2529 = vadd.f32 %v2525, %v2528
          %vm2530 = vweird.f32 %v2524
          %vm2531 = vweird.f32 %v2525
          %vm2532 = vmor %vm2530, %vm2531
          %v2533 = vsel %vm2532, %v2525, %v2529
          %v2534 = vand.u32 2147483647, %v2524
          %vm2535 = vcmp.eq.f32.partialorder %v2534, 8.507059e+37
          %v2536 = vand.u32 %v2524, 2147483648
          %v2537 = vor.u32 1.1754944e-38, %v2536
          %v2538 = vsel %vm2535, %v2537, %v2533
          %v2539 = vmul.f32 1.0, %v2538
          %v2541 = vrot.slane %v2520, 2
          %v2543 = vxor.u32 %v2541, 2147483648
          %v2544 = vmul.f32 %v2543, 1.442695
          %v2545 = vpow.pop %v2544
          %v2546 = vadd.f32 %v2545, 1.0
          %v2547 = vrcp.pop %v2546
          %v2548 = vmul.f32 %v2546, %v2547
          %v2549 = vsub.f32 1.0, %v2548
          %v2550 = vmul.f32 %v2547, %v2549
          %v2551 = vadd.f32 %v2547, %v2550
          %vm2552 = vweird.f32 %v2546
          %vm2553 = vweird.f32 %v2547
          %vm2554 = vmor %vm2552, %vm2553
          %v2555 = vsel %vm2554, %v2547, %v2551
          %v2556 = vand.u32 2147483647, %v2546
          %vm2557 = vcmp.eq.f32.partialorder %v2556, 8.507059e+37
          %v2558 = vand.u32 %v2546, 2147483648
          %v2559 = vor.u32 1.1754944e-38, %v2558
          %v2560 = vsel %vm2557, %v2559, %v2555
          %v2561 = vmul.f32 1.0, %v2560
          %v2562 = vrot.slane %v2520, 4
          %v2564 = vtanh.pop %v2562
          %v2565 = vrot.slane %v2520, 6
          %v2567 = vxor.u32 %v2565, 2147483648
          %v2568 = vmul.f32 %v2567, 1.442695
          %v2569 = vpow.pop %v2568
          %v2570 = vadd.f32 %v2569, 1.0
          %v2571 = vrcp.pop %v2570
          %v2572 = vmul.f32 %v2570, %v2571
          %v2573 = vsub.f32 1.0, %v2572
          %v2574 = vmul.f32 %v2571, %v2573
          %v2575 = vadd.f32 %v2571, %v2574
          %vm2576 = vweird.f32 %v2570
          %vm2577 = vweird.f32 %v2571
          %vm2578 = vmor %vm2576, %vm2577
          %v2579 = vsel %vm2578, %v2571, %v2575
          %v2580 = vand.u32 2147483647, %v2570
          %vm2581 = vcmp.eq.f32.partialorder %v2580, 8.507059e+37
          %v2582 = vand.u32 %v2570, 2147483648
          %v2583 = vor.u32 1.1754944e-38, %v2582
          %v2584 = vsel %vm2581, %v2583, %v2579
          %v2585 = vmul.f32 1.0, %v2584
          %v2586 = vld [vmem:[#allocation3] sm:$0x3]
          %v2587 = vmul.f32 %v2561, %v2586
          %v2588 = vmul.f32 %v2539, %v2564
          %v2589 = vadd.f32 %v2587, %v2588
          %v2590 = vtanh.pop %v2589
          %v2591 = vmul.f32 %v2585, %v2590
          %2592 = vst [vmem:[#allocation3] sm:$0x3] %v2589
          %2593 = vst [vmem:[#allocation2] sm:$0x3] %v2591
          %v2594 = vpack.c.bf16 %v2591, %v2591
          %s2595 = scalar_lea.vmem %s342, 3 [#allocation6]
          %2596 = vst [vmem:[%s2595] sm:$0x1] %v2594
          %s2597 = scalar_lea.vmem %s314, 16 [#allocation4]
          %v2598 = vld [vmem:[%s2597] sm:$0xff]
          %v2599 = vld [vmem:[#allocation2] sm:$0x3]
          %v2600 = vpack.c.bf16 %v2599, %v2599
          %2601 = vmatpush.bf16.msra.mxu0 %v1842
          %2602 = vmatpush.bf16.msra.mxu0 %v1838
          %2603 = vmatpush.bf16.msra.mxu0 %v1834
          %2604 = vmatpush.bf16.msra.mxu0 %v1830
          %2605 = vmatpush.bf16.msra.mxu0 %v1826
          %2606 = vmatpush.bf16.msra.mxu0 %v1822
          %2607 = vmatpush.bf16.msra.mxu0 %v1818
          %2608 = vmatpush.bf16.msra.mxu0 %v1814
          %2609 = vmatmul.bf16.gmra.mxu0 %v2600
          %v2610 = vpop.f32.mrf.mxu0
          %v2611 = vadd.f32 0.0, %v2610
          %v2612 = vpop.f32.mrf.mxu0
          %2613 = vdwg.mxu0
          %2614 = vmatpush.bf16.msra.mxu0 %v1843
          %2615 = vmatpush.bf16.msra.mxu0 %v1839
          %2616 = vmatpush.bf16.msra.mxu0 %v1835
          %2617 = vmatpush.bf16.msra.mxu0 %v1831
          %2618 = vmatpush.bf16.msra.mxu0 %v1827
          %2619 = vmatpush.bf16.msra.mxu0 %v1823
          %2620 = vmatpush.bf16.msra.mxu0 %v1819
          %2621 = vmatpush.bf16.msra.mxu0 %v1815
          %2622 = vmatmul.bf16.gmra.mxu0 %v2600
          %v2623 = vpop.f32.mrf.mxu0
          %v2624 = vadd.f32 0.0, %v2623
          %v2625 = vpop.f32.mrf.mxu0
          %2626 = vdwg.mxu0
          %2627 = vmatpush.bf16.msra.mxu0 %v1844
          %2628 = vmatpush.bf16.msra.mxu0 %v1840
          %2629 = vmatpush.bf16.msra.mxu0 %v1836
          %2630 = vmatpush.bf16.msra.mxu0 %v1832
          %2631 = vmatpush.bf16.msra.mxu0 %v1828
          %2632 = vmatpush.bf16.msra.mxu0 %v1824
          %2633 = vmatpush.bf16.msra.mxu0 %v1820
          %2634 = vmatpush.bf16.msra.mxu0 %v1816
          %2635 = vmatmul.bf16.gmra.mxu0 %v2600
          %v2636 = vpop.f32.mrf.mxu0
          %v2637 = vadd.f32 0.0, %v2636
          %v2638 = vpop.f32.mrf.mxu0
          %2639 = vdwg.mxu0
          %2640 = vmatpush.bf16.msra.mxu0 %v1845
          %2641 = vmatpush.bf16.msra.mxu0 %v1841
          %2642 = vmatpush.bf16.msra.mxu0 %v1837
          %2643 = vmatpush.bf16.msra.mxu0 %v1833
          %2644 = vmatpush.bf16.msra.mxu0 %v1829
          %2645 = vmatpush.bf16.msra.mxu0 %v1825
          %2646 = vmatpush.bf16.msra.mxu0 %v1821
          %2647 = vmatpush.bf16.msra.mxu0 %v1817
          %2648 = vmatmul.bf16.gmra.mxu0 %v2600
          %v2649 = vpop.f32.mrf.mxu0
          %v2650 = vadd.f32 0.0, %v2649
          %v2651 = vpop.f32.mrf.mxu0
          %2652 = vdwg.mxu0
          %v2657 = vrot.slane %v2624, 6
          %v2658 = vrot.slane %v2637, 4
          %v2659 = vrot.slane %v2650, 2
          %v2660 = vsel %vm1937, %v2611, %v2657
          %v2661 = vsel %vm1939, %v2658, %v2659
          %v2662 = vsel %vm1941, %v2660, %v2661
          %v2664 = vadd.f32 %v2598, %v2662
          %v2665 = vxor.u32 %v2664, 2147483648
          %v2666 = vmul.f32 %v2665, 1.442695
          %v2667 = vpow.pop %v2666
          %v2668 = vadd.f32 %v2667, 1.0
          %v2669 = vrcp.pop %v2668
          %v2670 = vmul.f32 %v2668, %v2669
          %v2671 = vsub.f32 1.0, %v2670
          %v2672 = vmul.f32 %v2669, %v2671
          %v2673 = vadd.f32 %v2669, %v2672
          %vm2674 = vweird.f32 %v2668
          %vm2675 = vweird.f32 %v2669
          %vm2676 = vmor %vm2674, %vm2675
          %v2677 = vsel %vm2676, %v2669, %v2673
          %v2678 = vand.u32 2147483647, %v2668
          %vm2679 = vcmp.eq.f32.partialorder %v2678, 8.507059e+37
          %v2680 = vand.u32 %v2668, 2147483648
          %v2681 = vor.u32 1.1754944e-38, %v2680
          %v2682 = vsel %vm2679, %v2681, %v2677
          %v2683 = vmul.f32 1.0, %v2682
          %v2685 = vrot.slane %v2664, 2
          %v2687 = vxor.u32 %v2685, 2147483648
          %v2688 = vmul.f32 %v2687, 1.442695
          %v2689 = vpow.pop %v2688
          %v2690 = vadd.f32 %v2689, 1.0
          %v2691 = vrcp.pop %v2690
          %v2692 = vmul.f32 %v2690, %v2691
          %v2693 = vsub.f32 1.0, %v2692
          %v2694 = vmul.f32 %v2691, %v2693
          %v2695 = vadd.f32 %v2691, %v2694
          %vm2696 = vweird.f32 %v2690
          %vm2697 = vweird.f32 %v2691
          %vm2698 = vmor %vm2696, %vm2697
          %v2699 = vsel %vm2698, %v2691, %v2695
          %v2700 = vand.u32 2147483647, %v2690
          %vm2701 = vcmp.eq.f32.partialorder %v2700, 8.507059e+37
          %v2702 = vand.u32 %v2690, 2147483648
          %v2703 = vor.u32 1.1754944e-38, %v2702
          %v2704 = vsel %vm2701, %v2703, %v2699
          %v2705 = vmul.f32 1.0, %v2704
          %v2706 = vrot.slane %v2664, 4
          %v2708 = vtanh.pop %v2706
          %v2709 = vrot.slane %v2664, 6
          %v2711 = vxor.u32 %v2709, 2147483648
          %v2712 = vmul.f32 %v2711, 1.442695
          %v2713 = vpow.pop %v2712
          %v2714 = vadd.f32 %v2713, 1.0
          %v2715 = vrcp.pop %v2714
          %v2716 = vmul.f32 %v2714, %v2715
          %v2717 = vsub.f32 1.0, %v2716
          %v2718 = vmul.f32 %v2715, %v2717
          %v2719 = vadd.f32 %v2715, %v2718
          %vm2720 = vweird.f32 %v2714
          %vm2721 = vweird.f32 %v2715
          %vm2722 = vmor %vm2720, %vm2721
          %v2723 = vsel %vm2722, %v2715, %v2719
          %v2724 = vand.u32 2147483647, %v2714
          %vm2725 = vcmp.eq.f32.partialorder %v2724, 8.507059e+37
          %v2726 = vand.u32 %v2714, 2147483648
          %v2727 = vor.u32 1.1754944e-38, %v2726
          %v2728 = vsel %vm2725, %v2727, %v2723
          %v2729 = vmul.f32 1.0, %v2728
          %v2730 = vld [vmem:[#allocation3] sm:$0x3]
          %v2731 = vmul.f32 %v2705, %v2730
          %v2732 = vmul.f32 %v2683, %v2708
          %v2733 = vadd.f32 %v2731, %v2732
          %v2734 = vtanh.pop %v2733
          %v2735 = vmul.f32 %v2729, %v2734
          %2736 = vst [vmem:[#allocation3] sm:$0x3] %v2733
          %2737 = vst [vmem:[#allocation2] sm:$0x3] %v2735
          %v2738 = vpack.c.bf16 %v2735, %v2735
          %s2739 = scalar_lea.vmem %s342, 2 [#allocation6]
          %2740 = vst [vmem:[%s2739] sm:$0x1] %v2738
          %s2741 = scalar_lea.vmem %s314, 8 [#allocation4]
          %v2742 = vld [vmem:[%s2741] sm:$0xff]
          %v2743 = vld [vmem:[#allocation2] sm:$0x3]
          %v2744 = vpack.c.bf16 %v2743, %v2743
          %2745 = vmatpush.bf16.msra.mxu0 %v1842
          %2746 = vmatpush.bf16.msra.mxu0 %v1838
          %2747 = vmatpush.bf16.msra.mxu0 %v1834
          %2748 = vmatpush.bf16.msra.mxu0 %v1830
          %2749 = vmatpush.bf16.msra.mxu0 %v1826
          %2750 = vmatpush.bf16.msra.mxu0 %v1822
          %2751 = vmatpush.bf16.msra.mxu0 %v1818
          %2752 = vmatpush.bf16.msra.mxu0 %v1814
          %2753 = vmatmul.bf16.gmra.mxu0 %v2744
          %v2754 = vpop.f32.mrf.mxu0
          %v2755 = vadd.f32 0.0, %v2754
          %v2756 = vpop.f32.mrf.mxu0
          %2757 = vdwg.mxu0
          %2758 = vmatpush.bf16.msra.mxu0 %v1843
          %2759 = vmatpush.bf16.msra.mxu0 %v1839
          %2760 = vmatpush.bf16.msra.mxu0 %v1835
          %2761 = vmatpush.bf16.msra.mxu0 %v1831
          %2762 = vmatpush.bf16.msra.mxu0 %v1827
          %2763 = vmatpush.bf16.msra.mxu0 %v1823
          %2764 = vmatpush.bf16.msra.mxu0 %v1819
          %2765 = vmatpush.bf16.msra.mxu0 %v1815
          %2766 = vmatmul.bf16.gmra.mxu0 %v2744
          %v2767 = vpop.f32.mrf.mxu0
          %v2768 = vadd.f32 0.0, %v2767
          %v2769 = vpop.f32.mrf.mxu0
          %2770 = vdwg.mxu0
          %2771 = vmatpush.bf16.msra.mxu0 %v1844
          %2772 = vmatpush.bf16.msra.mxu0 %v1840
          %2773 = vmatpush.bf16.msra.mxu0 %v1836
          %2774 = vmatpush.bf16.msra.mxu0 %v1832
          %2775 = vmatpush.bf16.msra.mxu0 %v1828
          %2776 = vmatpush.bf16.msra.mxu0 %v1824
          %2777 = vmatpush.bf16.msra.mxu0 %v1820
          %2778 = vmatpush.bf16.msra.mxu0 %v1816
          %2779 = vmatmul.bf16.gmra.mxu0 %v2744
          %v2780 = vpop.f32.mrf.mxu0
          %v2781 = vadd.f32 0.0, %v2780
          %v2782 = vpop.f32.mrf.mxu0
          %2783 = vdwg.mxu0
          %2784 = vmatpush.bf16.msra.mxu0 %v1845
          %2785 = vmatpush.bf16.msra.mxu0 %v1841
          %2786 = vmatpush.bf16.msra.mxu0 %v1837
          %2787 = vmatpush.bf16.msra.mxu0 %v1833
          %2788 = vmatpush.bf16.msra.mxu0 %v1829
          %2789 = vmatpush.bf16.msra.mxu0 %v1825
          %2790 = vmatpush.bf16.msra.mxu0 %v1821
          %2791 = vmatpush.bf16.msra.mxu0 %v1817
          %2792 = vmatmul.bf16.gmra.mxu0 %v2744
          %v2793 = vpop.f32.mrf.mxu0
          %v2794 = vadd.f32 0.0, %v2793
          %v2795 = vpop.f32.mrf.mxu0
          %2796 = vdwg.mxu0
          %v2801 = vrot.slane %v2768, 6
          %v2802 = vrot.slane %v2781, 4
          %v2803 = vrot.slane %v2794, 2
          %v2804 = vsel %vm1937, %v2755, %v2801
          %v2805 = vsel %vm1939, %v2802, %v2803
          %v2806 = vsel %vm1941, %v2804, %v2805
          %v2808 = vadd.f32 %v2742, %v2806
          %v2809 = vxor.u32 %v2808, 2147483648
          %v2810 = vmul.f32 %v2809, 1.442695
          %v2811 = vpow.pop %v2810
          %v2812 = vadd.f32 %v2811, 1.0
          %v2813 = vrcp.pop %v2812
          %v2814 = vmul.f32 %v2812, %v2813
          %v2815 = vsub.f32 1.0, %v2814
          %v2816 = vmul.f32 %v2813, %v2815
          %v2817 = vadd.f32 %v2813, %v2816
          %vm2818 = vweird.f32 %v2812
          %vm2819 = vweird.f32 %v2813
          %vm2820 = vmor %vm2818, %vm2819
          %v2821 = vsel %vm2820, %v2813, %v2817
          %v2822 = vand.u32 2147483647, %v2812
          %vm2823 = vcmp.eq.f32.partialorder %v2822, 8.507059e+37
          %v2824 = vand.u32 %v2812, 2147483648
          %v2825 = vor.u32 1.1754944e-38, %v2824
          %v2826 = vsel %vm2823, %v2825, %v2821
          %v2827 = vmul.f32 1.0, %v2826
          %v2829 = vrot.slane %v2808, 2
          %v2831 = vxor.u32 %v2829, 2147483648
          %v2832 = vmul.f32 %v2831, 1.442695
          %v2833 = vpow.pop %v2832
          %v2834 = vadd.f32 %v2833, 1.0
          %v2835 = vrcp.pop %v2834
          %v2836 = vmul.f32 %v2834, %v2835
          %v2837 = vsub.f32 1.0, %v2836
          %v2838 = vmul.f32 %v2835, %v2837
          %v2839 = vadd.f32 %v2835, %v2838
          %vm2840 = vweird.f32 %v2834
          %vm2841 = vweird.f32 %v2835
          %vm2842 = vmor %vm2840, %vm2841
          %v2843 = vsel %vm2842, %v2835, %v2839
          %v2844 = vand.u32 2147483647, %v2834
          %vm2845 = vcmp.eq.f32.partialorder %v2844, 8.507059e+37
          %v2846 = vand.u32 %v2834, 2147483648
          %v2847 = vor.u32 1.1754944e-38, %v2846
          %v2848 = vsel %vm2845, %v2847, %v2843
          %v2849 = vmul.f32 1.0, %v2848
          %v2850 = vrot.slane %v2808, 4
          %v2852 = vtanh.pop %v2850
          %v2853 = vrot.slane %v2808, 6
          %v2855 = vxor.u32 %v2853, 2147483648
          %v2856 = vmul.f32 %v2855, 1.442695
          %v2857 = vpow.pop %v2856
          %v2858 = vadd.f32 %v2857, 1.0
          %v2859 = vrcp.pop %v2858
          %v2860 = vmul.f32 %v2858, %v2859
          %v2861 = vsub.f32 1.0, %v2860
          %v2862 = vmul.f32 %v2859, %v2861
          %v2863 = vadd.f32 %v2859, %v2862
          %vm2864 = vweird.f32 %v2858
          %vm2865 = vweird.f32 %v2859
          %vm2866 = vmor %vm2864, %vm2865
          %v2867 = vsel %vm2866, %v2859, %v2863
          %v2868 = vand.u32 2147483647, %v2858
          %vm2869 = vcmp.eq.f32.partialorder %v2868, 8.507059e+37
          %v2870 = vand.u32 %v2858, 2147483648
          %v2871 = vor.u32 1.1754944e-38, %v2870
          %v2872 = vsel %vm2869, %v2871, %v2867
          %v2873 = vmul.f32 1.0, %v2872
          %v2874 = vld [vmem:[#allocation3] sm:$0x3]
          %v2875 = vmul.f32 %v2849, %v2874
          %v2876 = vmul.f32 %v2827, %v2852
          %v2877 = vadd.f32 %v2875, %v2876
          %v2878 = vtanh.pop %v2877
          %v2879 = vmul.f32 %v2873, %v2878
          %2880 = vst [vmem:[#allocation3] sm:$0x3] %v2877
          %2881 = vst [vmem:[#allocation2] sm:$0x3] %v2879
          %v2882 = vpack.c.bf16 %v2879, %v2879
          %s2883 = scalar_lea.vmem %s342, 1 [#allocation6]
          %2884 = vst [vmem:[%s2883] sm:$0x1] %v2882
          %v2885 = vld [vmem:[%s314] sm:$0xff]
          %v2886 = vld [vmem:[#allocation2] sm:$0x3]
          %v2887 = vpack.c.bf16 %v2886, %v2886
          %2888 = vmatpush.bf16.msra.mxu0 %v1842
          %2889 = vmatpush.bf16.msra.mxu0 %v1838
          %2890 = vmatpush.bf16.msra.mxu0 %v1834
          %2891 = vmatpush.bf16.msra.mxu0 %v1830
          %2892 = vmatpush.bf16.msra.mxu0 %v1826
          %2893 = vmatpush.bf16.msra.mxu0 %v1822
          %2894 = vmatpush.bf16.msra.mxu0 %v1818
          %2895 = vmatpush.bf16.msra.mxu0 %v1814
          %2896 = vmatmul.bf16.gmra.mxu0 %v2887
          %v2897 = vpop.f32.mrf.mxu0
          %v2898 = vadd.f32 0.0, %v2897
          %v2899 = vpop.f32.mrf.mxu0
          %2900 = vdwg.mxu0
          %2901 = vmatpush.bf16.msra.mxu0 %v1843
          %2902 = vmatpush.bf16.msra.mxu0 %v1839
          %2903 = vmatpush.bf16.msra.mxu0 %v1835
          %2904 = vmatpush.bf16.msra.mxu0 %v1831
          %2905 = vmatpush.bf16.msra.mxu0 %v1827
          %2906 = vmatpush.bf16.msra.mxu0 %v1823
          %2907 = vmatpush.bf16.msra.mxu0 %v1819
          %2908 = vmatpush.bf16.msra.mxu0 %v1815
          %2909 = vmatmul.bf16.gmra.mxu0 %v2887
          %v2910 = vpop.f32.mrf.mxu0
          %v2911 = vadd.f32 0.0, %v2910
          %v2912 = vpop.f32.mrf.mxu0
          %2913 = vdwg.mxu0
          %2914 = vmatpush.bf16.msra.mxu0 %v1844
          %2915 = vmatpush.bf16.msra.mxu0 %v1840
          %2916 = vmatpush.bf16.msra.mxu0 %v1836
          %2917 = vmatpush.bf16.msra.mxu0 %v1832
          %2918 = vmatpush.bf16.msra.mxu0 %v1828
          %2919 = vmatpush.bf16.msra.mxu0 %v1824
          %2920 = vmatpush.bf16.msra.mxu0 %v1820
          %2921 = vmatpush.bf16.msra.mxu0 %v1816
          %2922 = vmatmul.bf16.gmra.mxu0 %v2887
          %v2923 = vpop.f32.mrf.mxu0
          %v2924 = vadd.f32 0.0, %v2923
          %v2925 = vpop.f32.mrf.mxu0
          %2926 = vdwg.mxu0
          %2927 = vmatpush.bf16.msra.mxu0 %v1845
          %2928 = vmatpush.bf16.msra.mxu0 %v1841
          %2929 = vmatpush.bf16.msra.mxu0 %v1837
          %2930 = vmatpush.bf16.msra.mxu0 %v1833
          %2931 = vmatpush.bf16.msra.mxu0 %v1829
          %2932 = vmatpush.bf16.msra.mxu0 %v1825
          %2933 = vmatpush.bf16.msra.mxu0 %v1821
          %2934 = vmatpush.bf16.msra.mxu0 %v1817
          %2935 = vmatmul.bf16.gmra.mxu0 %v2887
          %v2936 = vpop.f32.mrf.mxu0
          %v2937 = vadd.f32 0.0, %v2936
          %v2938 = vpop.f32.mrf.mxu0
          %2939 = vdwg.mxu0
          %v2944 = vrot.slane %v2911, 6
          %v2945 = vrot.slane %v2924, 4
          %v2946 = vrot.slane %v2937, 2
          %v2947 = vsel %vm1937, %v2898, %v2944
          %v2948 = vsel %vm1939, %v2945, %v2946
          %v2949 = vsel %vm1941, %v2947, %v2948
          %v2951 = vadd.f32 %v2885, %v2949
          %v2952 = vxor.u32 %v2951, 2147483648
          %v2953 = vmul.f32 %v2952, 1.442695
          %v2954 = vpow.pop %v2953
          %v2955 = vadd.f32 %v2954, 1.0
          %v2956 = vrcp.pop %v2955
          %v2957 = vmul.f32 %v2955, %v2956
          %v2958 = vsub.f32 1.0, %v2957
          %v2959 = vmul.f32 %v2956, %v2958
          %v2960 = vadd.f32 %v2956, %v2959
          %vm2961 = vweird.f32 %v2955
          %vm2962 = vweird.f32 %v2956
          %vm2963 = vmor %vm2961, %vm2962
          %v2964 = vsel %vm2963, %v2956, %v2960
          %v2965 = vand.u32 2147483647, %v2955
          %vm2966 = vcmp.eq.f32.partialorder %v2965, 8.507059e+37
          %v2967 = vand.u32 %v2955, 2147483648
          %v2968 = vor.u32 1.1754944e-38, %v2967
          %v2969 = vsel %vm2966, %v2968, %v2964
          %v2970 = vmul.f32 1.0, %v2969
          %v2972 = vrot.slane %v2951, 2
          %v2974 = vxor.u32 %v2972, 2147483648
          %v2975 = vmul.f32 %v2974, 1.442695
          %v2976 = vpow.pop %v2975
          %v2977 = vadd.f32 %v2976, 1.0
          %v2978 = vrcp.pop %v2977
          %v2979 = vmul.f32 %v2977, %v2978
          %v2980 = vsub.f32 1.0, %v2979
          %v2981 = vmul.f32 %v2978, %v2980
          %v2982 = vadd.f32 %v2978, %v2981
          %vm2983 = vweird.f32 %v2977
          %vm2984 = vweird.f32 %v2978
          %vm2985 = vmor %vm2983, %vm2984
          %v2986 = vsel %vm2985, %v2978, %v2982
          %v2987 = vand.u32 2147483647, %v2977
          %vm2988 = vcmp.eq.f32.partialorder %v2987, 8.507059e+37
          %v2989 = vand.u32 %v2977, 2147483648
          %v2990 = vor.u32 1.1754944e-38, %v2989
          %v2991 = vsel %vm2988, %v2990, %v2986
          %v2992 = vmul.f32 1.0, %v2991
          %v2993 = vrot.slane %v2951, 4
          %v2995 = vtanh.pop %v2993
          %v2996 = vrot.slane %v2951, 6
          %v2998 = vxor.u32 %v2996, 2147483648
          %v2999 = vmul.f32 %v2998, 1.442695
          %v3000 = vpow.pop %v2999
          %v3001 = vadd.f32 %v3000, 1.0
          %v3002 = vrcp.pop %v3001
          %v3003 = vmul.f32 %v3001, %v3002
          %v3004 = vsub.f32 1.0, %v3003
          %v3005 = vmul.f32 %v3002, %v3004
          %v3006 = vadd.f32 %v3002, %v3005
          %vm3007 = vweird.f32 %v3001
          %vm3008 = vweird.f32 %v3002
          %vm3009 = vmor %vm3007, %vm3008
          %v3010 = vsel %vm3009, %v3002, %v3006
          %v3011 = vand.u32 2147483647, %v3001
          %vm3012 = vcmp.eq.f32.partialorder %v3011, 8.507059e+37
          %v3013 = vand.u32 %v3001, 2147483648
          %v3014 = vor.u32 1.1754944e-38, %v3013
          %v3015 = vsel %vm3012, %v3014, %v3010
          %v3016 = vmul.f32 1.0, %v3015
          %v3017 = vld [vmem:[#allocation3] sm:$0x3]
          %v3018 = vmul.f32 %v2992, %v3017
          %v3019 = vmul.f32 %v2970, %v2995
          %v3020 = vadd.f32 %v3018, %v3019
          %v3021 = vtanh.pop %v3020
          %v3022 = vmul.f32 %v3016, %v3021
          %3023 = vst [vmem:[#allocation3] sm:$0x3] %v3020
          %3024 = vst [vmem:[#allocation2] sm:$0x3] %v3022
          %v3025 = vpack.c.bf16 %v3022, %v3022
          %3026 = vst [vmem:[%s342] sm:$0x1] %v3025
        $region101: #{bert_bilstm_forward.6} parent=80 // pred_fallthru
          _
        %s3027 = sand.u32 %s105, 1
        %s3028 = sand.u32 %s105, 1
        %s3029 = smul.addr %s3028, 8
        %s3030 = scalar_lea.vmem [#allocation6], %s3029
        // Predicated region
        $region102: #{bert_bilstm_forward.6} parent=80 // pred_check
          %p3031 = pneg %p115
        $region103: #{bert_bilstm_forward.6} parent=80 // pred_check_branch
          %3033 = sbr.rel (%p3031) target = $region105
        $region104: #{bert_bilstm_forward.6} parent=80 // pred_region
          %s3034 = smul.u32 %s18, 2
          %s3035 = ssub.s32 0, %s3034
          %s3036 = smul.u32 %s17, %s3035
          %s3037 = sadd.s32 %s18, %s3036
          %s3038 = smul.u32 8, %s3037
          %s3039 = smul.addr %s3038, 2
          %s3040 = sadd.s32 %s17, %s3039
          %s3041 = scalar_lea.vmem %s2, %s3040
          // Predicated region
          $region106: #{bert_bilstm_forward.6} parent=104 // pred_check
            _
          $region107: #{bert_bilstm_forward.6} parent=104 // pred_check_branch
            %3043 = sbr.rel (0) target = $region109
          $region108: #{bert_bilstm_forward.6} parent=104 // pred_region
            // Predicated region
            $region110: #{bert_bilstm_forward.6} parent=108 // pred_check
              _
            $region111: #{bert_bilstm_forward.6} parent=108 // pred_check_branch
              %3045 = sbr.rel target = $region113
            $region112: #{bert_bilstm_forward.6} parent=108 // pred_region
              // Predicated region
              $region125: #{bert_bilstm_forward.6} parent=112 // pred_check
                _
              $region126: #{bert_bilstm_forward.6} parent=112 // pred_check_branch
                %3075 = sbr.rel (0) target = $region128
              $region127: #{bert_bilstm_forward.6} parent=112 // pred_region
                loop: start=0, step=1, limit=1
                $region129: #{bert_bilstm_forward.6} parent=127 // loop_pre_header
                  _
                $region130: #{bert_bilstm_forward.6} parent=127 // loop_header
                  %s3077 = sphi 0, %s3081
                  %p3078 = scmp.ge.s32.totalorder %s3077, 1
                  %s3082 = sphi %s3030, %s3030
                  %s3083 = sphi %s3041, %s3041
                $region131: #{bert_bilstm_forward.6} parent=127 // loop_header_branch
                  %3080 = sbr.rel (%p3078) target = $region135
                $region132: #{bert_bilstm_forward.6} parent=127 // loop_body
                  _
                $region133: #{bert_bilstm_forward.6} parent=127 // loop_footer
                  %s3081 = sadd.s32 1, %s3077
                $region134: #{bert_bilstm_forward.6} parent=127 // loop_footer_branch
                  %3076 = sbr.rel target = $region130
                $region135: #{bert_bilstm_forward.6} parent=127 // loop_exit
                  _
                %s3085 = ssub.s32 2, 1
                loop: start=0, step=1, limit=1
                $region136: #{bert_bilstm_forward.6} parent=127 // loop_pre_header
                  _
                $region137: #{bert_bilstm_forward.6} parent=127 // loop_header
                  %s3087 = sphi 0, %s3091
                  %p3088 = scmp.ge.s32.totalorder %s3087, 1
                  %s3092 = sphi %s3030, %s3030
                  %s3093 = sphi %s3041, %s3041
                $region138: #{bert_bilstm_forward.6} parent=127 // loop_header_branch
                  %3090 = sbr.rel (%p3088) target = $region142
                $region139: #{bert_bilstm_forward.6} parent=127 // loop_body
                  %v3094 = vld [vmem:[%s3092] sm:%s3085]
                  %3095 = vst [vmem:[%s3093] sm:%s3085] %v3094
                  %v3096 = vld [vmem:[%s3092 + $0x1] sm:%s3085]
                  %3097 = vst [vmem:[%s3093 + $0x2] sm:%s3085] %v3096
                  %v3098 = vld [vmem:[%s3092 + $0x2] sm:%s3085]
                  %3099 = vst [vmem:[%s3093 + $0x4] sm:%s3085] %v3098
                  %v3100 = vld [vmem:[%s3092 + $0x3] sm:%s3085]
                  %3101 = vst [vmem:[%s3093 + $0x6] sm:%s3085] %v3100
                  %v3102 = vld [vmem:[%s3092 + $0x4] sm:%s3085]
                  %3103 = vst [vmem:[%s3093 + $0x8] sm:%s3085] %v3102
                  %v3104 = vld [vmem:[%s3092 + $0x5] sm:%s3085]
                  %3105 = vst [vmem:[%s3093 + $0xa] sm:%s3085] %v3104
                  %v3106 = vld [vmem:[%s3092 + $0x6] sm:%s3085]
                  %3107 = vst [vmem:[%s3093 + $0xc] sm:%s3085] %v3106
                  %v3108 = vld [vmem:[%s3092 + $0x7] sm:%s3085]
                  %3109 = vst [vmem:[%s3093 + $0xe] sm:%s3085] %v3108
                $region140: #{bert_bilstm_forward.6} parent=127 // loop_footer
                  %s3091 = sadd.s32 1, %s3087
                $region141: #{bert_bilstm_forward.6} parent=127 // loop_footer_branch
                  %3086 = sbr.rel target = $region137
                $region142: #{bert_bilstm_forward.6} parent=127 // loop_exit
                  _
              $region128: #{bert_bilstm_forward.6} parent=112 // pred_fallthru
                _
            $region113: #{bert_bilstm_forward.6} parent=108 // pred_fallthru
              _
            // Predicated region
            $region114: #{bert_bilstm_forward.6} parent=108 // pred_check
              _
            $region115: #{bert_bilstm_forward.6} parent=108 // pred_check_branch
              %3047 = sbr.rel (0) target = $region117
            $region116: #{bert_bilstm_forward.6} parent=108 // pred_region
              %s3049 = ssub.s32 2, 1
              loop: start=0, step=1, limit=1
              $region118: #{bert_bilstm_forward.6} parent=116 // loop_pre_header
                _
              $region119: #{bert_bilstm_forward.6} parent=116 // loop_header
                %s3051 = sphi 0, %s3055
                %p3052 = scmp.ge.s32.totalorder %s3051, 1
                %s3056 = sphi %s3030, %s3030
                %s3057 = sphi %s3041, %s3041
              $region120: #{bert_bilstm_forward.6} parent=116 // loop_header_branch
                %3054 = sbr.rel (%p3052) target = $region124
              $region121: #{bert_bilstm_forward.6} parent=116 // loop_body
                %v3058 = vld [vmem:[%s3056] sm:%s3049]
                %3059 = vst [vmem:[%s3057] sm:%s3049] %v3058
                %v3060 = vld [vmem:[%s3056 + $0x1] sm:%s3049]
                %3061 = vst [vmem:[%s3057 + $0x2] sm:%s3049] %v3060
                %v3062 = vld [vmem:[%s3056 + $0x2] sm:%s3049]
                %3063 = vst [vmem:[%s3057 + $0x4] sm:%s3049] %v3062
                %v3064 = vld [vmem:[%s3056 + $0x3] sm:%s3049]
                %3065 = vst [vmem:[%s3057 + $0x6] sm:%s3049] %v3064
                %v3066 = vld [vmem:[%s3056 + $0x4] sm:%s3049]
                %3067 = vst [vmem:[%s3057 + $0x8] sm:%s3049] %v3066
                %v3068 = vld [vmem:[%s3056 + $0x5] sm:%s3049]
                %3069 = vst [vmem:[%s3057 + $0xa] sm:%s3049] %v3068
                %v3070 = vld [vmem:[%s3056 + $0x6] sm:%s3049]
                %3071 = vst [vmem:[%s3057 + $0xc] sm:%s3049] %v3070
                %v3072 = vld [vmem:[%s3056 + $0x7] sm:%s3049]
                %3073 = vst [vmem:[%s3057 + $0xe] sm:%s3049] %v3072
              $region122: #{bert_bilstm_forward.6} parent=116 // loop_footer
                %s3055 = sadd.s32 1, %s3051
              $region123: #{bert_bilstm_forward.6} parent=116 // loop_footer_branch
                %3050 = sbr.rel target = $region119
              $region124: #{bert_bilstm_forward.6} parent=116 // loop_exit
                _
            $region117: #{bert_bilstm_forward.6} parent=108 // pred_fallthru
              _
          $region109: #{bert_bilstm_forward.6} parent=104 // pred_fallthru
            _
          %3110 = vnop
        $region105: #{bert_bilstm_forward.6} parent=80 // pred_fallthru
          _
      $region81: #{bert_bilstm_forward.6} parent=5 // pred_fallthru
        _
      %p3111 = scmp.le.s32.totalorder 2, %s8
      // Predicated region
      $region143: #{bert_bilstm_forward.6} parent=5 // pred_check
        %p3112 = pneg %p3111
      $region144: #{bert_bilstm_forward.6} parent=5 // pred_check_branch
        %3114 = sbr.rel (%p3112) target = $region146
      $region145: #{bert_bilstm_forward.6} parent=5 // pred_region
        %s3115 = ssub.s32 %s8, 2
        // Predicated region
        $region147: #{bert_bilstm_forward.6} parent=145 // pred_check
          %p3116 = pneg %p121
        $region148: #{bert_bilstm_forward.6} parent=145 // pred_check_branch
          %3118 = sbr.rel (%p3116) target = $region150
        $region149: #{bert_bilstm_forward.6} parent=145 // pred_region
          %s3119 = sand.u32 %s106, 1
          %s3120 = sand.u32 %s106, 1
          %s3121 = smul.addr %s3120, 8
          %s3122 = scalar_lea.vmem [#allocation6], %s3121
        $region150: #{bert_bilstm_forward.6} parent=145 // pred_fallthru
          _
      $region146: #{bert_bilstm_forward.6} parent=5 // pred_fallthru
        _
    $region6: #{bert_bilstm_forward.6} parent=1 // loop_footer
      %s12 = sadd.s32 1, %s8
    $region7: #{bert_bilstm_forward.6} parent=1 // loop_footer_branch
      %7 = sbr.rel target = $region3
    $region8: #{bert_bilstm_forward.6} parent=1 // loop_exit
      _

</llo_original>
